<compile_context>
chip_gen: v7x
topology: tpu7x:2x2x1
jax: 0.10.0
libtpu: 0.0.40
codegen_flags: <defaults>
</compile_context>

<pallas_src>
import numpy as np
import jax
import jax.numpy as jnp
from jax.experimental import pallas as pl
from jax.experimental.pallas import tpu as pltpu

BN_EPS = 1e-5
VMEM_LIMIT_BYTES = 32 * 1024 * 1024   # explicit; safe on v5e/v6e (128 MiB) and v7x (64 MiB)


# ----------------------------------------------------------------------------------------
# Kernels
# ----------------------------------------------------------------------------------------
def _stn_backbone_kernel(x_ref,
                         w1_ref, b1_ref, w2_ref, b2_ref, w3_ref, b3_ref,
                         gmax_ref):
    """One (batch, point-tile) grid step: conv1..conv3 (+ folded BN, ReLU) + running max.

    x_ref    : (2, TN)      f32   channels-first point tile (native layout, lane-dense)
    w1_ref   : (64, 2)      f32   conv1 (BN folded)        b1_ref: (64, 1)    f32
    w2_ref   : (128, 64)    bf16  conv2 (BN folded)        b2_ref: (128, 1)   f32
    w3_ref   : (1024, 128)  bf16  conv3 (BN folded)        b3_ref: (1024, 1)  f32
    gmax_ref : (1024, 1)    f32   per-batch pooled feature, resident across the n axis
    """
    n = pl.program_id(1)

    x = x_ref[...]                                          # (2, TN) f32
    # conv1 (K=2): two VPU broadcast-FMAs -- a K=2 MXU matmul would waste the array.
    w1 = w1_ref[...]
    h = jnp.maximum(w1[:, 0:1] * x[0:1, :] + w1[:, 1:2] * x[1:2, :] + b1_ref[...], 0.0)
    # conv2: (128, 64) @ (64, TN) -- bf16 MXU operands, f32 accumulate, f32 bias/ReLU.
    h = jnp.maximum(
        jnp.dot(w2_ref[...], h.astype(jnp.bfloat16),
                preferred_element_type=jnp.float32) + b2_ref[...], 0.0)     # (128, TN)
    # conv3: (1024, 128) @ (128, TN)
    h = jnp.maximum(
        jnp.dot(w3_ref[...], h.astype(jnp.bfloat16),
                preferred_element_type=jnp.float32) + b3_ref[...], 0.0)     # (1024, TN)

    # Max over the point tile: cross-lane XLU reduce (free slot next to the MXU-bound conv3).
    tile_max = jnp.max(h, axis=1, keepdims=True)            # (1024, 1)

    @pl.when(n == 0)
    def _():
        # h is post-ReLU (>= 0), so 0 is a safe identity element for the running max.
        gmax_ref[...] = jnp.zeros_like(gmax_ref)

    gmax_ref[...] = jnp.maximum(gmax_ref[...], tile_max)


def _stn_head_kernel(g_ref,
                     wf1_ref, bf1_ref, wf2_ref, bf2_ref, wf3_ref, bf3_ref,
                     out_ref):
    """Batched FC head over the whole pooled feature: one pass, no per-batch M=1 matmuls."""
    g = g_ref[...]                                                          # (1024, B) f32
    f = jnp.maximum(
        jnp.dot(wf1_ref[...], g.astype(jnp.bfloat16),
                preferred_element_type=jnp.float32) + bf1_ref[...], 0.0)    # (512, B)
    f = jnp.maximum(
        jnp.dot(wf2_ref[...], f.astype(jnp.bfloat16),
                preferred_element_type=jnp.float32) + bf2_ref[...], 0.0)    # (256, B)
    out_ref[...] = jnp.dot(wf3_ref[...], f.astype(jnp.bfloat16),
                           preferred_element_type=jnp.float32) + bf3_ref[...]   # (4, B)


# ----------------------------------------------------------------------------------------
# Wrapper
# ----------------------------------------------------------------------------------------
def _pick_tile_n(N, cap=1024):
    """Largest multiple of 128 dividing N and <= cap (cap=1024 keeps v7x's 64 MiB VMEM safe)."""
    best = None
    t = 128
    while t <= min(cap, N):
        if N % t == 0:
            best = t
        t += 128
    return best if best is not None else N


def spatial_transformer_2d(x_ncl, params, *, tile_n=None):
    """x_ncl: (B, 2, N) float32 (native PyTorch NCL layout). Returns (B, 2, 2)."""
    B, C, N = x_ncl.shape
    assert C == 2
    (w1, b1, w2, b2, w3, b3, wf1, bf1, wf2, bf2, wf3, bf3) = params

    tn = _pick_tile_n(N) if tile_n is None else tile_n
    assert N % tn == 0, (N, tn)
    n_tiles = N // tn

    backbone_weights = (w1, b1, w2, b2, w3, b3)
    head_weights = (wf1, bf1, wf2, bf2, wf3, bf3)

    def bb_spec(a):     # constant index_map -> weights are staged once, not re-DMA'd per step
        nd = a.ndim
        return pl.BlockSpec(a.shape, lambda b, n, _nd=nd: (0,) * _nd)

    flops = 2 * B * N * (2 * 64 + 64 * 128 + 128 * 1024)
    bytes_accessed = int(x_ncl.size) * x_ncl.dtype.itemsize \
        + sum(int(a.size) * a.dtype.itemsize for a in backbone_weights) \
        + B * 1024 * 4

    # --- backbone: conv1..conv3 + max over points -> (B, 1024, 1) pooled features --------
    pooled = pl.pallas_call(
        _stn_backbone_kernel,
        out_shape=jax.ShapeDtypeStruct((B, 1024, 1), jnp.float32),
        grid_spec=pltpu.PrefetchScalarGridSpec(
            num_scalar_prefetch=0,
            grid=(B, n_tiles),                                  # reduction (points) axis last
            in_specs=[pl.BlockSpec((None, C, tn), lambda b, n: (b, 0, n))]
                     + [bb_spec(p) for p in backbone_weights],
            out_specs=pl.BlockSpec((None, 1024, 1), lambda b, n: (b, 0, 0)),
        ),
        compiler_params=pltpu.CompilerParams(
            dimension_semantics=("parallel", "arbitrary"),      # B across cores on v7x
            vmem_limit_bytes=VMEM_LIMIT_BYTES),
        cost_estimate=pl.CostEstimate(flops=flops, transcendentals=0,
                                      bytes_accessed=bytes_accessed),
    )(x_ncl, *backbone_weights)

    # Tiny (B x 4 KiB) relayout of the pooled feature between the two calls.
    g = jnp.transpose(pooled[:, :, 0])                          # (1024, B)

    # --- FC head: one batched pass over all B pooled features ----------------------------
    def head_spec(a):
        nd = a.ndim
        return pl.BlockSpec(a.shape, lambda i, _nd=nd: (0,) * _nd)

    out = pl.pallas_call(
        _stn_head_kernel,
        out_shape=jax.ShapeDtypeStruct((4, B), jnp.float32),
        grid_spec=pltpu.PrefetchScalarGridSpec(
            num_scalar_prefetch=0,
            grid=(1,),
            in_specs=[head_spec(g)] + [head_spec(p) for p in head_weights],
            out_specs=pl.BlockSpec((4, B), lambda i: (0, 0)),
        ),
        compiler_params=pltpu.CompilerParams(
            dimension_semantics=("arbitrary",),
            vmem_limit_bytes=VMEM_LIMIT_BYTES),
    )(g, *head_weights)

    return jnp.transpose(out).reshape(B, 2, 2)


# ----------------------------------------------------------------------------------------
# Parameters (eval-mode BN folded) and pure-JAX reference
# ----------------------------------------------------------------------------------------
def _fold_bn(w, b, gamma, beta, mean, var, eps=BN_EPS):
    """Fold eval-mode BatchNorm1d into a (C_out, C_in) weight and (C_out,) bias."""
    scale = gamma / jnp.sqrt(var + eps)
    return w * scale[:, None], b * scale + (beta - mean * scale)


def make_params(key):
    """Deterministic synthetic parameters matching the module's __init__ shapes.

    Channels-first layout: weights (C_out, C_in), biases (C_out, 1).  MXU weights
    (conv2/conv3/fc1/fc2/fc3) are stored in bf16; conv1 and all biases stay f32.
    """
    dims = [(2, 64), (64, 128), (128, 1024), (1024, 512), (512, 256), (256, 4)]
    keys = jax.random.split(key, 64)
    ki = iter(range(64))

    raw_w, raw_b = [], []
    for cin, cout in dims:
        bound = 1.0 / np.sqrt(cin)
        raw_w.append(jax.random.uniform(keys[next(ki)], (cout, cin),
                                        minval=-bound, maxval=bound, dtype=jnp.float32))
        raw_b.append(jax.random.uniform(keys[next(ki)], (cout,),
                                        minval=-bound, maxval=bound, dtype=jnp.float32))

    # BatchNorm (eval mode) for bn1..bn5, channels: 64, 128, 1024, 512, 256.
    bn = []
    for c in (64, 128, 1024, 512, 256):
        gamma = jax.random.uniform(keys[next(ki)], (c,), minval=0.5, maxval=1.5, dtype=jnp.float32)
        beta = 0.1 * jax.random.normal(keys[next(ki)], (c,), dtype=jnp.float32)
        mean = 0.1 * jax.random.normal(keys[next(ki)], (c,), dtype=jnp.float32)
        var = jax.random.uniform(keys[next(ki)], (c,), minval=0.5, maxval=1.5, dtype=jnp.float32)
        bn.append((gamma, beta, mean, var))

    params = []
    for i in range(5):                                       # conv1..conv3, fc1, fc2 (+BN)
        w, b = _fold_bn(raw_w[i], raw_b[i], *bn[i])
        w = w if i == 0 else w.astype(jnp.bfloat16)          # conv1 stays f32 (VPU path)
        params += [w, b.reshape(-1, 1)]
    # fc3: no BN; fold the identity [1, 0, 0, 1] into its bias.
    iden = jnp.array([1.0, 0.0, 0.0, 1.0], dtype=jnp.float32)
    params += [raw_w[5].astype(jnp.bfloat16), (raw_b[5] + iden).reshape(-1, 1)]
    return params


def reference(x_ncl, params):
    """Pure-JAX reference of the folded network (same math/dtypes as the kernels)."""
    (w1, b1, w2, b2, w3, b3, wf1, bf1, wf2, bf2, wf3, bf3) = params

    def mm(w_bf16, h_f32):
        return jnp.dot(w_bf16, h_f32.astype(jnp.bfloat16),
                       preferred_element_type=jnp.float32)

    pooled = []
    for xb in x_ncl:                                         # xb: (2, N)
        h = jnp.maximum(w1[:, 0:1] * xb[0:1, :] + w1[:, 1:2] * xb[1:2, :] + b1, 0.0)
        h = jnp.maximum(mm(w2, h) + b2, 0.0)
        h = jnp.maximum(mm(w3, h) + b3, 0.0)
        pooled.append(jnp.max(h, axis=1, keepdims=True))     # (1024, 1)
    g = jnp.concatenate(pooled, axis=1)                      # (1024, B)
    f = jnp.maximum(mm(wf1, g) + bf1, 0.0)
    f = jnp.maximum(mm(wf2, f) + bf2, 0.0)
    o = mm(wf3, f) + bf3                                     # (4, B), identity already in bf3
    return jnp.transpose(o).reshape(-1, 2, 2)


if __name__ == "__main__":
    key = jax.random.PRNGKey(0)
    k_param, k_x = jax.random.split(key)

    B, N = 2, 1024
    params = make_params(k_param)
    x = jax.random.normal(k_x, (B, 2, N), dtype=jnp.float32)  # native PyTorch (B, C=2, N)

    out = spatial_transformer_2d(x, params, tile_n=256)       # 4 point-tiles per batch element
    out = jax.block_until_ready(out)

    ref = reference(x, params)
    assert out.shape == (B, 2, 2), out.shape
    # bf16 MXU operands in both kernel and reference -> only f32 accumulation-order noise.
    np.testing.assert_allclose(np.asarray(out), np.asarray(ref), rtol=2e-3, atol=2e-3)
    print("KERNEL_OK")
</pallas_src>

<mosaic_0001>
module attributes {stable_mosaic.version = 11 : i64} {
  func.func @_stn_backbone_kernel(%arg0: i32, %arg1: i32, %arg2: memref<1x2x256xf32, #tpu.memory_space<vmem>>, %arg3: memref<64x2xf32, #tpu.memory_space<vmem>>, %arg4: memref<64x1xf32, #tpu.memory_space<vmem>>, %arg5: memref<128x64xbf16, #tpu.memory_space<vmem>>, %arg6: memref<128x1xf32, #tpu.memory_space<vmem>>, %arg7: memref<1024x128xbf16, #tpu.memory_space<vmem>>, %arg8: memref<1024x1xf32, #tpu.memory_space<vmem>>, %arg9: memref<1x1024x1xf32, #tpu.memory_space<vmem>>) attributes {dimension_semantics = [#tpu.dimension_semantics<parallel>, #tpu.dimension_semantics<arbitrary>], iteration_bounds = array<i64: 2, 4>, scalar_prefetch = 0 : i64, scratch_operands = 0 : i64, tpu.core_type = #tpu.core_type<tc>, window_params = [{transform_indices = @transform_0, window_bounds = array<i64: 1, 2, 256>}, {pipeline_mode = #tpu.pipeline_mode<synchronous>, transform_indices = @transform_1, window_bounds = array<i64: 64, 2>}, {pipeline_mode = #tpu.pipeline_mode<synchronous>, transform_indices = @transform_2, window_bounds = array<i64: 64, 1>}, {pipeline_mode = #tpu.pipeline_mode<synchronous>, transform_indices = @transform_3, window_bounds = array<i64: 128, 64>}, {pipeline_mode = #tpu.pipeline_mode<synchronous>, transform_indices = @transform_4, window_bounds = array<i64: 128, 1>}, {pipeline_mode = #tpu.pipeline_mode<synchronous>, transform_indices = @transform_5, window_bounds = array<i64: 1024, 128>}, {pipeline_mode = #tpu.pipeline_mode<synchronous>, transform_indices = @transform_6, window_bounds = array<i64: 1024, 1>}, {transform_indices = @transform_7, window_bounds = array<i64: 1, 1024, 1>}]} {
    %c0 = arith.constant 0 : index
    %c0_0 = arith.constant 0 : index
    %c0_1 = arith.constant 0 : index
    %0 = vector.load %arg2[%c0, %c0_0, %c0_1] : memref<1x2x256xf32, #tpu.memory_space<vmem>>, vector<1x2x256xf32>
    %1 = vector.shape_cast %0 : vector<1x2x256xf32> to vector<2x256xf32>
    %c0_2 = arith.constant 0 : index
    %c0_3 = arith.constant 0 : index
    %2 = vector.load %arg3[%c0_2, %c0_3] : memref<64x2xf32, #tpu.memory_space<vmem>>, vector<64x2xf32>
    %3 = vector.extract_strided_slice %2 {offsets = [0, 0], sizes = [64, 1], strides = [1, 1]} : vector<64x2xf32> to vector<64x1xf32>
    %4 = vector.extract_strided_slice %1 {offsets = [0, 0], sizes = [1, 256], strides = [1, 1]} : vector<2x256xf32> to vector<1x256xf32>
    %5 = vector.broadcast %3 : vector<64x1xf32> to vector<64x256xf32>
    %6 = vector.broadcast %4 : vector<1x256xf32> to vector<64x256xf32>
    %7 = arith.mulf %5, %6 : vector<64x256xf32>
    %8 = vector.extract_strided_slice %2 {offsets = [0, 1], sizes = [64, 1], strides = [1, 1]} : vector<64x2xf32> to vector<64x1xf32>
    %9 = vector.extract_strided_slice %1 {offsets = [1, 0], sizes = [1, 256], strides = [1, 1]} : vector<2x256xf32> to vector<1x256xf32>
    %10 = vector.broadcast %8 : vector<64x1xf32> to vector<64x256xf32>
    %11 = vector.broadcast %9 : vector<1x256xf32> to vector<64x256xf32>
    %12 = arith.mulf %10, %11 : vector<64x256xf32>
    %13 = arith.addf %7, %12 : vector<64x256xf32>
    %c0_4 = arith.constant 0 : index
    %c0_5 = arith.constant 0 : index
    %14 = vector.load %arg4[%c0_4, %c0_5] : memref<64x1xf32, #tpu.memory_space<vmem>>, vector<64x1xf32>
    %15 = vector.broadcast %14 : vector<64x1xf32> to vector<64x256xf32>
    %16 = arith.addf %13, %15 : vector<64x256xf32>
    %cst = arith.constant 0.000000e+00 : f32
    %17 = vector.broadcast %cst : f32 to vector<64x256xf32>
    %18 = arith.maximumf %16, %17 : vector<64x256xf32>
    %c0_6 = arith.constant 0 : index
    %c0_7 = arith.constant 0 : index
    %19 = vector.load %arg5[%c0_6, %c0_7] : memref<128x64xbf16, #tpu.memory_space<vmem>>, vector<128x64xbf16>
    %20 = arith.truncf %18 : vector<64x256xf32> to vector<64x256xbf16>
    %cst_8 = arith.constant dense<0.000000e+00> : vector<128x256xf32>
    %21 = tpu.matmul %19, %20, %cst_8 {dimension_numbers = #tpu.dot_dimension_numbers<[1], [0], [0], [1], [0, 0, 1, 1], [], []>} : vector<128x64xbf16>, vector<64x256xbf16>, vector<128x256xf32> -> vector<128x256xf32>
    %c0_9 = arith.constant 0 : index
    %c0_10 = arith.constant 0 : index
    %22 = vector.load %arg6[%c0_9, %c0_10] : memref<128x1xf32, #tpu.memory_space<vmem>>, vector<128x1xf32>
    %23 = vector.broadcast %22 : vector<128x1xf32> to vector<128x256xf32>
    %24 = arith.addf %21, %23 : vector<128x256xf32>
    %cst_11 = arith.constant 0.000000e+00 : f32
    %25 = vector.broadcast %cst_11 : f32 to vector<128x256xf32>
    %26 = arith.maximumf %24, %25 : vector<128x256xf32>
    %c0_12 = arith.constant 0 : index
    %c0_13 = arith.constant 0 : index
    %27 = vector.load %arg7[%c0_12, %c0_13] : memref<1024x128xbf16, #tpu.memory_space<vmem>>, vector<1024x128xbf16>
    %28 = arith.truncf %26 : vector<128x256xf32> to vector<128x256xbf16>
    %cst_14 = arith.constant dense<0.000000e+00> : vector<1024x256xf32>
    %29 = tpu.matmul %27, %28, %cst_14 {dimension_numbers = #tpu.dot_dimension_numbers<[1], [0], [0], [1], [0, 0, 1, 1], [], []>} : vector<1024x128xbf16>, vector<128x256xbf16>, vector<1024x256xf32> -> vector<1024x256xf32>
    %c0_15 = arith.constant 0 : index
    %c0_16 = arith.constant 0 : index
    %30 = vector.load %arg8[%c0_15, %c0_16] : memref<1024x1xf32, #tpu.memory_space<vmem>>, vector<1024x1xf32>
    %31 = vector.broadcast %30 : vector<1024x1xf32> to vector<1024x256xf32>
    %32 = arith.addf %29, %31 : vector<1024x256xf32>
    %cst_17 = arith.constant 0.000000e+00 : f32
    %33 = vector.broadcast %cst_17 : f32 to vector<1024x256xf32>
    %34 = arith.maximumf %32, %33 : vector<1024x256xf32>
    %cst_18 = arith.constant dense<0xFF800000> : vector<1024xf32>
    %35 = vector.multi_reduction <maximumf>, %34, %cst_18 [1] : vector<1024x256xf32> to vector<1024xf32>
    %36 = vector.shape_cast %35 : vector<1024xf32> to vector<1024x1xf32>
    %c0_i32 = arith.constant 0 : i32
    %37 = arith.cmpi eq, %arg1, %c0_i32 : i32
    %38 = arith.extui %37 : i1 to i32
    %c0_i32_19 = arith.constant 0 : i32
    %39 = arith.cmpi ne, %38, %c0_i32_19 : i32
    scf.if %39 {
      %cst_26 = arith.constant 0.000000e+00 : f32
      %46 = vector.broadcast %cst_26 : f32 to vector<1024x1xf32>
      %c0_27 = arith.constant 0 : index
      %c0_28 = arith.constant 0 : index
      %c0_29 = arith.constant 0 : index
      %47 = vector.load %arg9[%c0_27, %c0_28, %c0_29] : memref<1x1024x1xf32, #tpu.memory_space<vmem>>, vector<1x1024x1xf32>
      %48 = vector.shape_cast %47 : vector<1x1024x1xf32> to vector<1024x1xf32>
      %49 = vector.shape_cast %46 : vector<1024x1xf32> to vector<1x1024x1xf32>
      tpu.vector_store %arg9[%c0_27, %c0_28, %c0_29], %49 {strides = array<i32>} : memref<1x1024x1xf32, #tpu.memory_space<vmem>>, vector<1x1024x1xf32>,
    } else {
    }
    %c0_20 = arith.constant 0 : index
    %c0_21 = arith.constant 0 : index
    %c0_22 = arith.constant 0 : index
    %40 = vector.load %arg9[%c0_20, %c0_21, %c0_22] : memref<1x1024x1xf32, #tpu.memory_space<vmem>>, vector<1x1024x1xf32>
    %41 = vector.shape_cast %40 : vector<1x1024x1xf32> to vector<1024x1xf32>
    %42 = arith.maximumf %41, %36 : vector<1024x1xf32>
    %c0_23 = arith.constant 0 : index
    %c0_24 = arith.constant 0 : index
    %c0_25 = arith.constant 0 : index
    %43 = vector.load %arg9[%c0_23, %c0_24, %c0_25] : memref<1x1024x1xf32, #tpu.memory_space<vmem>>, vector<1x1024x1xf32>
    %44 = vector.shape_cast %43 : vector<1x1024x1xf32> to vector<1024x1xf32>
    %45 = vector.shape_cast %42 : vector<1024x1xf32> to vector<1x1024x1xf32>
    tpu.vector_store %arg9[%c0_23, %c0_24, %c0_25], %45 {strides = array<i32>} : memref<1x1024x1xf32, #tpu.memory_space<vmem>>, vector<1x1024x1xf32>,
    return
  }
  func.func @transform_0(%arg0: i32, %arg1: i32) -> (i32, i32, i32) {
    %c0_i32 = arith.constant 0 : i32
    %c0_i32_0 = arith.constant 0 : i32
    return %arg0, %c0_i32, %arg1 : i32, i32, i32
  }
  func.func @transform_1(%arg0: i32, %arg1: i32) -> (i32, i32) {
    %c0_i32 = arith.constant 0 : i32
    %c0_i32_0 = arith.constant 0 : i32
    %c0_i32_1 = arith.constant 0 : i32
    return %c0_i32, %c0_i32_0 : i32, i32
  }
  func.func @transform_2(%arg0: i32, %arg1: i32) -> (i32, i32) {
    %c0_i32 = arith.constant 0 : i32
    %c0_i32_0 = arith.constant 0 : i32
    %c0_i32_1 = arith.constant 0 : i32
    return %c0_i32, %c0_i32_0 : i32, i32
  }
  func.func @transform_3(%arg0: i32, %arg1: i32) -> (i32, i32) {
    %c0_i32 = arith.constant 0 : i32
    %c0_i32_0 = arith.constant 0 : i32
    %c0_i32_1 = arith.constant 0 : i32
    return %c0_i32, %c0_i32_0 : i32, i32
  }
  func.func @transform_4(%arg0: i32, %arg1: i32) -> (i32, i32) {
    %c0_i32 = arith.constant 0 : i32
    %c0_i32_0 = arith.constant 0 : i32
    %c0_i32_1 = arith.constant 0 : i32
    return %c0_i32, %c0_i32_0 : i32, i32
  }
  func.func @transform_5(%arg0: i32, %arg1: i32) -> (i32, i32) {
    %c0_i32 = arith.constant 0 : i32
    %c0_i32_0 = arith.constant 0 : i32
    %c0_i32_1 = arith.constant 0 : i32
    return %c0_i32, %c0_i32_0 : i32, i32
  }
  func.func @transform_6(%arg0: i32, %arg1: i32) -> (i32, i32) {
    %c0_i32 = arith.constant 0 : i32
    %c0_i32_0 = arith.constant 0 : i32
    %c0_i32_1 = arith.constant 0 : i32
    return %c0_i32, %c0_i32_0 : i32, i32
  }
  func.func @transform_7(%arg0: i32, %arg1: i32) -> (i32, i32, i32) {
    %c0_i32 = arith.constant 0 : i32
    %c0_i32_0 = arith.constant 0 : i32
    %c0_i32_1 = arith.constant 0 : i32
    return %arg0, %c0_i32, %c0_i32_0 : i32, i32, i32
  }
}

</mosaic_0001>

<llo_original>
// kernel: tpu_custom_call.1
$region0: #{tpu_custom_call.1}
  #allocation0 [shape = 'u32[]', space=smem, size = 0x4, offset = 0x4, fixed_abs, tag = 'smem constant byte address 0x4 - core index']
  #allocation1 [shape = 'u32[144,128]{1,0:T(1,128)}', space=vmem, size = 0x12000, scoped, tag = 'internal scratch']
  %s0 = inlined_call_operand.vmem [shape: f32[2,2,1024], index: 0, kind: input, shape index: {}]
  %s1 = inlined_call_operand.vmem [shape: f32[64,2], index: 1, kind: input, shape index: {}]
  %s2 = inlined_call_operand.vmem [shape: f32[64,1], index: 2, kind: input, shape index: {}]
  %s3 = inlined_call_operand.vmem [shape: bf16[128,64], index: 3, kind: input, shape index: {}]
  %s4 = inlined_call_operand.vmem [shape: f32[128,1], index: 4, kind: input, shape index: {}]
  %s5 = inlined_call_operand.vmem [shape: bf16[1024,128], index: 5, kind: input, shape index: {}]
  %s6 = inlined_call_operand.vmem [shape: f32[1024,1], index: 6, kind: input, shape index: {}]
  %s7 = inlined_call_operand.vmem [shape: f32[2,1024,1], index: 7, kind: output, shape index: {}]
  %s8 = sld [smem:[#allocation0]]
  $region65: #{tpu_custom_call.1} parent=0
    _
  %s10 = ssub.s32 1, %s8
  %s11 = scalar_select 0, %s10, %s8
  loop: start=0, step=1, limit=10
  $region2: #{tpu_custom_call.1} parent=0 // loop_pre_header
    _
  $region3: #{tpu_custom_call.1} parent=0 // loop_header
    %s13 = sphi 0, %s17
    %p14 = scmp.ge.s32.totalorder %s13, 10
    %s20 = sphi 0, %s32
    %s21 = sphi 0, %s28
    %s22 = sphi 0, %s20
    %s23 = sphi 0, %s21
    %s24 = sphi 0, %s22
    %s25 = sphi 0, %s23
    %s37 = sphi 0, %s39
    %s40 = sphi 0, %s37
    %s41 = sphi 0, %s40
    %s57 = sphi 0, %s41
    %s61 = sphi 0, %s61
    %s63 = sphi 0, %s61
    %s64 = sphi 0, %s63
    %s78 = sphi 0, %s64
    %s82 = sphi 0, %s82
    %s84 = sphi 0, %s82
    %s85 = sphi 0, %s84
    %s99 = sphi 0, %s85
    %s103 = sphi 0, %s103
    %s105 = sphi 0, %s103
    %s106 = sphi 0, %s105
    %s120 = sphi 0, %s106
    %s124 = sphi 0, %s124
    %s126 = sphi 0, %s124
    %s127 = sphi 0, %s126
    %s141 = sphi 0, %s127
    %s145 = sphi 0, %s145
    %s147 = sphi 0, %s145
    %s148 = sphi 0, %s147
    %s162 = sphi 0, %s148
    %s166 = sphi 0, %s166
    %s168 = sphi 0, %s166
    %s169 = sphi 0, %s168
    %s183 = sphi 0, %s169
    %s189 = sphi 0, %s191
    %s192 = sphi 0, %s189
    %s193 = sphi 0, %s192
    %s209 = sphi 0, %s193
  $region4: #{tpu_custom_call.1} parent=0 // loop_header_branch
    %16 = sbr.rel (%p14) target = $region8
  $region5: #{tpu_custom_call.1} parent=0 // loop_body
    %s18 = ssub.s32 %s13, 1
    %s19 = ssub.s32 %s13, 2
    %s26 = sadd.s32 1, %s21
    %p27 = scmp.ge.s32.totalorder %s26, 4
    %s28 = scalar_select %p27, 0, %s26
    %s29 = sadd.s32 1, %s20
    %s30 = scalar_select %p27, %s29, %s20
    %p31 = scmp.ge.s32.totalorder %s30, 2
    %s32 = scalar_select %p31, 0, %s30
    %s33 = ssub.s32 %s20, %s32
    %s34 = ssub.s32 %s21, %s28
    %s35 = sor.u32 %s33, %s34
    %p36 = scmp.eq.s32.totalorder %s35, 0
    %s38 = sadd.s32 %s37, 1
    %s39 = scalar_select %p36, %s37, %s38
    %p42 = pneg %p36
    %p43 = scmp.eq.s32.totalorder %s13, 7
    %p44 = por %p42, %p43
    %p45 = scmp.ne.s32.totalorder %s37, %s40
    %p46 = scmp.eq.s32.totalorder %s13, 0
    %p47 = por %p45, %p46
    %p48 = scmp.ne.s32.totalorder %s37, %s40
    %p49 = scmp.eq.s32.totalorder %s18, 7
    %p50 = por %p48, %p49
    %p51 = scmp.ne.s32.totalorder %s40, %s41
    %p52 = scmp.eq.s32.totalorder %s18, 0
    %p53 = por %p51, %p52
    %p54 = scmp.ne.s32.totalorder %s40, %s41
    %p55 = scmp.eq.s32.totalorder %s19, 7
    %p56 = por %p54, %p55
    %p58 = scmp.ne.s32.totalorder %s41, %s57
    %p59 = scmp.eq.s32.totalorder %s19, 0
    %p60 = por %p58, %p59
    %s62 = sadd.s32 %s61, 1
    %p65 = scmp.eq.s32.totalorder %s13, 7
    %p66 = scmp.ne.s32.totalorder %s61, %s63
    %p67 = scmp.eq.s32.totalorder %s13, 0
    %p68 = por %p66, %p67
    %p69 = scmp.ne.s32.totalorder %s61, %s63
    %p70 = scmp.eq.s32.totalorder %s18, 7
    %p71 = por %p69, %p70
    %p72 = scmp.ne.s32.totalorder %s63, %s64
    %p73 = scmp.eq.s32.totalorder %s18, 0
    %p74 = por %p72, %p73
    %p75 = scmp.ne.s32.totalorder %s63, %s64
    %p76 = scmp.eq.s32.totalorder %s19, 7
    %p77 = por %p75, %p76
    %p79 = scmp.ne.s32.totalorder %s64, %s78
    %p80 = scmp.eq.s32.totalorder %s19, 0
    %p81 = por %p79, %p80
    %s83 = sadd.s32 %s82, 1
    %p86 = scmp.eq.s32.totalorder %s13, 7
    %p87 = scmp.ne.s32.totalorder %s82, %s84
    %p88 = scmp.eq.s32.totalorder %s13, 0
    %p89 = por %p87, %p88
    %p90 = scmp.ne.s32.totalorder %s82, %s84
    %p91 = scmp.eq.s32.totalorder %s18, 7
    %p92 = por %p90, %p91
    %p93 = scmp.ne.s32.totalorder %s84, %s85
    %p94 = scmp.eq.s32.totalorder %s18, 0
    %p95 = por %p93, %p94
    %p96 = scmp.ne.s32.totalorder %s84, %s85
    %p97 = scmp.eq.s32.totalorder %s19, 7
    %p98 = por %p96, %p97
    %p100 = scmp.ne.s32.totalorder %s85, %s99
    %p101 = scmp.eq.s32.totalorder %s19, 0
    %p102 = por %p100, %p101
    %s104 = sadd.s32 %s103, 1
    %p107 = scmp.eq.s32.totalorder %s13, 7
    %p108 = scmp.ne.s32.totalorder %s103, %s105
    %p109 = scmp.eq.s32.totalorder %s13, 0
    %p110 = por %p108, %p109
    %p111 = scmp.ne.s32.totalorder %s103, %s105
    %p112 = scmp.eq.s32.totalorder %s18, 7
    %p113 = por %p111, %p112
    %p114 = scmp.ne.s32.totalorder %s105, %s106
    %p115 = scmp.eq.s32.totalorder %s18, 0
    %p116 = por %p114, %p115
    %p117 = scmp.ne.s32.totalorder %s105, %s106
    %p118 = scmp.eq.s32.totalorder %s19, 7
    %p119 = por %p117, %p118
    %p121 = scmp.ne.s32.totalorder %s106, %s120
    %p122 = scmp.eq.s32.totalorder %s19, 0
    %p123 = por %p121, %p122
    %s125 = sadd.s32 %s124, 1
    %p128 = scmp.eq.s32.totalorder %s13, 7
    %p129 = scmp.ne.s32.totalorder %s124, %s126
    %p130 = scmp.eq.s32.totalorder %s13, 0
    %p131 = por %p129, %p130
    %p132 = scmp.ne.s32.totalorder %s124, %s126
    %p133 = scmp.eq.s32.totalorder %s18, 7
    %p134 = por %p132, %p133
    %p135 = scmp.ne.s32.totalorder %s126, %s127
    %p136 = scmp.eq.s32.totalorder %s18, 0
    %p137 = por %p135, %p136
    %p138 = scmp.ne.s32.totalorder %s126, %s127
    %p139 = scmp.eq.s32.totalorder %s19, 7
    %p140 = por %p138, %p139
    %p142 = scmp.ne.s32.totalorder %s127, %s141
    %p143 = scmp.eq.s32.totalorder %s19, 0
    %p144 = por %p142, %p143
    %s146 = sadd.s32 %s145, 1
    %p149 = scmp.eq.s32.totalorder %s13, 7
    %p150 = scmp.ne.s32.totalorder %s145, %s147
    %p151 = scmp.eq.s32.totalorder %s13, 0
    %p152 = por %p150, %p151
    %p153 = scmp.ne.s32.totalorder %s145, %s147
    %p154 = scmp.eq.s32.totalorder %s18, 7
    %p155 = por %p153, %p154
    %p156 = scmp.ne.s32.totalorder %s147, %s148
    %p157 = scmp.eq.s32.totalorder %s18, 0
    %p158 = por %p156, %p157
    %p159 = scmp.ne.s32.totalorder %s147, %s148
    %p160 = scmp.eq.s32.totalorder %s19, 7
    %p161 = por %p159, %p160
    %p163 = scmp.ne.s32.totalorder %s148, %s162
    %p164 = scmp.eq.s32.totalorder %s19, 0
    %p165 = por %p163, %p164
    %s167 = sadd.s32 %s166, 1
    %p170 = scmp.eq.s32.totalorder %s13, 7
    %p171 = scmp.ne.s32.totalorder %s166, %s168
    %p172 = scmp.eq.s32.totalorder %s13, 0
    %p173 = por %p171, %p172
    %p174 = scmp.ne.s32.totalorder %s166, %s168
    %p175 = scmp.eq.s32.totalorder %s18, 7
    %p176 = por %p174, %p175
    %p177 = scmp.ne.s32.totalorder %s168, %s169
    %p178 = scmp.eq.s32.totalorder %s18, 0
    %p179 = por %p177, %p178
    %p180 = scmp.ne.s32.totalorder %s168, %s169
    %p181 = scmp.eq.s32.totalorder %s19, 7
    %p182 = por %p180, %p181
    %p184 = scmp.ne.s32.totalorder %s169, %s183
    %p185 = scmp.eq.s32.totalorder %s19, 0
    %p186 = por %p184, %p185
    %s187 = ssub.s32 %s20, %s32
    %p188 = scmp.eq.s32.totalorder %s187, 0
    %s190 = sadd.s32 %s189, 1
    %s191 = scalar_select %p188, %s189, %s190
    %p194 = pneg %p188
    %p195 = scmp.eq.s32.totalorder %s13, 7
    %p196 = por %p194, %p195
    %p197 = scmp.ne.s32.totalorder %s189, %s192
    %p198 = scmp.eq.s32.totalorder %s13, 0
    %p199 = por %p197, %p198
    %p200 = scmp.ne.s32.totalorder %s189, %s192
    %p201 = scmp.eq.s32.totalorder %s18, 7
    %p202 = por %p200, %p201
    %p203 = scmp.ne.s32.totalorder %s192, %s193
    %p204 = scmp.eq.s32.totalorder %s18, 0
    %p205 = por %p203, %p204
    %p206 = scmp.ne.s32.totalorder %s192, %s193
    %p207 = scmp.eq.s32.totalorder %s19, 7
    %p208 = por %p206, %p207
    %p210 = scmp.ne.s32.totalorder %s193, %s209
    %p211 = scmp.eq.s32.totalorder %s19, 0
    %p212 = por %p210, %p211
    %p213 = scmp.le.s32.totalorder 1, %s13
    %p214 = scmp.lt.s32.totalorder %s13, 9
    %p215 = pnand %p213, %p214
    %p216 = pneg %p215
    // Predicated region
    $region9: #{tpu_custom_call.1} parent=5 // pred_check
      _
    $region10: #{tpu_custom_call.1} parent=5 // pred_check_branch
      %218 = sbr.rel (%p215) target = $region12
    $region11: #{tpu_custom_call.1} parent=5 // pred_region
      %s219 = ssub.s32 %s13, 1
      // Predicated region
      $region13: #{tpu_custom_call.1} parent=11 // pred_check
        %p220 = pneg %p74
      $region14: #{tpu_custom_call.1} parent=11 // pred_check_branch
        %222 = sbr.rel (%p220) target = $region16
      $region15: #{tpu_custom_call.1} parent=11 // pred_region
        _
      $region16: #{tpu_custom_call.1} parent=11 // pred_fallthru
        _
      // Predicated region
      $region17: #{tpu_custom_call.1} parent=11 // pred_check
        %p223 = pneg %p95
      $region18: #{tpu_custom_call.1} parent=11 // pred_check_branch
        %225 = sbr.rel (%p223) target = $region20
      $region19: #{tpu_custom_call.1} parent=11 // pred_region
        _
      $region20: #{tpu_custom_call.1} parent=11 // pred_fallthru
        _
      // Predicated region
      $region21: #{tpu_custom_call.1} parent=11 // pred_check
        %p226 = pneg %p116
      $region22: #{tpu_custom_call.1} parent=11 // pred_check_branch
        %228 = sbr.rel (%p226) target = $region24
      $region23: #{tpu_custom_call.1} parent=11 // pred_region
        _
      $region24: #{tpu_custom_call.1} parent=11 // pred_fallthru
        _
      // Predicated region
      $region25: #{tpu_custom_call.1} parent=11 // pred_check
        %p229 = pneg %p137
      $region26: #{tpu_custom_call.1} parent=11 // pred_check_branch
        %231 = sbr.rel (%p229) target = $region28
      $region27: #{tpu_custom_call.1} parent=11 // pred_region
        _
      $region28: #{tpu_custom_call.1} parent=11 // pred_fallthru
        _
      // Predicated region
      $region29: #{tpu_custom_call.1} parent=11 // pred_check
        %p232 = pneg %p158
      $region30: #{tpu_custom_call.1} parent=11 // pred_check_branch
        %234 = sbr.rel (%p232) target = $region32
      $region31: #{tpu_custom_call.1} parent=11 // pred_region
        _
      $region32: #{tpu_custom_call.1} parent=11 // pred_fallthru
        _
      // Predicated region
      $region33: #{tpu_custom_call.1} parent=11 // pred_check
        %p235 = pneg %p179
      $region34: #{tpu_custom_call.1} parent=11 // pred_check_branch
        %237 = sbr.rel (%p235) target = $region36
      $region35: #{tpu_custom_call.1} parent=11 // pred_region
        _
      $region36: #{tpu_custom_call.1} parent=11 // pred_fallthru
        _
    $region12: #{tpu_custom_call.1} parent=5 // pred_fallthru
      _
    %p238 = scmp.lt.s32.totalorder %s13, 8
    // Predicated region
    $region37: #{tpu_custom_call.1} parent=5 // pred_check
      %p239 = pneg %p238
    $region38: #{tpu_custom_call.1} parent=5 // pred_check_branch
      %241 = sbr.rel (%p239) target = $region40
    $region39: #{tpu_custom_call.1} parent=5 // pred_region
      // Predicated region
      $region41: #{tpu_custom_call.1} parent=39 // pred_check
        %p242 = pneg %p47
      $region42: #{tpu_custom_call.1} parent=39 // pred_check_branch
        %244 = sbr.rel (%p242) target = $region44
      $region43: #{tpu_custom_call.1} parent=39 // pred_region
        %s245 = smul.u32 2, %s21
        %p246 = scmp.lt.s32.totalorder %s20, 1
        %s247 = scalar_select %p246, %s20, 1
        %p248 = scmp.lt.s32.totalorder %s245, 7
        %s249 = scalar_select %p248, %s245, 7
        %s250 = smul.addr %s247, 8
        %s251 = sadd.s32 %s249, %s250
        %s252 = smul.addr %s251, 2
        %s253 = scalar_lea.vmem %s0, %s252
        %s254 = smul.u32 2, %s21
      $region44: #{tpu_custom_call.1} parent=39 // pred_fallthru
        _
    $region40: #{tpu_custom_call.1} parent=5 // pred_fallthru
      _
    %p255 = scmp.le.s32.totalorder 1, %s13
    %p256 = scmp.lt.s32.totalorder %s13, 9
    %p257 = pnand %p255, %p256
    %p258 = pneg %p257
    // Predicated region
    $region45: #{tpu_custom_call.1} parent=5 // pred_check
      _
    $region46: #{tpu_custom_call.1} parent=5 // pred_check_branch
      %260 = sbr.rel (%p257) target = $region48
    $region47: #{tpu_custom_call.1} parent=5 // pred_region
      %s261 = ssub.s32 %s13, 1
      %s262 = smul.u32 2, %s23
      %p263 = scmp.lt.s32.totalorder %s22, 1
      %s264 = scalar_select %p263, %s22, 1
      %p265 = scmp.lt.s32.totalorder %s262, 7
      %s266 = scalar_select %p265, %s262, 7
      %s267 = smul.addr %s264, 8
      %s268 = sadd.s32 %s266, %s267
      %s269 = smul.addr %s268, 2
      %s270 = scalar_lea.vmem %s0, %s269
      %p271 = pneg %p53
      %p272 = pneg %p50
      %p273 = pneg %p74
      %p274 = pneg %p71
      %p275 = pneg %p95
      %p276 = pneg %p92
      %p277 = pneg %p116
      %p278 = pneg %p113
      %p279 = pneg %p137
      %p280 = pneg %p134
      %p281 = pneg %p158
      %p282 = pneg %p155
      %p283 = pneg %p179
      %p284 = pneg %p176
      %p285 = pneg %p205
      %p286 = pneg %p202
      %p287 = scmp.lt.s32.totalorder %s22, 1
      %s288 = scalar_select %p287, %s22, 1
      %s289 = smul.addr %s288, 128
      %s290 = smul.addr %s289, 8
      %s291 = scalar_lea.vmem %s7, %s290
      %s292 = smul.u32 2, %s23
      %p293 = scmp.lt.s32.totalorder %s22, 1
      %s294 = scalar_select %p293, %s22, 1
      %p295 = scmp.lt.s32.totalorder %s292, 7
      %s296 = scalar_select %p295, %s292, 7
      %s297 = smul.addr %s294, 8
      %s298 = sadd.s32 %s296, %s297
      %s299 = smul.addr %s298, 2
      %s300 = scalar_lea.vmem %s0, %s299
      %s301 = smul.u32 2, %s23
      %p302 = scmp.lt.s32.totalorder %s22, 1
      %s303 = scalar_select %p302, %s22, 1
      %s304 = smul.addr %s303, 128
      %s305 = smul.addr %s304, 8
      %s306 = scalar_lea.vmem %s7, %s305
      %v308 = vld [vmem:[%s300] sm:$0xf]
      %v309 = vld [vmem:[%s1] sm:$0xff]
      %v310 = vld [vmem:[%s1 + $0x8] sm:$0xff]
      %v311 = vld [vmem:[%s1 + $0x10] sm:$0xff]
      %v312 = vld [vmem:[%s1 + $0x18] sm:$0xff]
      %v313 = vld [vmem:[%s1 + $0x20] sm:$0xff]
      %v314 = vld [vmem:[%s1 + $0x28] sm:$0xff]
      %v315 = vld [vmem:[%s1 + $0x30] sm:$0xff]
      %v316 = vld [vmem:[%s1 + $0x38] sm:$0xff]
      %318 = vset.pattern.permute.xlu0 0
      %319 = vperm.xlu0 %318, %v309
      %v320 = vpop.permute.xlu0 %319
      %323 = vset.pattern.permute.xlu0 0
      %324 = vperm.xlu0 %323, %v310
      %v325 = vpop.permute.xlu0 %324
      %328 = vset.pattern.permute.xlu0 0
      %329 = vperm.xlu0 %328, %v311
      %v330 = vpop.permute.xlu0 %329
      %333 = vset.pattern.permute.xlu0 0
      %334 = vperm.xlu0 %333, %v312
      %v335 = vpop.permute.xlu0 %334
      %338 = vset.pattern.permute.xlu0 0
      %339 = vperm.xlu0 %338, %v313
      %v340 = vpop.permute.xlu0 %339
      %343 = vset.pattern.permute.xlu0 0
      %344 = vperm.xlu0 %343, %v314
      %v345 = vpop.permute.xlu0 %344
      %348 = vset.pattern.permute.xlu0 0
      %349 = vperm.xlu0 %348, %v315
      %v350 = vpop.permute.xlu0 %349
      %353 = vset.pattern.permute.xlu0 0
      %354 = vperm.xlu0 %353, %v316
      %v355 = vpop.permute.xlu0 %354
      %v358 = vlaneseq
      %v359 = vshrl.u32 %v358, 7
      %v360 = vsub.s32 0, %v359
      %v361 = vrot.slane %v308, %v360
      %v362 = vlaneseq
      %v363 = vshrl.u32 %v362, 7
      %v364 = vsub.s32 2, %v363
      %v365 = vrot.slane %v308, %v364
      %v368 = vlaneseq
      %v369 = vshrl.u32 %v368, 7
      %v370 = vsub.s32 0, %v369
      %v371 = vrot.slane %v361, %v370
      %v372 = vlaneseq
      %v373 = vshrl.u32 %v372, 7
      %v374 = vsub.s32 0, %v373
      %v375 = vrot.slane %v365, %v374
      %v376 = vmul.f32 %v320, %v371
      %v377 = vmul.f32 %v320, %v375
      %v378 = vmul.f32 %v325, %v371
      %v379 = vmul.f32 %v325, %v375
      %v380 = vmul.f32 %v330, %v371
      %v381 = vmul.f32 %v330, %v375
      %v382 = vmul.f32 %v335, %v371
      %v383 = vmul.f32 %v335, %v375
      %v384 = vmul.f32 %v340, %v371
      %v385 = vmul.f32 %v340, %v375
      %v386 = vmul.f32 %v345, %v371
      %v387 = vmul.f32 %v345, %v375
      %v388 = vmul.f32 %v350, %v371
      %v389 = vmul.f32 %v350, %v375
      %v390 = vmul.f32 %v355, %v371
      %v391 = vmul.f32 %v355, %v375
      %392 = vset.pattern.permute.xlu0 1
      %393 = vperm.xlu0 %392, %v309
      %v394 = vpop.permute.xlu0 %393
      %396 = vset.pattern.permute.xlu0 1
      %397 = vperm.xlu0 %396, %v310
      %v398 = vpop.permute.xlu0 %397
      %400 = vset.pattern.permute.xlu0 1
      %401 = vperm.xlu0 %400, %v311
      %v402 = vpop.permute.xlu0 %401
      %404 = vset.pattern.permute.xlu0 1
      %405 = vperm.xlu0 %404, %v312
      %v406 = vpop.permute.xlu0 %405
      %408 = vset.pattern.permute.xlu0 1
      %409 = vperm.xlu0 %408, %v313
      %v410 = vpop.permute.xlu0 %409
      %412 = vset.pattern.permute.xlu0 1
      %413 = vperm.xlu0 %412, %v314
      %v414 = vpop.permute.xlu0 %413
      %416 = vset.pattern.permute.xlu0 1
      %417 = vperm.xlu0 %416, %v315
      %v418 = vpop.permute.xlu0 %417
      %420 = vset.pattern.permute.xlu0 1
      %421 = vperm.xlu0 %420, %v316
      %v422 = vpop.permute.xlu0 %421
      %v424 = vlaneseq
      %v425 = vshrl.u32 %v424, 7
      %v426 = vsub.s32 1, %v425
      %v427 = vrot.slane %v308, %v426
      %v428 = vlaneseq
      %v429 = vshrl.u32 %v428, 7
      %v430 = vsub.s32 3, %v429
      %v431 = vrot.slane %v308, %v430
      %v434 = vlaneseq
      %v435 = vshrl.u32 %v434, 7
      %v436 = vsub.s32 1, %v435
      %v437 = vrot.slane %v427, %v436
      %v438 = vlaneseq
      %v439 = vshrl.u32 %v438, 7
      %v440 = vsub.s32 1, %v439
      %v441 = vrot.slane %v431, %v440
      %v442 = vmul.f32 %v394, %v437
      %v443 = vmul.f32 %v394, %v441
      %v444 = vmul.f32 %v398, %v437
      %v445 = vmul.f32 %v398, %v441
      %v446 = vmul.f32 %v402, %v437
      %v447 = vmul.f32 %v402, %v441
      %v448 = vmul.f32 %v406, %v437
      %v449 = vmul.f32 %v406, %v441
      %v450 = vmul.f32 %v410, %v437
      %v451 = vmul.f32 %v410, %v441
      %v452 = vmul.f32 %v414, %v437
      %v453 = vmul.f32 %v414, %v441
      %v454 = vmul.f32 %v418, %v437
      %v455 = vmul.f32 %v418, %v441
      %v456 = vmul.f32 %v422, %v437
      %v457 = vmul.f32 %v422, %v441
      %v458 = vadd.f32 %v376, %v442
      %v459 = vadd.f32 %v377, %v443
      %v460 = vadd.f32 %v378, %v444
      %v461 = vadd.f32 %v379, %v445
      %v462 = vadd.f32 %v380, %v446
      %v463 = vadd.f32 %v381, %v447
      %v464 = vadd.f32 %v382, %v448
      %v465 = vadd.f32 %v383, %v449
      %v466 = vadd.f32 %v384, %v450
      %v467 = vadd.f32 %v385, %v451
      %v468 = vadd.f32 %v386, %v452
      %v469 = vadd.f32 %v387, %v453
      %v470 = vadd.f32 %v388, %v454
      %v471 = vadd.f32 %v389, %v455
      %v472 = vadd.f32 %v390, %v456
      %v473 = vadd.f32 %v391, %v457
      %v474 = vld [vmem:[%s2] sm:$0xff]
      %v475 = vld [vmem:[%s2 + $0x8] sm:$0xff]
      %v476 = vld [vmem:[%s2 + $0x10] sm:$0xff]
      %v477 = vld [vmem:[%s2 + $0x18] sm:$0xff]
      %v478 = vld [vmem:[%s2 + $0x20] sm:$0xff]
      %v479 = vld [vmem:[%s2 + $0x28] sm:$0xff]
      %v480 = vld [vmem:[%s2 + $0x30] sm:$0xff]
      %v481 = vld [vmem:[%s2 + $0x38] sm:$0xff]
      %483 = vset.pattern.permute.xlu0 0
      %484 = vperm.xlu0 %483, %v474
      %v485 = vpop.permute.xlu0 %484
      %488 = vset.pattern.permute.xlu0 0
      %489 = vperm.xlu0 %488, %v475
      %v490 = vpop.permute.xlu0 %489
      %493 = vset.pattern.permute.xlu0 0
      %494 = vperm.xlu0 %493, %v476
      %v495 = vpop.permute.xlu0 %494
      %498 = vset.pattern.permute.xlu0 0
      %499 = vperm.xlu0 %498, %v477
      %v500 = vpop.permute.xlu0 %499
      %503 = vset.pattern.permute.xlu0 0
      %504 = vperm.xlu0 %503, %v478
      %v505 = vpop.permute.xlu0 %504
      %508 = vset.pattern.permute.xlu0 0
      %509 = vperm.xlu0 %508, %v479
      %v510 = vpop.permute.xlu0 %509
      %513 = vset.pattern.permute.xlu0 0
      %514 = vperm.xlu0 %513, %v480
      %v515 = vpop.permute.xlu0 %514
      %518 = vset.pattern.permute.xlu0 0
      %519 = vperm.xlu0 %518, %v481
      %v520 = vpop.permute.xlu0 %519
      %v522 = vadd.f32 %v458, %v485
      %v523 = vadd.f32 %v459, %v485
      %v524 = vadd.f32 %v460, %v490
      %v525 = vadd.f32 %v461, %v490
      %v526 = vadd.f32 %v462, %v495
      %v527 = vadd.f32 %v463, %v495
      %v528 = vadd.f32 %v464, %v500
      %v529 = vadd.f32 %v465, %v500
      %v530 = vadd.f32 %v466, %v505
      %v531 = vadd.f32 %v467, %v505
      %v532 = vadd.f32 %v468, %v510
      %v533 = vadd.f32 %v469, %v510
      %v534 = vadd.f32 %v470, %v515
      %v535 = vadd.f32 %v471, %v515
      %v536 = vadd.f32 %v472, %v520
      %v537 = vadd.f32 %v473, %v520
      %v538 = vmax.f32 %v522, 0.0
      %v539 = vmax.f32 %v523, 0.0
      %v540 = vmax.f32 %v524, 0.0
      %v541 = vmax.f32 %v525, 0.0
      %v542 = vmax.f32 %v526, 0.0
      %v543 = vmax.f32 %v527, 0.0
      %v544 = vmax.f32 %v528, 0.0
      %v545 = vmax.f32 %v529, 0.0
      %v546 = vmax.f32 %v530, 0.0
      %v547 = vmax.f32 %v531, 0.0
      %v548 = vmax.f32 %v532, 0.0
      %v549 = vmax.f32 %v533, 0.0
      %v550 = vmax.f32 %v534, 0.0
      %v551 = vmax.f32 %v535, 0.0
      %v552 = vmax.f32 %v536, 0.0
      %v553 = vmax.f32 %v537, 0.0
      %v554 = vld [vmem:[%s3] sm:$0xf]
      %v555 = vld [vmem:[%s3 + $0x4] sm:$0xf]
      %v556 = vld [vmem:[%s3 + $0x8] sm:$0xf]
      %v557 = vld [vmem:[%s3 + $0xc] sm:$0xf]
      %v558 = vld [vmem:[%s3 + $0x10] sm:$0xf]
      %v559 = vld [vmem:[%s3 + $0x14] sm:$0xf]
      %v560 = vld [vmem:[%s3 + $0x18] sm:$0xf]
      %v561 = vld [vmem:[%s3 + $0x1c] sm:$0xf]
      %v562 = vld [vmem:[%s3 + $0x20] sm:$0xf]
      %v563 = vld [vmem:[%s3 + $0x24] sm:$0xf]
      %v564 = vld [vmem:[%s3 + $0x28] sm:$0xf]
      %v565 = vld [vmem:[%s3 + $0x2c] sm:$0xf]
      %v566 = vld [vmem:[%s3 + $0x30] sm:$0xf]
      %v567 = vld [vmem:[%s3 + $0x34] sm:$0xf]
      %v568 = vld [vmem:[%s3 + $0x38] sm:$0xf]
      %v569 = vld [vmem:[%s3 + $0x3c] sm:$0xf]
      %v570 = vpack.c.bf16 %v540, %v538
      %v571 = vpack.c.bf16 %v541, %v539
      %v572 = vpack.c.bf16 %v544, %v542
      %v573 = vpack.c.bf16 %v545, %v543
      %v574 = vpack.c.bf16 %v548, %v546
      %v575 = vpack.c.bf16 %v549, %v547
      %v576 = vpack.c.bf16 %v552, %v550
      %v577 = vpack.c.bf16 %v553, %v551
      %v578 = vld [vmem:[%s4] sm:$0xff]
      %v579 = vld [vmem:[%s4 + $0x8] sm:$0xff]
      %v580 = vld [vmem:[%s4 + $0x10] sm:$0xff]
      %v581 = vld [vmem:[%s4 + $0x18] sm:$0xff]
      %v582 = vld [vmem:[%s4 + $0x20] sm:$0xff]
      %v583 = vld [vmem:[%s4 + $0x28] sm:$0xff]
      %v584 = vld [vmem:[%s4 + $0x30] sm:$0xff]
      %v585 = vld [vmem:[%s4 + $0x38] sm:$0xff]
      %v586 = vld [vmem:[%s4 + $0x40] sm:$0xff]
      %v587 = vld [vmem:[%s4 + $0x48] sm:$0xff]
      %v588 = vld [vmem:[%s4 + $0x50] sm:$0xff]
      %v589 = vld [vmem:[%s4 + $0x58] sm:$0xff]
      %v590 = vld [vmem:[%s4 + $0x60] sm:$0xff]
      %v591 = vld [vmem:[%s4 + $0x68] sm:$0xff]
      %v592 = vld [vmem:[%s4 + $0x70] sm:$0xff]
      %v593 = vld [vmem:[%s4 + $0x78] sm:$0xff]
      %595 = vset.pattern.permute.xlu0 0
      %596 = vperm.xlu0 %595, %v578
      %v597 = vpop.permute.xlu0 %596
      %600 = vset.pattern.permute.xlu0 0
      %601 = vperm.xlu0 %600, %v579
      %v602 = vpop.permute.xlu0 %601
      %605 = vset.pattern.permute.xlu0 0
      %606 = vperm.xlu0 %605, %v580
      %v607 = vpop.permute.xlu0 %606
      %610 = vset.pattern.permute.xlu0 0
      %611 = vperm.xlu0 %610, %v581
      %v612 = vpop.permute.xlu0 %611
      %615 = vset.pattern.permute.xlu0 0
      %616 = vperm.xlu0 %615, %v582
      %v617 = vpop.permute.xlu0 %616
      %620 = vset.pattern.permute.xlu0 0
      %621 = vperm.xlu0 %620, %v583
      %v622 = vpop.permute.xlu0 %621
      %625 = vset.pattern.permute.xlu0 0
      %626 = vperm.xlu0 %625, %v584
      %v627 = vpop.permute.xlu0 %626
      %630 = vset.pattern.permute.xlu0 0
      %631 = vperm.xlu0 %630, %v585
      %v632 = vpop.permute.xlu0 %631
      %635 = vset.pattern.permute.xlu0 0
      %636 = vperm.xlu0 %635, %v586
      %v637 = vpop.permute.xlu0 %636
      %640 = vset.pattern.permute.xlu0 0
      %641 = vperm.xlu0 %640, %v587
      %v642 = vpop.permute.xlu0 %641
      %645 = vset.pattern.permute.xlu0 0
      %646 = vperm.xlu0 %645, %v588
      %v647 = vpop.permute.xlu0 %646
      %650 = vset.pattern.permute.xlu0 0
      %651 = vperm.xlu0 %650, %v589
      %v652 = vpop.permute.xlu0 %651
      %655 = vset.pattern.permute.xlu0 0
      %656 = vperm.xlu0 %655, %v590
      %v657 = vpop.permute.xlu0 %656
      %660 = vset.pattern.permute.xlu0 0
      %661 = vperm.xlu0 %660, %v591
      %v662 = vpop.permute.xlu0 %661
      %665 = vset.pattern.permute.xlu0 0
      %666 = vperm.xlu0 %665, %v592
      %v667 = vpop.permute.xlu0 %666
      %670 = vset.pattern.permute.xlu0 0
      %671 = vperm.xlu0 %670, %v593
      %v672 = vpop.permute.xlu0 %671
      %v690 = vunpack.c.l.b16 %v554
      %v691 = vunpack.c.l.b16 %v555
      %v692 = vunpack.c.l.b16 %v556
      %v693 = vunpack.c.l.b16 %v557
      %v694 = vunpack.c.l.b16 %v558
      %v695 = vunpack.c.l.b16 %v559
      %v696 = vunpack.c.l.b16 %v560
      %v697 = vunpack.c.l.b16 %v561
      %v698 = vunpack.c.l.b16 %v562
      %v699 = vunpack.c.l.b16 %v563
      %v700 = vunpack.c.l.b16 %v564
      %v701 = vunpack.c.l.b16 %v565
      %v702 = vunpack.c.l.b16 %v566
      %v703 = vunpack.c.l.b16 %v567
      %v704 = vunpack.c.l.b16 %v568
      %v705 = vunpack.c.l.b16 %v569
      %v706 = vpack.c.b16 %v691, %v690
      %v707 = vpack.c.b16 %v693, %v692
      %v708 = vpack.c.b16 %v695, %v694
      %v709 = vpack.c.b16 %v697, %v696
      %v710 = vpack.c.b16 %v699, %v698
      %v711 = vpack.c.b16 %v701, %v700
      %v712 = vpack.c.b16 %v703, %v702
      %v713 = vpack.c.b16 %v705, %v704
      %vm714 = vcmask 523264
      %v716 = vsel %vm714, %v706, 0
      %v719 = vsel %vm714, %v707, 0
      %v722 = vsel %vm714, %v708, 0
      %v725 = vsel %vm714, %v709, 0
      %v728 = vsel %vm714, %v710, 0
      %v731 = vsel %vm714, %v711, 0
      %v734 = vsel %vm714, %v712, 0
      %v737 = vsel %vm714, %v713, 0
      %739 = vmatprep.subr.bf16.mxu0 %v571
      %740 = vmatpush1.bf16.msra.mxu0 %v570
      %741 = vmatprep.subr.bf16.mxu0 %v573
      %742 = vmatpush1.bf16.msra.mxu0 %v572
      %743 = vmatprep.subr.bf16.mxu0 %v575
      %744 = vmatpush1.bf16.msra.mxu0 %v574
      %745 = vmatprep.subr.bf16.mxu0 %v577
      %746 = vmatpush1.bf16.msra.mxu0 %v576
      %747 = vmatprep.subr.bf16.mxu0 0
      %748 = vmatpush1.bf16.msra.mxu0 0
      %749 = vmatprep.subr.bf16.mxu0 0
      %750 = vmatpush1.bf16.msra.mxu0 0
      %751 = vmatprep.subr.bf16.mxu0 0
      %752 = vmatpush1.bf16.msra.mxu0 0
      %753 = vmatprep.subr.bf16.mxu0 0
      %754 = vmatpush1.bf16.msra.mxu0 0
      %755 = vmatprep.subr.bf16.mxu0 0
      %756 = vmatpush1.bf16.msra.mxu0 0
      %757 = vmatprep.subr.bf16.mxu0 0
      %758 = vmatpush1.bf16.msra.mxu0 0
      %759 = vmatprep.subr.bf16.mxu0 0
      %760 = vmatpush1.bf16.msra.mxu0 0
      %761 = vmatprep.subr.bf16.mxu0 0
      %762 = vmatpush1.bf16.msra.mxu0 0
      %763 = vmatprep.subr.bf16.mxu0 0
      %764 = vmatpush1.bf16.msra.mxu0 0
      %765 = vmatprep.subr.bf16.mxu0 0
      %766 = vmatpush1.bf16.msra.mxu0 0
      %767 = vmatprep.subr.bf16.mxu0 0
      %768 = vmatpush1.bf16.msra.mxu0 0
      %769 = vmatprep.subr.bf16.mxu0 0
      %770 = vmatpush1.bf16.msra.mxu0 0
      %771 = vmatprep.mubr.bf16.mxu0 0
      %772 = vmatmul.mubr.bf16.gmra.mrb[0].mxu0 %v716
      %v773 = vpop.f32.mrb[0].mxu0
      %v774 = vadd.f32 %v597, %v773
      %v775 = vpop.f32.mrb[0].mxu0
      %v776 = vadd.f32 %v597, %v775
      %v777 = vpop.f32.mrb[0].mxu0
      %v778 = vadd.f32 %v602, %v777
      %v779 = vpop.f32.mrb[0].mxu0
      %v780 = vadd.f32 %v602, %v779
      %781 = vmatprep.mubr.bf16.mxu0 0
      %782 = vmatmul.mubr.bf16.gmra.mrb[0].mxu0 %v719
      %v783 = vpop.f32.mrb[0].mxu0
      %v784 = vadd.f32 %v607, %v783
      %v785 = vpop.f32.mrb[0].mxu0
      %v786 = vadd.f32 %v607, %v785
      %v787 = vpop.f32.mrb[0].mxu0
      %v788 = vadd.f32 %v612, %v787
      %v789 = vpop.f32.mrb[0].mxu0
      %v790 = vadd.f32 %v612, %v789
      %791 = vmatprep.mubr.bf16.mxu0 0
      %792 = vmatmul.mubr.bf16.gmra.mrb[0].mxu0 %v722
      %v793 = vpop.f32.mrb[0].mxu0
      %v794 = vadd.f32 %v617, %v793
      %v795 = vpop.f32.mrb[0].mxu0
      %v796 = vadd.f32 %v617, %v795
      %v797 = vpop.f32.mrb[0].mxu0
      %v798 = vadd.f32 %v622, %v797
      %v799 = vpop.f32.mrb[0].mxu0
      %v800 = vadd.f32 %v622, %v799
      %801 = vmatprep.mubr.bf16.mxu0 0
      %802 = vmatmul.mubr.bf16.gmra.mrb[0].mxu0 %v725
      %v803 = vpop.f32.mrb[0].mxu0
      %v804 = vadd.f32 %v627, %v803
      %v805 = vpop.f32.mrb[0].mxu0
      %v806 = vadd.f32 %v627, %v805
      %v807 = vpop.f32.mrb[0].mxu0
      %v808 = vadd.f32 %v632, %v807
      %v809 = vpop.f32.mrb[0].mxu0
      %v810 = vadd.f32 %v632, %v809
      %811 = vmatprep.mubr.bf16.mxu0 0
      %812 = vmatmul.mubr.bf16.gmra.mrb[0].mxu0 %v728
      %v813 = vpop.f32.mrb[0].mxu0
      %v814 = vadd.f32 %v637, %v813
      %v815 = vpop.f32.mrb[0].mxu0
      %v816 = vadd.f32 %v637, %v815
      %v817 = vpop.f32.mrb[0].mxu0
      %v818 = vadd.f32 %v642, %v817
      %v819 = vpop.f32.mrb[0].mxu0
      %v820 = vadd.f32 %v642, %v819
      %821 = vmatprep.mubr.bf16.mxu0 0
      %822 = vmatmul.mubr.bf16.gmra.mrb[0].mxu0 %v731
      %v823 = vpop.f32.mrb[0].mxu0
      %v824 = vadd.f32 %v647, %v823
      %v825 = vpop.f32.mrb[0].mxu0
      %v826 = vadd.f32 %v647, %v825
      %v827 = vpop.f32.mrb[0].mxu0
      %v828 = vadd.f32 %v652, %v827
      %v829 = vpop.f32.mrb[0].mxu0
      %v830 = vadd.f32 %v652, %v829
      %831 = vmatprep.mubr.bf16.mxu0 0
      %832 = vmatmul.mubr.bf16.gmra.mrb[0].mxu0 %v734
      %v833 = vpop.f32.mrb[0].mxu0
      %v834 = vadd.f32 %v657, %v833
      %v835 = vpop.f32.mrb[0].mxu0
      %v836 = vadd.f32 %v657, %v835
      %v837 = vpop.f32.mrb[0].mxu0
      %v838 = vadd.f32 %v662, %v837
      %v839 = vpop.f32.mrb[0].mxu0
      %v840 = vadd.f32 %v662, %v839
      %841 = vmatprep.mubr.bf16.mxu0 0
      %842 = vmatmul.mubr.bf16.gmra.mrb[0].mxu0 %v737
      %v843 = vpop.f32.mrb[0].mxu0
      %v844 = vadd.f32 %v667, %v843
      %v845 = vpop.f32.mrb[0].mxu0
      %v846 = vadd.f32 %v667, %v845
      %v847 = vpop.f32.mrb[0].mxu0
      %v848 = vadd.f32 %v672, %v847
      %v849 = vpop.f32.mrb[0].mxu0
      %v850 = vadd.f32 %v672, %v849
      %851 = vdwg.mxu0
      %v852 = vmax.f32 %v774, 0.0
      %v853 = vmax.f32 %v776, 0.0
      %v854 = vmax.f32 %v778, 0.0
      %v855 = vmax.f32 %v780, 0.0
      %v856 = vmax.f32 %v784, 0.0
      %v857 = vmax.f32 %v786, 0.0
      %v858 = vmax.f32 %v788, 0.0
      %v859 = vmax.f32 %v790, 0.0
      %v860 = vmax.f32 %v794, 0.0
      %v861 = vmax.f32 %v796, 0.0
      %v862 = vmax.f32 %v798, 0.0
      %v863 = vmax.f32 %v800, 0.0
      %v864 = vmax.f32 %v804, 0.0
      %v865 = vmax.f32 %v806, 0.0
      %v866 = vmax.f32 %v808, 0.0
      %v867 = vmax.f32 %v810, 0.0
      %v868 = vmax.f32 %v814, 0.0
      %v869 = vmax.f32 %v816, 0.0
      %v870 = vmax.f32 %v818, 0.0
      %v871 = vmax.f32 %v820, 0.0
      %v872 = vmax.f32 %v824, 0.0
      %v873 = vmax.f32 %v826, 0.0
      %v874 = vmax.f32 %v828, 0.0
      %v875 = vmax.f32 %v830, 0.0
      %v876 = vmax.f32 %v834, 0.0
      %v877 = vmax.f32 %v836, 0.0
      %v878 = vmax.f32 %v838, 0.0
      %v879 = vmax.f32 %v840, 0.0
      %v880 = vmax.f32 %v844, 0.0
      %v881 = vmax.f32 %v846, 0.0
      %v882 = vmax.f32 %v848, 0.0
      %v883 = vmax.f32 %v850, 0.0
      %v884 = vld [vmem:[%s5] sm:$0xf]
      %v885 = vld [vmem:[%s5 + $0x4] sm:$0xf]
      %v886 = vld [vmem:[%s5 + $0x8] sm:$0xf]
      %v887 = vld [vmem:[%s5 + $0xc] sm:$0xf]
      %v888 = vld [vmem:[%s5 + $0x10] sm:$0xf]
      %v889 = vld [vmem:[%s5 + $0x14] sm:$0xf]
      %v890 = vld [vmem:[%s5 + $0x18] sm:$0xf]
      %v891 = vld [vmem:[%s5 + $0x1c] sm:$0xf]
      %v892 = vld [vmem:[%s5 + $0x20] sm:$0xf]
      %v893 = vld [vmem:[%s5 + $0x24] sm:$0xf]
      %v894 = vld [vmem:[%s5 + $0x28] sm:$0xf]
      %v895 = vld [vmem:[%s5 + $0x2c] sm:$0xf]
      %v896 = vld [vmem:[%s5 + $0x30] sm:$0xf]
      %v897 = vld [vmem:[%s5 + $0x34] sm:$0xf]
      %v898 = vld [vmem:[%s5 + $0x38] sm:$0xf]
      %v899 = vld [vmem:[%s5 + $0x3c] sm:$0xf]
      %v900 = vld [vmem:[%s5 + $0x40] sm:$0xf]
      %v901 = vld [vmem:[%s5 + $0x44] sm:$0xf]
      %v902 = vld [vmem:[%s5 + $0x48] sm:$0xf]
      %v903 = vld [vmem:[%s5 + $0x4c] sm:$0xf]
      %v904 = vld [vmem:[%s5 + $0x50] sm:$0xf]
      %v905 = vld [vmem:[%s5 + $0x54] sm:$0xf]
      %v906 = vld [vmem:[%s5 + $0x58] sm:$0xf]
      %v907 = vld [vmem:[%s5 + $0x5c] sm:$0xf]
      %v908 = vld [vmem:[%s5 + $0x60] sm:$0xf]
      %v909 = vld [vmem:[%s5 + $0x64] sm:$0xf]
      %v910 = vld [vmem:[%s5 + $0x68] sm:$0xf]
      %v911 = vld [vmem:[%s5 + $0x6c] sm:$0xf]
      %v912 = vld [vmem:[%s5 + $0x70] sm:$0xf]
      %v913 = vld [vmem:[%s5 + $0x74] sm:$0xf]
      %v914 = vld [vmem:[%s5 + $0x78] sm:$0xf]
      %v915 = vld [vmem:[%s5 + $0x7c] sm:$0xf]
      %v916 = vld [vmem:[%s5 + $0x80] sm:$0xf]
      %v917 = vld [vmem:[%s5 + $0x84] sm:$0xf]
      %v918 = vld [vmem:[%s5 + $0x88] sm:$0xf]
      %v919 = vld [vmem:[%s5 + $0x8c] sm:$0xf]
      %v920 = vld [vmem:[%s5 + $0x90] sm:$0xf]
      %v921 = vld [vmem:[%s5 + $0x94] sm:$0xf]
      %v922 = vld [vmem:[%s5 + $0x98] sm:$0xf]
      %v923 = vld [vmem:[%s5 + $0x9c] sm:$0xf]
      %v924 = vld [vmem:[%s5 + $0xa0] sm:$0xf]
      %v925 = vld [vmem:[%s5 + $0xa4] sm:$0xf]
      %v926 = vld [vmem:[%s5 + $0xa8] sm:$0xf]
      %v927 = vld [vmem:[%s5 + $0xac] sm:$0xf]
      %v928 = vld [vmem:[%s5 + $0xb0] sm:$0xf]
      %v929 = vld [vmem:[%s5 + $0xb4] sm:$0xf]
      %v930 = vld [vmem:[%s5 + $0xb8] sm:$0xf]
      %v931 = vld [vmem:[%s5 + $0xbc] sm:$0xf]
      %v932 = vld [vmem:[%s5 + $0xc0] sm:$0xf]
      %v933 = vld [vmem:[%s5 + $0xc4] sm:$0xf]
      %v934 = vld [vmem:[%s5 + $0xc8] sm:$0xf]
      %v935 = vld [vmem:[%s5 + $0xcc] sm:$0xf]
      %v936 = vld [vmem:[%s5 + $0xd0] sm:$0xf]
      %v937 = vld [vmem:[%s5 + $0xd4] sm:$0xf]
      %v938 = vld [vmem:[%s5 + $0xd8] sm:$0xf]
      %v939 = vld [vmem:[%s5 + $0xdc] sm:$0xf]
      %v940 = vld [vmem:[%s5 + $0xe0] sm:$0xf]
      %v941 = vld [vmem:[%s5 + $0xe4] sm:$0xf]
      %v942 = vld [vmem:[%s5 + $0xe8] sm:$0xf]
      %v943 = vld [vmem:[%s5 + $0xec] sm:$0xf]
      %v944 = vld [vmem:[%s5 + $0xf0] sm:$0xf]
      %v945 = vld [vmem:[%s5 + $0xf4] sm:$0xf]
      %v946 = vld [vmem:[%s5 + $0xf8] sm:$0xf]
      %v947 = vld [vmem:[%s5 + $0xfc] sm:$0xf]
      %v948 = vld [vmem:[%s5 + $0x100] sm:$0xf]
      %v949 = vld [vmem:[%s5 + $0x104] sm:$0xf]
      %v950 = vld [vmem:[%s5 + $0x108] sm:$0xf]
      %v951 = vld [vmem:[%s5 + $0x10c] sm:$0xf]
      %v952 = vld [vmem:[%s5 + $0x110] sm:$0xf]
      %v953 = vld [vmem:[%s5 + $0x114] sm:$0xf]
      %v954 = vld [vmem:[%s5 + $0x118] sm:$0xf]
      %v955 = vld [vmem:[%s5 + $0x11c] sm:$0xf]
      %v956 = vld [vmem:[%s5 + $0x120] sm:$0xf]
      %v957 = vld [vmem:[%s5 + $0x124] sm:$0xf]
      %v958 = vld [vmem:[%s5 + $0x128] sm:$0xf]
      %v959 = vld [vmem:[%s5 + $0x12c] sm:$0xf]
      %v960 = vld [vmem:[%s5 + $0x130] sm:$0xf]
      %v961 = vld [vmem:[%s5 + $0x134] sm:$0xf]
      %v962 = vld [vmem:[%s5 + $0x138] sm:$0xf]
      %v963 = vld [vmem:[%s5 + $0x13c] sm:$0xf]
      %v964 = vld [vmem:[%s5 + $0x140] sm:$0xf]
      %v965 = vld [vmem:[%s5 + $0x144] sm:$0xf]
      %v966 = vld [vmem:[%s5 + $0x148] sm:$0xf]
      %v967 = vld [vmem:[%s5 + $0x14c] sm:$0xf]
      %v968 = vld [vmem:[%s5 + $0x150] sm:$0xf]
      %v969 = vld [vmem:[%s5 + $0x154] sm:$0xf]
      %v970 = vld [vmem:[%s5 + $0x158] sm:$0xf]
      %v971 = vld [vmem:[%s5 + $0x15c] sm:$0xf]
      %v972 = vld [vmem:[%s5 + $0x160] sm:$0xf]
      %v973 = vld [vmem:[%s5 + $0x164] sm:$0xf]
      %v974 = vld [vmem:[%s5 + $0x168] sm:$0xf]
      %v975 = vld [vmem:[%s5 + $0x16c] sm:$0xf]
      %v976 = vld [vmem:[%s5 + $0x170] sm:$0xf]
      %v977 = vld [vmem:[%s5 + $0x174] sm:$0xf]
      %v978 = vld [vmem:[%s5 + $0x178] sm:$0xf]
      %v979 = vld [vmem:[%s5 + $0x17c] sm:$0xf]
      %v980 = vld [vmem:[%s5 + $0x180] sm:$0xf]
      %v981 = vld [vmem:[%s5 + $0x184] sm:$0xf]
      %v982 = vld [vmem:[%s5 + $0x188] sm:$0xf]
      %v983 = vld [vmem:[%s5 + $0x18c] sm:$0xf]
      %v984 = vld [vmem:[%s5 + $0x190] sm:$0xf]
      %v985 = vld [vmem:[%s5 + $0x194] sm:$0xf]
      %v986 = vld [vmem:[%s5 + $0x198] sm:$0xf]
      %v987 = vld [vmem:[%s5 + $0x19c] sm:$0xf]
      %v988 = vld [vmem:[%s5 + $0x1a0] sm:$0xf]
      %v989 = vld [vmem:[%s5 + $0x1a4] sm:$0xf]
      %v990 = vld [vmem:[%s5 + $0x1a8] sm:$0xf]
      %v991 = vld [vmem:[%s5 + $0x1ac] sm:$0xf]
      %v992 = vld [vmem:[%s5 + $0x1b0] sm:$0xf]
      %v993 = vld [vmem:[%s5 + $0x1b4] sm:$0xf]
      %v994 = vld [vmem:[%s5 + $0x1b8] sm:$0xf]
      %v995 = vld [vmem:[%s5 + $0x1bc] sm:$0xf]
      %v996 = vld [vmem:[%s5 + $0x1c0] sm:$0xf]
      %v997 = vld [vmem:[%s5 + $0x1c4] sm:$0xf]
      %v998 = vld [vmem:[%s5 + $0x1c8] sm:$0xf]
      %v999 = vld [vmem:[%s5 + $0x1cc] sm:$0xf]
      %v1000 = vld [vmem:[%s5 + $0x1d0] sm:$0xf]
      %v1001 = vld [vmem:[%s5 + $0x1d4] sm:$0xf]
      %v1002 = vld [vmem:[%s5 + $0x1d8] sm:$0xf]
      %v1003 = vld [vmem:[%s5 + $0x1dc] sm:$0xf]
      %v1004 = vld [vmem:[%s5 + $0x1e0] sm:$0xf]
      %v1005 = vld [vmem:[%s5 + $0x1e4] sm:$0xf]
      %v1006 = vld [vmem:[%s5 + $0x1e8] sm:$0xf]
      %v1007 = vld [vmem:[%s5 + $0x1ec] sm:$0xf]
      %v1008 = vld [vmem:[%s5 + $0x1f0] sm:$0xf]
      %v1009 = vld [vmem:[%s5 + $0x1f4] sm:$0xf]
      %v1010 = vld [vmem:[%s5 + $0x1f8] sm:$0xf]
      %v1011 = vld [vmem:[%s5 + $0x1fc] sm:$0xf]
      %v1012 = vpack.c.bf16 %v854, %v852
      %v1013 = vpack.c.bf16 %v855, %v853
      %v1014 = vpack.c.bf16 %v858, %v856
      %v1015 = vpack.c.bf16 %v859, %v857
      %v1016 = vpack.c.bf16 %v862, %v860
      %v1017 = vpack.c.bf16 %v863, %v861
      %v1018 = vpack.c.bf16 %v866, %v864
      %v1019 = vpack.c.bf16 %v867, %v865
      %v1020 = vpack.c.bf16 %v870, %v868
      %v1021 = vpack.c.bf16 %v871, %v869
      %v1022 = vpack.c.bf16 %v874, %v872
      %v1023 = vpack.c.bf16 %v875, %v873
      %v1024 = vpack.c.bf16 %v878, %v876
      %v1025 = vpack.c.bf16 %v879, %v877
      %v1026 = vpack.c.bf16 %v882, %v880
      %v1027 = vpack.c.bf16 %v883, %v881
      %v1028 = vld [vmem:[%s6] sm:$0xff]
      %v1029 = vld [vmem:[%s6 + $0x8] sm:$0xff]
      %v1030 = vld [vmem:[%s6 + $0x10] sm:$0xff]
      %v1031 = vld [vmem:[%s6 + $0x18] sm:$0xff]
      %v1032 = vld [vmem:[%s6 + $0x20] sm:$0xff]
      %v1033 = vld [vmem:[%s6 + $0x28] sm:$0xff]
      %v1034 = vld [vmem:[%s6 + $0x30] sm:$0xff]
      %v1035 = vld [vmem:[%s6 + $0x38] sm:$0xff]
      %v1036 = vld [vmem:[%s6 + $0x40] sm:$0xff]
      %v1037 = vld [vmem:[%s6 + $0x48] sm:$0xff]
      %v1038 = vld [vmem:[%s6 + $0x50] sm:$0xff]
      %v1039 = vld [vmem:[%s6 + $0x58] sm:$0xff]
      %v1040 = vld [vmem:[%s6 + $0x60] sm:$0xff]
      %v1041 = vld [vmem:[%s6 + $0x68] sm:$0xff]
      %v1042 = vld [vmem:[%s6 + $0x70] sm:$0xff]
      %v1043 = vld [vmem:[%s6 + $0x78] sm:$0xff]
      %v1044 = vld [vmem:[%s6 + $0x80] sm:$0xff]
      %v1045 = vld [vmem:[%s6 + $0x88] sm:$0xff]
      %v1046 = vld [vmem:[%s6 + $0x90] sm:$0xff]
      %v1047 = vld [vmem:[%s6 + $0x98] sm:$0xff]
      %v1048 = vld [vmem:[%s6 + $0xa0] sm:$0xff]
      %v1049 = vld [vmem:[%s6 + $0xa8] sm:$0xff]
      %v1050 = vld [vmem:[%s6 + $0xb0] sm:$0xff]
      %v1051 = vld [vmem:[%s6 + $0xb8] sm:$0xff]
      %v1052 = vld [vmem:[%s6 + $0xc0] sm:$0xff]
      %v1053 = vld [vmem:[%s6 + $0xc8] sm:$0xff]
      %v1054 = vld [vmem:[%s6 + $0xd0] sm:$0xff]
      %v1055 = vld [vmem:[%s6 + $0xd8] sm:$0xff]
      %v1056 = vld [vmem:[%s6 + $0xe0] sm:$0xff]
      %v1057 = vld [vmem:[%s6 + $0xe8] sm:$0xff]
      %v1058 = vld [vmem:[%s6 + $0xf0] sm:$0xff]
      %v1059 = vld [vmem:[%s6 + $0xf8] sm:$0xff]
      %v1060 = vld [vmem:[%s6 + $0x100] sm:$0xff]
      %v1061 = vld [vmem:[%s6 + $0x108] sm:$0xff]
      %v1062 = vld [vmem:[%s6 + $0x110] sm:$0xff]
      %v1063 = vld [vmem:[%s6 + $0x118] sm:$0xff]
      %v1064 = vld [vmem:[%s6 + $0x120] sm:$0xff]
      %v1065 = vld [vmem:[%s6 + $0x128] sm:$0xff]
      %v1066 = vld [vmem:[%s6 + $0x130] sm:$0xff]
      %v1067 = vld [vmem:[%s6 + $0x138] sm:$0xff]
      %v1068 = vld [vmem:[%s6 + $0x140] sm:$0xff]
      %v1069 = vld [vmem:[%s6 + $0x148] sm:$0xff]
      %v1070 = vld [vmem:[%s6 + $0x150] sm:$0xff]
      %v1071 = vld [vmem:[%s6 + $0x158] sm:$0xff]
      %v1072 = vld [vmem:[%s6 + $0x160] sm:$0xff]
      %v1073 = vld [vmem:[%s6 + $0x168] sm:$0xff]
      %v1074 = vld [vmem:[%s6 + $0x170] sm:$0xff]
      %v1075 = vld [vmem:[%s6 + $0x178] sm:$0xff]
      %v1076 = vld [vmem:[%s6 + $0x180] sm:$0xff]
      %v1077 = vld [vmem:[%s6 + $0x188] sm:$0xff]
      %v1078 = vld [vmem:[%s6 + $0x190] sm:$0xff]
      %v1079 = vld [vmem:[%s6 + $0x198] sm:$0xff]
      %v1080 = vld [vmem:[%s6 + $0x1a0] sm:$0xff]
      %v1081 = vld [vmem:[%s6 + $0x1a8] sm:$0xff]
      %v1082 = vld [vmem:[%s6 + $0x1b0] sm:$0xff]
      %v1083 = vld [vmem:[%s6 + $0x1b8] sm:$0xff]
      %v1084 = vld [vmem:[%s6 + $0x1c0] sm:$0xff]
      %v1085 = vld [vmem:[%s6 + $0x1c8] sm:$0xff]
      %v1086 = vld [vmem:[%s6 + $0x1d0] sm:$0xff]
      %v1087 = vld [vmem:[%s6 + $0x1d8] sm:$0xff]
      %v1088 = vld [vmem:[%s6 + $0x1e0] sm:$0xff]
      %v1089 = vld [vmem:[%s6 + $0x1e8] sm:$0xff]
      %v1090 = vld [vmem:[%s6 + $0x1f0] sm:$0xff]
      %v1091 = vld [vmem:[%s6 + $0x1f8] sm:$0xff]
      %v1092 = vld [vmem:[%s6 + $0x200] sm:$0xff]
      %v1093 = vld [vmem:[%s6 + $0x208] sm:$0xff]
      %v1094 = vld [vmem:[%s6 + $0x210] sm:$0xff]
      %v1095 = vld [vmem:[%s6 + $0x218] sm:$0xff]
      %v1096 = vld [vmem:[%s6 + $0x220] sm:$0xff]
      %v1097 = vld [vmem:[%s6 + $0x228] sm:$0xff]
      %v1098 = vld [vmem:[%s6 + $0x230] sm:$0xff]
      %v1099 = vld [vmem:[%s6 + $0x238] sm:$0xff]
      %v1100 = vld [vmem:[%s6 + $0x240] sm:$0xff]
      %v1101 = vld [vmem:[%s6 + $0x248] sm:$0xff]
      %v1102 = vld [vmem:[%s6 + $0x250] sm:$0xff]
      %v1103 = vld [vmem:[%s6 + $0x258] sm:$0xff]
      %v1104 = vld [vmem:[%s6 + $0x260] sm:$0xff]
      %v1105 = vld [vmem:[%s6 + $0x268] sm:$0xff]
      %v1106 = vld [vmem:[%s6 + $0x270] sm:$0xff]
      %v1107 = vld [vmem:[%s6 + $0x278] sm:$0xff]
      %v1108 = vld [vmem:[%s6 + $0x280] sm:$0xff]
      %v1109 = vld [vmem:[%s6 + $0x288] sm:$0xff]
      %v1110 = vld [vmem:[%s6 + $0x290] sm:$0xff]
      %v1111 = vld [vmem:[%s6 + $0x298] sm:$0xff]
      %v1112 = vld [vmem:[%s6 + $0x2a0] sm:$0xff]
      %v1113 = vld [vmem:[%s6 + $0x2a8] sm:$0xff]
      %v1114 = vld [vmem:[%s6 + $0x2b0] sm:$0xff]
      %v1115 = vld [vmem:[%s6 + $0x2b8] sm:$0xff]
      %v1116 = vld [vmem:[%s6 + $0x2c0] sm:$0xff]
      %v1117 = vld [vmem:[%s6 + $0x2c8] sm:$0xff]
      %v1118 = vld [vmem:[%s6 + $0x2d0] sm:$0xff]
      %v1119 = vld [vmem:[%s6 + $0x2d8] sm:$0xff]
      %v1120 = vld [vmem:[%s6 + $0x2e0] sm:$0xff]
      %v1121 = vld [vmem:[%s6 + $0x2e8] sm:$0xff]
      %v1122 = vld [vmem:[%s6 + $0x2f0] sm:$0xff]
      %v1123 = vld [vmem:[%s6 + $0x2f8] sm:$0xff]
      %v1124 = vld [vmem:[%s6 + $0x300] sm:$0xff]
      %v1125 = vld [vmem:[%s6 + $0x308] sm:$0xff]
      %v1126 = vld [vmem:[%s6 + $0x310] sm:$0xff]
      %v1127 = vld [vmem:[%s6 + $0x318] sm:$0xff]
      %v1128 = vld [vmem:[%s6 + $0x320] sm:$0xff]
      %v1129 = vld [vmem:[%s6 + $0x328] sm:$0xff]
      %v1130 = vld [vmem:[%s6 + $0x330] sm:$0xff]
      %v1131 = vld [vmem:[%s6 + $0x338] sm:$0xff]
      %v1132 = vld [vmem:[%s6 + $0x340] sm:$0xff]
      %v1133 = vld [vmem:[%s6 + $0x348] sm:$0xff]
      %v1134 = vld [vmem:[%s6 + $0x350] sm:$0xff]
      %v1135 = vld [vmem:[%s6 + $0x358] sm:$0xff]
      %v1136 = vld [vmem:[%s6 + $0x360] sm:$0xff]
      %v1137 = vld [vmem:[%s6 + $0x368] sm:$0xff]
      %v1138 = vld [vmem:[%s6 + $0x370] sm:$0xff]
      %v1139 = vld [vmem:[%s6 + $0x378] sm:$0xff]
      %v1140 = vld [vmem:[%s6 + $0x380] sm:$0xff]
      %v1141 = vld [vmem:[%s6 + $0x388] sm:$0xff]
      %v1142 = vld [vmem:[%s6 + $0x390] sm:$0xff]
      %v1143 = vld [vmem:[%s6 + $0x398] sm:$0xff]
      %v1144 = vld [vmem:[%s6 + $0x3a0] sm:$0xff]
      %v1145 = vld [vmem:[%s6 + $0x3a8] sm:$0xff]
      %v1146 = vld [vmem:[%s6 + $0x3b0] sm:$0xff]
      %v1147 = vld [vmem:[%s6 + $0x3b8] sm:$0xff]
      %v1148 = vld [vmem:[%s6 + $0x3c0] sm:$0xff]
      %v1149 = vld [vmem:[%s6 + $0x3c8] sm:$0xff]
      %v1150 = vld [vmem:[%s6 + $0x3d0] sm:$0xff]
      %v1151 = vld [vmem:[%s6 + $0x3d8] sm:$0xff]
      %v1152 = vld [vmem:[%s6 + $0x3e0] sm:$0xff]
      %v1153 = vld [vmem:[%s6 + $0x3e8] sm:$0xff]
      %v1154 = vld [vmem:[%s6 + $0x3f0] sm:$0xff]
      %v1155 = vld [vmem:[%s6 + $0x3f8] sm:$0xff]
      %1157 = vset.pattern.permute.xlu0 0
      %1158 = vperm.xlu0 %1157, %v1028
      %v1159 = vpop.permute.xlu0 %1158
      %1162 = vset.pattern.permute.xlu0 0
      %1163 = vperm.xlu0 %1162, %v1029
      %v1164 = vpop.permute.xlu0 %1163
      %1167 = vset.pattern.permute.xlu0 0
      %1168 = vperm.xlu0 %1167, %v1030
      %v1169 = vpop.permute.xlu0 %1168
      %1172 = vset.pattern.permute.xlu0 0
      %1173 = vperm.xlu0 %1172, %v1031
      %v1174 = vpop.permute.xlu0 %1173
      %1177 = vset.pattern.permute.xlu0 0
      %1178 = vperm.xlu0 %1177, %v1032
      %v1179 = vpop.permute.xlu0 %1178
      %1182 = vset.pattern.permute.xlu0 0
      %1183 = vperm.xlu0 %1182, %v1033
      %v1184 = vpop.permute.xlu0 %1183
      %1187 = vset.pattern.permute.xlu0 0
      %1188 = vperm.xlu0 %1187, %v1034
      %v1189 = vpop.permute.xlu0 %1188
      %1192 = vset.pattern.permute.xlu0 0
      %1193 = vperm.xlu0 %1192, %v1035
      %v1194 = vpop.permute.xlu0 %1193
      %1197 = vset.pattern.permute.xlu0 0
      %1198 = vperm.xlu0 %1197, %v1036
      %v1199 = vpop.permute.xlu0 %1198
      %1202 = vset.pattern.permute.xlu0 0
      %1203 = vperm.xlu0 %1202, %v1037
      %v1204 = vpop.permute.xlu0 %1203
      %1207 = vset.pattern.permute.xlu0 0
      %1208 = vperm.xlu0 %1207, %v1038
      %v1209 = vpop.permute.xlu0 %1208
      %1212 = vset.pattern.permute.xlu0 0
      %1213 = vperm.xlu0 %1212, %v1039
      %v1214 = vpop.permute.xlu0 %1213
      %1217 = vset.pattern.permute.xlu0 0
      %1218 = vperm.xlu0 %1217, %v1040
      %v1219 = vpop.permute.xlu0 %1218
      %1222 = vset.pattern.permute.xlu0 0
      %1223 = vperm.xlu0 %1222, %v1041
      %v1224 = vpop.permute.xlu0 %1223
      %1227 = vset.pattern.permute.xlu0 0
      %1228 = vperm.xlu0 %1227, %v1042
      %v1229 = vpop.permute.xlu0 %1228
      %1232 = vset.pattern.permute.xlu0 0
      %1233 = vperm.xlu0 %1232, %v1043
      %v1234 = vpop.permute.xlu0 %1233
      %1237 = vset.pattern.permute.xlu0 0
      %1238 = vperm.xlu0 %1237, %v1044
      %v1239 = vpop.permute.xlu0 %1238
      %1242 = vset.pattern.permute.xlu0 0
      %1243 = vperm.xlu0 %1242, %v1045
      %v1244 = vpop.permute.xlu0 %1243
      %1247 = vset.pattern.permute.xlu0 0
      %1248 = vperm.xlu0 %1247, %v1046
      %v1249 = vpop.permute.xlu0 %1248
      %1252 = vset.pattern.permute.xlu0 0
      %1253 = vperm.xlu0 %1252, %v1047
      %v1254 = vpop.permute.xlu0 %1253
      %1257 = vset.pattern.permute.xlu0 0
      %1258 = vperm.xlu0 %1257, %v1048
      %v1259 = vpop.permute.xlu0 %1258
      %1262 = vset.pattern.permute.xlu0 0
      %1263 = vperm.xlu0 %1262, %v1049
      %v1264 = vpop.permute.xlu0 %1263
      %1267 = vset.pattern.permute.xlu0 0
      %1268 = vperm.xlu0 %1267, %v1050
      %v1269 = vpop.permute.xlu0 %1268
      %1272 = vset.pattern.permute.xlu0 0
      %1273 = vperm.xlu0 %1272, %v1051
      %v1274 = vpop.permute.xlu0 %1273
      %1277 = vset.pattern.permute.xlu0 0
      %1278 = vperm.xlu0 %1277, %v1052
      %v1279 = vpop.permute.xlu0 %1278
      %1282 = vset.pattern.permute.xlu0 0
      %1283 = vperm.xlu0 %1282, %v1053
      %v1284 = vpop.permute.xlu0 %1283
      %1287 = vset.pattern.permute.xlu0 0
      %1288 = vperm.xlu0 %1287, %v1054
      %v1289 = vpop.permute.xlu0 %1288
      %1292 = vset.pattern.permute.xlu0 0
      %1293 = vperm.xlu0 %1292, %v1055
      %v1294 = vpop.permute.xlu0 %1293
      %1297 = vset.pattern.permute.xlu0 0
      %1298 = vperm.xlu0 %1297, %v1056
      %v1299 = vpop.permute.xlu0 %1298
      %1302 = vset.pattern.permute.xlu0 0
      %1303 = vperm.xlu0 %1302, %v1057
      %v1304 = vpop.permute.xlu0 %1303
      %1307 = vset.pattern.permute.xlu0 0
      %1308 = vperm.xlu0 %1307, %v1058
      %v1309 = vpop.permute.xlu0 %1308
      %1312 = vset.pattern.permute.xlu0 0
      %1313 = vperm.xlu0 %1312, %v1059
      %v1314 = vpop.permute.xlu0 %1313
      %1317 = vset.pattern.permute.xlu0 0
      %1318 = vperm.xlu0 %1317, %v1060
      %v1319 = vpop.permute.xlu0 %1318
      %1322 = vset.pattern.permute.xlu0 0
      %1323 = vperm.xlu0 %1322, %v1061
      %v1324 = vpop.permute.xlu0 %1323
      %1327 = vset.pattern.permute.xlu0 0
      %1328 = vperm.xlu0 %1327, %v1062
      %v1329 = vpop.permute.xlu0 %1328
      %1332 = vset.pattern.permute.xlu0 0
      %1333 = vperm.xlu0 %1332, %v1063
      %v1334 = vpop.permute.xlu0 %1333
      %1337 = vset.pattern.permute.xlu0 0
      %1338 = vperm.xlu0 %1337, %v1064
      %v1339 = vpop.permute.xlu0 %1338
      %1342 = vset.pattern.permute.xlu0 0
      %1343 = vperm.xlu0 %1342, %v1065
      %v1344 = vpop.permute.xlu0 %1343
      %1347 = vset.pattern.permute.xlu0 0
      %1348 = vperm.xlu0 %1347, %v1066
      %v1349 = vpop.permute.xlu0 %1348
      %1352 = vset.pattern.permute.xlu0 0
      %1353 = vperm.xlu0 %1352, %v1067
      %v1354 = vpop.permute.xlu0 %1353
      %1357 = vset.pattern.permute.xlu0 0
      %1358 = vperm.xlu0 %1357, %v1068
      %v1359 = vpop.permute.xlu0 %1358
      %1362 = vset.pattern.permute.xlu0 0
      %1363 = vperm.xlu0 %1362, %v1069
      %v1364 = vpop.permute.xlu0 %1363
      %1367 = vset.pattern.permute.xlu0 0
      %1368 = vperm.xlu0 %1367, %v1070
      %v1369 = vpop.permute.xlu0 %1368
      %1372 = vset.pattern.permute.xlu0 0
      %1373 = vperm.xlu0 %1372, %v1071
      %v1374 = vpop.permute.xlu0 %1373
      %1377 = vset.pattern.permute.xlu0 0
      %1378 = vperm.xlu0 %1377, %v1072
      %v1379 = vpop.permute.xlu0 %1378
      %1382 = vset.pattern.permute.xlu0 0
      %1383 = vperm.xlu0 %1382, %v1073
      %v1384 = vpop.permute.xlu0 %1383
      %1387 = vset.pattern.permute.xlu0 0
      %1388 = vperm.xlu0 %1387, %v1074
      %v1389 = vpop.permute.xlu0 %1388
      %1392 = vset.pattern.permute.xlu0 0
      %1393 = vperm.xlu0 %1392, %v1075
      %v1394 = vpop.permute.xlu0 %1393
      %1397 = vset.pattern.permute.xlu0 0
      %1398 = vperm.xlu0 %1397, %v1076
      %v1399 = vpop.permute.xlu0 %1398
      %1402 = vset.pattern.permute.xlu0 0
      %1403 = vperm.xlu0 %1402, %v1077
      %v1404 = vpop.permute.xlu0 %1403
      %1407 = vset.pattern.permute.xlu0 0
      %1408 = vperm.xlu0 %1407, %v1078
      %v1409 = vpop.permute.xlu0 %1408
      %1412 = vset.pattern.permute.xlu0 0
      %1413 = vperm.xlu0 %1412, %v1079
      %v1414 = vpop.permute.xlu0 %1413
      %1417 = vset.pattern.permute.xlu0 0
      %1418 = vperm.xlu0 %1417, %v1080
      %v1419 = vpop.permute.xlu0 %1418
      %1422 = vset.pattern.permute.xlu0 0
      %1423 = vperm.xlu0 %1422, %v1081
      %v1424 = vpop.permute.xlu0 %1423
      %1427 = vset.pattern.permute.xlu0 0
      %1428 = vperm.xlu0 %1427, %v1082
      %v1429 = vpop.permute.xlu0 %1428
      %1432 = vset.pattern.permute.xlu0 0
      %1433 = vperm.xlu0 %1432, %v1083
      %v1434 = vpop.permute.xlu0 %1433
      %1437 = vset.pattern.permute.xlu0 0
      %1438 = vperm.xlu0 %1437, %v1084
      %v1439 = vpop.permute.xlu0 %1438
      %1442 = vset.pattern.permute.xlu0 0
      %1443 = vperm.xlu0 %1442, %v1085
      %v1444 = vpop.permute.xlu0 %1443
      %1447 = vset.pattern.permute.xlu0 0
      %1448 = vperm.xlu0 %1447, %v1086
      %v1449 = vpop.permute.xlu0 %1448
      %1452 = vset.pattern.permute.xlu0 0
      %1453 = vperm.xlu0 %1452, %v1087
      %v1454 = vpop.permute.xlu0 %1453
      %1457 = vset.pattern.permute.xlu0 0
      %1458 = vperm.xlu0 %1457, %v1088
      %v1459 = vpop.permute.xlu0 %1458
      %1462 = vset.pattern.permute.xlu0 0
      %1463 = vperm.xlu0 %1462, %v1089
      %v1464 = vpop.permute.xlu0 %1463
      %1467 = vset.pattern.permute.xlu0 0
      %1468 = vperm.xlu0 %1467, %v1090
      %v1469 = vpop.permute.xlu0 %1468
      %1472 = vset.pattern.permute.xlu0 0
      %1473 = vperm.xlu0 %1472, %v1091
      %v1474 = vpop.permute.xlu0 %1473
      %1477 = vset.pattern.permute.xlu0 0
      %1478 = vperm.xlu0 %1477, %v1092
      %v1479 = vpop.permute.xlu0 %1478
      %1482 = vset.pattern.permute.xlu0 0
      %1483 = vperm.xlu0 %1482, %v1093
      %v1484 = vpop.permute.xlu0 %1483
      %1487 = vset.pattern.permute.xlu0 0
      %1488 = vperm.xlu0 %1487, %v1094
      %v1489 = vpop.permute.xlu0 %1488
      %1492 = vset.pattern.permute.xlu0 0
      %1493 = vperm.xlu0 %1492, %v1095
      %v1494 = vpop.permute.xlu0 %1493
      %1497 = vset.pattern.permute.xlu0 0
      %1498 = vperm.xlu0 %1497, %v1096
      %v1499 = vpop.permute.xlu0 %1498
      %1502 = vset.pattern.permute.xlu0 0
      %1503 = vperm.xlu0 %1502, %v1097
      %v1504 = vpop.permute.xlu0 %1503
      %1507 = vset.pattern.permute.xlu0 0
      %1508 = vperm.xlu0 %1507, %v1098
      %v1509 = vpop.permute.xlu0 %1508
      %1512 = vset.pattern.permute.xlu0 0
      %1513 = vperm.xlu0 %1512, %v1099
      %v1514 = vpop.permute.xlu0 %1513
      %1517 = vset.pattern.permute.xlu0 0
      %1518 = vperm.xlu0 %1517, %v1100
      %v1519 = vpop.permute.xlu0 %1518
      %1522 = vset.pattern.permute.xlu0 0
      %1523 = vperm.xlu0 %1522, %v1101
      %v1524 = vpop.permute.xlu0 %1523
      %1527 = vset.pattern.permute.xlu0 0
      %1528 = vperm.xlu0 %1527, %v1102
      %v1529 = vpop.permute.xlu0 %1528
      %1532 = vset.pattern.permute.xlu0 0
      %1533 = vperm.xlu0 %1532, %v1103
      %v1534 = vpop.permute.xlu0 %1533
      %1537 = vset.pattern.permute.xlu0 0
      %1538 = vperm.xlu0 %1537, %v1104
      %v1539 = vpop.permute.xlu0 %1538
      %1542 = vset.pattern.permute.xlu0 0
      %1543 = vperm.xlu0 %1542, %v1105
      %v1544 = vpop.permute.xlu0 %1543
      %1547 = vset.pattern.permute.xlu0 0
      %1548 = vperm.xlu0 %1547, %v1106
      %v1549 = vpop.permute.xlu0 %1548
      %1552 = vset.pattern.permute.xlu0 0
      %1553 = vperm.xlu0 %1552, %v1107
      %v1554 = vpop.permute.xlu0 %1553
      %1557 = vset.pattern.permute.xlu0 0
      %1558 = vperm.xlu0 %1557, %v1108
      %v1559 = vpop.permute.xlu0 %1558
      %1562 = vset.pattern.permute.xlu0 0
      %1563 = vperm.xlu0 %1562, %v1109
      %v1564 = vpop.permute.xlu0 %1563
      %1567 = vset.pattern.permute.xlu0 0
      %1568 = vperm.xlu0 %1567, %v1110
      %v1569 = vpop.permute.xlu0 %1568
      %1572 = vset.pattern.permute.xlu0 0
      %1573 = vperm.xlu0 %1572, %v1111
      %v1574 = vpop.permute.xlu0 %1573
      %1577 = vset.pattern.permute.xlu0 0
      %1578 = vperm.xlu0 %1577, %v1112
      %v1579 = vpop.permute.xlu0 %1578
      %1582 = vset.pattern.permute.xlu0 0
      %1583 = vperm.xlu0 %1582, %v1113
      %v1584 = vpop.permute.xlu0 %1583
      %1587 = vset.pattern.permute.xlu0 0
      %1588 = vperm.xlu0 %1587, %v1114
      %v1589 = vpop.permute.xlu0 %1588
      %1592 = vset.pattern.permute.xlu0 0
      %1593 = vperm.xlu0 %1592, %v1115
      %v1594 = vpop.permute.xlu0 %1593
      %1597 = vset.pattern.permute.xlu0 0
      %1598 = vperm.xlu0 %1597, %v1116
      %v1599 = vpop.permute.xlu0 %1598
      %1602 = vset.pattern.permute.xlu0 0
      %1603 = vperm.xlu0 %1602, %v1117
      %v1604 = vpop.permute.xlu0 %1603
      %1607 = vset.pattern.permute.xlu0 0
      %1608 = vperm.xlu0 %1607, %v1118
      %v1609 = vpop.permute.xlu0 %1608
      %1612 = vset.pattern.permute.xlu0 0
      %1613 = vperm.xlu0 %1612, %v1119
      %v1614 = vpop.permute.xlu0 %1613
      %1617 = vset.pattern.permute.xlu0 0
      %1618 = vperm.xlu0 %1617, %v1120
      %v1619 = vpop.permute.xlu0 %1618
      %1622 = vset.pattern.permute.xlu0 0
      %1623 = vperm.xlu0 %1622, %v1121
      %v1624 = vpop.permute.xlu0 %1623
      %1627 = vset.pattern.permute.xlu0 0
      %1628 = vperm.xlu0 %1627, %v1122
      %v1629 = vpop.permute.xlu0 %1628
      %1632 = vset.pattern.permute.xlu0 0
      %1633 = vperm.xlu0 %1632, %v1123
      %v1634 = vpop.permute.xlu0 %1633
      %1637 = vset.pattern.permute.xlu0 0
      %1638 = vperm.xlu0 %1637, %v1124
      %v1639 = vpop.permute.xlu0 %1638
      %1642 = vset.pattern.permute.xlu0 0
      %1643 = vperm.xlu0 %1642, %v1125
      %v1644 = vpop.permute.xlu0 %1643
      %1647 = vset.pattern.permute.xlu0 0
      %1648 = vperm.xlu0 %1647, %v1126
      %v1649 = vpop.permute.xlu0 %1648
      %1652 = vset.pattern.permute.xlu0 0
      %1653 = vperm.xlu0 %1652, %v1127
      %v1654 = vpop.permute.xlu0 %1653
      %1657 = vset.pattern.permute.xlu0 0
      %1658 = vperm.xlu0 %1657, %v1128
      %v1659 = vpop.permute.xlu0 %1658
      %1662 = vset.pattern.permute.xlu0 0
      %1663 = vperm.xlu0 %1662, %v1129
      %v1664 = vpop.permute.xlu0 %1663
      %1667 = vset.pattern.permute.xlu0 0
      %1668 = vperm.xlu0 %1667, %v1130
      %v1669 = vpop.permute.xlu0 %1668
      %1672 = vset.pattern.permute.xlu0 0
      %1673 = vperm.xlu0 %1672, %v1131
      %v1674 = vpop.permute.xlu0 %1673
      %1677 = vset.pattern.permute.xlu0 0
      %1678 = vperm.xlu0 %1677, %v1132
      %v1679 = vpop.permute.xlu0 %1678
      %1682 = vset.pattern.permute.xlu0 0
      %1683 = vperm.xlu0 %1682, %v1133
      %v1684 = vpop.permute.xlu0 %1683
      %1687 = vset.pattern.permute.xlu0 0
      %1688 = vperm.xlu0 %1687, %v1134
      %v1689 = vpop.permute.xlu0 %1688
      %1692 = vset.pattern.permute.xlu0 0
      %1693 = vperm.xlu0 %1692, %v1135
      %v1694 = vpop.permute.xlu0 %1693
      %1697 = vset.pattern.permute.xlu0 0
      %1698 = vperm.xlu0 %1697, %v1136
      %v1699 = vpop.permute.xlu0 %1698
      %1702 = vset.pattern.permute.xlu0 0
      %1703 = vperm.xlu0 %1702, %v1137
      %v1704 = vpop.permute.xlu0 %1703
      %1707 = vset.pattern.permute.xlu0 0
      %1708 = vperm.xlu0 %1707, %v1138
      %v1709 = vpop.permute.xlu0 %1708
      %1712 = vset.pattern.permute.xlu0 0
      %1713 = vperm.xlu0 %1712, %v1139
      %v1714 = vpop.permute.xlu0 %1713
      %1717 = vset.pattern.permute.xlu0 0
      %1718 = vperm.xlu0 %1717, %v1140
      %v1719 = vpop.permute.xlu0 %1718
      %1722 = vset.pattern.permute.xlu0 0
      %1723 = vperm.xlu0 %1722, %v1141
      %v1724 = vpop.permute.xlu0 %1723
      %1727 = vset.pattern.permute.xlu0 0
      %1728 = vperm.xlu0 %1727, %v1142
      %v1729 = vpop.permute.xlu0 %1728
      %1732 = vset.pattern.permute.xlu0 0
      %1733 = vperm.xlu0 %1732, %v1143
      %v1734 = vpop.permute.xlu0 %1733
      %1737 = vset.pattern.permute.xlu0 0
      %1738 = vperm.xlu0 %1737, %v1144
      %v1739 = vpop.permute.xlu0 %1738
      %1742 = vset.pattern.permute.xlu0 0
      %1743 = vperm.xlu0 %1742, %v1145
      %v1744 = vpop.permute.xlu0 %1743
      %1747 = vset.pattern.permute.xlu0 0
      %1748 = vperm.xlu0 %1747, %v1146
      %v1749 = vpop.permute.xlu0 %1748
      %1752 = vset.pattern.permute.xlu0 0
      %1753 = vperm.xlu0 %1752, %v1147
      %v1754 = vpop.permute.xlu0 %1753
      %1757 = vset.pattern.permute.xlu0 0
      %1758 = vperm.xlu0 %1757, %v1148
      %v1759 = vpop.permute.xlu0 %1758
      %1762 = vset.pattern.permute.xlu0 0
      %1763 = vperm.xlu0 %1762, %v1149
      %v1764 = vpop.permute.xlu0 %1763
      %1767 = vset.pattern.permute.xlu0 0
      %1768 = vperm.xlu0 %1767, %v1150
      %v1769 = vpop.permute.xlu0 %1768
      %1772 = vset.pattern.permute.xlu0 0
      %1773 = vperm.xlu0 %1772, %v1151
      %v1774 = vpop.permute.xlu0 %1773
      %1777 = vset.pattern.permute.xlu0 0
      %1778 = vperm.xlu0 %1777, %v1152
      %v1779 = vpop.permute.xlu0 %1778
      %1782 = vset.pattern.permute.xlu0 0
      %1783 = vperm.xlu0 %1782, %v1153
      %v1784 = vpop.permute.xlu0 %1783
      %1787 = vset.pattern.permute.xlu0 0
      %1788 = vperm.xlu0 %1787, %v1154
      %v1789 = vpop.permute.xlu0 %1788
      %1792 = vset.pattern.permute.xlu0 0
      %1793 = vperm.xlu0 %1792, %v1155
      %v1794 = vpop.permute.xlu0 %1793
      %v1924 = vunpack.c.l.b16 %v884
      %v1925 = vunpack.c.l.b16 %v885
      %v1926 = vunpack.c.l.b16 %v886
      %v1927 = vunpack.c.l.b16 %v887
      %v1928 = vunpack.c.l.b16 %v888
      %v1929 = vunpack.c.l.b16 %v889
      %v1930 = vunpack.c.l.b16 %v890
      %v1931 = vunpack.c.l.b16 %v891
      %v1932 = vunpack.c.l.b16 %v892
      %v1933 = vunpack.c.l.b16 %v893
      %v1934 = vunpack.c.l.b16 %v894
      %v1935 = vunpack.c.l.b16 %v895
      %v1936 = vunpack.c.l.b16 %v896
      %v1937 = vunpack.c.l.b16 %v897
      %v1938 = vunpack.c.l.b16 %v898
      %v1939 = vunpack.c.l.b16 %v899
      %v1940 = vunpack.c.l.b16 %v900
      %v1941 = vunpack.c.l.b16 %v901
      %v1942 = vunpack.c.l.b16 %v902
      %v1943 = vunpack.c.l.b16 %v903
      %v1944 = vunpack.c.l.b16 %v904
      %v1945 = vunpack.c.l.b16 %v905
      %v1946 = vunpack.c.l.b16 %v906
      %v1947 = vunpack.c.l.b16 %v907
      %v1948 = vunpack.c.l.b16 %v908
      %v1949 = vunpack.c.l.b16 %v909
      %v1950 = vunpack.c.l.b16 %v910
      %v1951 = vunpack.c.l.b16 %v911
      %v1952 = vunpack.c.l.b16 %v912
      %v1953 = vunpack.c.l.b16 %v913
      %v1954 = vunpack.c.l.b16 %v914
      %v1955 = vunpack.c.l.b16 %v915
      %v1956 = vunpack.c.l.b16 %v916
      %v1957 = vunpack.c.l.b16 %v917
      %v1958 = vunpack.c.l.b16 %v918
      %v1959 = vunpack.c.l.b16 %v919
      %v1960 = vunpack.c.l.b16 %v920
      %v1961 = vunpack.c.l.b16 %v921
      %v1962 = vunpack.c.l.b16 %v922
      %v1963 = vunpack.c.l.b16 %v923
      %v1964 = vunpack.c.l.b16 %v924
      %v1965 = vunpack.c.l.b16 %v925
      %v1966 = vunpack.c.l.b16 %v926
      %v1967 = vunpack.c.l.b16 %v927
      %v1968 = vunpack.c.l.b16 %v928
      %v1969 = vunpack.c.l.b16 %v929
      %v1970 = vunpack.c.l.b16 %v930
      %v1971 = vunpack.c.l.b16 %v931
      %v1972 = vunpack.c.l.b16 %v932
      %v1973 = vunpack.c.l.b16 %v933
      %v1974 = vunpack.c.l.b16 %v934
      %v1975 = vunpack.c.l.b16 %v935
      %v1976 = vunpack.c.l.b16 %v936
      %v1977 = vunpack.c.l.b16 %v937
      %v1978 = vunpack.c.l.b16 %v938
      %v1979 = vunpack.c.l.b16 %v939
      %v1980 = vunpack.c.l.b16 %v940
      %v1981 = vunpack.c.l.b16 %v941
      %v1982 = vunpack.c.l.b16 %v942
      %v1983 = vunpack.c.l.b16 %v943
      %v1984 = vunpack.c.l.b16 %v944
      %v1985 = vunpack.c.l.b16 %v945
      %v1986 = vunpack.c.l.b16 %v946
      %v1987 = vunpack.c.l.b16 %v947
      %v1988 = vunpack.c.l.b16 %v948
      %v1989 = vunpack.c.l.b16 %v949
      %v1990 = vunpack.c.l.b16 %v950
      %v1991 = vunpack.c.l.b16 %v951
      %v1992 = vunpack.c.l.b16 %v952
      %v1993 = vunpack.c.l.b16 %v953
      %v1994 = vunpack.c.l.b16 %v954
      %v1995 = vunpack.c.l.b16 %v955
      %v1996 = vunpack.c.l.b16 %v956
      %v1997 = vunpack.c.l.b16 %v957
      %v1998 = vunpack.c.l.b16 %v958
      %v1999 = vunpack.c.l.b16 %v959
      %v2000 = vunpack.c.l.b16 %v960
      %v2001 = vunpack.c.l.b16 %v961
      %v2002 = vunpack.c.l.b16 %v962
      %v2003 = vunpack.c.l.b16 %v963
      %v2004 = vunpack.c.l.b16 %v964
      %v2005 = vunpack.c.l.b16 %v965
      %v2006 = vunpack.c.l.b16 %v966
      %v2007 = vunpack.c.l.b16 %v967
      %v2008 = vunpack.c.l.b16 %v968
      %v2009 = vunpack.c.l.b16 %v969
      %v2010 = vunpack.c.l.b16 %v970
      %v2011 = vunpack.c.l.b16 %v971
      %v2012 = vunpack.c.l.b16 %v972
      %v2013 = vunpack.c.l.b16 %v973
      %v2014 = vunpack.c.l.b16 %v974
      %v2015 = vunpack.c.l.b16 %v975
      %v2016 = vunpack.c.l.b16 %v976
      %v2017 = vunpack.c.l.b16 %v977
      %v2018 = vunpack.c.l.b16 %v978
      %v2019 = vunpack.c.l.b16 %v979
      %v2020 = vunpack.c.l.b16 %v980
      %v2021 = vunpack.c.l.b16 %v981
      %v2022 = vunpack.c.l.b16 %v982
      %v2023 = vunpack.c.l.b16 %v983
      %v2024 = vunpack.c.l.b16 %v984
      %v2025 = vunpack.c.l.b16 %v985
      %v2026 = vunpack.c.l.b16 %v986
      %v2027 = vunpack.c.l.b16 %v987
      %v2028 = vunpack.c.l.b16 %v988
      %v2029 = vunpack.c.l.b16 %v989
      %v2030 = vunpack.c.l.b16 %v990
      %v2031 = vunpack.c.l.b16 %v991
      %v2032 = vunpack.c.l.b16 %v992
      %v2033 = vunpack.c.l.b16 %v993
      %v2034 = vunpack.c.l.b16 %v994
      %v2035 = vunpack.c.l.b16 %v995
      %v2036 = vunpack.c.l.b16 %v996
      %v2037 = vunpack.c.l.b16 %v997
      %v2038 = vunpack.c.l.b16 %v998
      %v2039 = vunpack.c.l.b16 %v999
      %v2040 = vunpack.c.l.b16 %v1000
      %v2041 = vunpack.c.l.b16 %v1001
      %v2042 = vunpack.c.l.b16 %v1002
      %v2043 = vunpack.c.l.b16 %v1003
      %v2044 = vunpack.c.l.b16 %v1004
      %v2045 = vunpack.c.l.b16 %v1005
      %v2046 = vunpack.c.l.b16 %v1006
      %v2047 = vunpack.c.l.b16 %v1007
      %v2048 = vunpack.c.l.b16 %v1008
      %v2049 = vunpack.c.l.b16 %v1009
      %v2050 = vunpack.c.l.b16 %v1010
      %v2051 = vunpack.c.l.b16 %v1011
      %v2052 = vpack.c.b16 %v1925, %v1924
      %v2053 = vpack.c.b16 %v1927, %v1926
      %v2054 = vpack.c.b16 %v1929, %v1928
      %v2055 = vpack.c.b16 %v1931, %v1930
      %v2056 = vpack.c.b16 %v1933, %v1932
      %v2057 = vpack.c.b16 %v1935, %v1934
      %v2058 = vpack.c.b16 %v1937, %v1936
      %v2059 = vpack.c.b16 %v1939, %v1938
      %v2060 = vpack.c.b16 %v1941, %v1940
      %v2061 = vpack.c.b16 %v1943, %v1942
      %v2062 = vpack.c.b16 %v1945, %v1944
      %v2063 = vpack.c.b16 %v1947, %v1946
      %v2064 = vpack.c.b16 %v1949, %v1948
      %v2065 = vpack.c.b16 %v1951, %v1950
      %v2066 = vpack.c.b16 %v1953, %v1952
      %v2067 = vpack.c.b16 %v1955, %v1954
      %v2068 = vpack.c.b16 %v1957, %v1956
      %v2069 = vpack.c.b16 %v1959, %v1958
      %v2070 = vpack.c.b16 %v1961, %v1960
      %v2071 = vpack.c.b16 %v1963, %v1962
      %v2072 = vpack.c.b16 %v1965, %v1964
      %v2073 = vpack.c.b16 %v1967, %v1966
      %v2074 = vpack.c.b16 %v1969, %v1968
      %v2075 = vpack.c.b16 %v1971, %v1970
      %v2076 = vpack.c.b16 %v1973, %v1972
      %v2077 = vpack.c.b16 %v1975, %v1974
      %v2078 = vpack.c.b16 %v1977, %v1976
      %v2079 = vpack.c.b16 %v1979, %v1978
      %v2080 = vpack.c.b16 %v1981, %v1980
      %v2081 = vpack.c.b16 %v1983, %v1982
      %v2082 = vpack.c.b16 %v1985, %v1984
      %v2083 = vpack.c.b16 %v1987, %v1986
      %v2084 = vpack.c.b16 %v1989, %v1988
      %v2085 = vpack.c.b16 %v1991, %v1990
      %v2086 = vpack.c.b16 %v1993, %v1992
      %v2087 = vpack.c.b16 %v1995, %v1994
      %v2088 = vpack.c.b16 %v1997, %v1996
      %v2089 = vpack.c.b16 %v1999, %v1998
      %v2090 = vpack.c.b16 %v2001, %v2000
      %v2091 = vpack.c.b16 %v2003, %v2002
      %v2092 = vpack.c.b16 %v2005, %v2004
      %v2093 = vpack.c.b16 %v2007, %v2006
      %v2094 = vpack.c.b16 %v2009, %v2008
      %v2095 = vpack.c.b16 %v2011, %v2010
      %v2096 = vpack.c.b16 %v2013, %v2012
      %v2097 = vpack.c.b16 %v2015, %v2014
      %v2098 = vpack.c.b16 %v2017, %v2016
      %v2099 = vpack.c.b16 %v2019, %v2018
      %v2100 = vpack.c.b16 %v2021, %v2020
      %v2101 = vpack.c.b16 %v2023, %v2022
      %v2102 = vpack.c.b16 %v2025, %v2024
      %v2103 = vpack.c.b16 %v2027, %v2026
      %v2104 = vpack.c.b16 %v2029, %v2028
      %v2105 = vpack.c.b16 %v2031, %v2030
      %v2106 = vpack.c.b16 %v2033, %v2032
      %v2107 = vpack.c.b16 %v2035, %v2034
      %v2108 = vpack.c.b16 %v2037, %v2036
      %v2109 = vpack.c.b16 %v2039, %v2038
      %v2110 = vpack.c.b16 %v2041, %v2040
      %v2111 = vpack.c.b16 %v2043, %v2042
      %v2112 = vpack.c.b16 %v2045, %v2044
      %v2113 = vpack.c.b16 %v2047, %v2046
      %v2114 = vpack.c.b16 %v2049, %v2048
      %v2115 = vpack.c.b16 %v2051, %v2050
      %2180 = vmatprep.subr.bf16.mxu0 %v1013
      %2181 = vmatpush1.bf16.msra.mxu0 %v1012
      %2182 = vmatprep.subr.bf16.mxu0 %v1015
      %2183 = vmatpush1.bf16.msra.mxu0 %v1014
      %2184 = vmatprep.subr.bf16.mxu0 %v1017
      %2185 = vmatpush1.bf16.msra.mxu0 %v1016
      %2186 = vmatprep.subr.bf16.mxu0 %v1019
      %2187 = vmatpush1.bf16.msra.mxu0 %v1018
      %2188 = vmatprep.subr.bf16.mxu0 %v1021
      %2189 = vmatpush1.bf16.msra.mxu0 %v1020
      %2190 = vmatprep.subr.bf16.mxu0 %v1023
      %2191 = vmatpush1.bf16.msra.mxu0 %v1022
      %2192 = vmatprep.subr.bf16.mxu0 %v1025
      %2193 = vmatpush1.bf16.msra.mxu0 %v1024
      %2194 = vmatprep.subr.bf16.mxu0 %v1027
      %2195 = vmatpush1.bf16.msra.mxu0 %v1026
      %2196 = vmatprep.subr.bf16.mxu0 0
      %2197 = vmatpush1.bf16.msra.mxu0 0
      %2198 = vmatprep.subr.bf16.mxu0 0
      %2199 = vmatpush1.bf16.msra.mxu0 0
      %2200 = vmatprep.subr.bf16.mxu0 0
      %2201 = vmatpush1.bf16.msra.mxu0 0
      %2202 = vmatprep.subr.bf16.mxu0 0
      %2203 = vmatpush1.bf16.msra.mxu0 0
      %2204 = vmatprep.subr.bf16.mxu0 0
      %2205 = vmatpush1.bf16.msra.mxu0 0
      %2206 = vmatprep.subr.bf16.mxu0 0
      %2207 = vmatpush1.bf16.msra.mxu0 0
      %2208 = vmatprep.subr.bf16.mxu0 0
      %2209 = vmatpush1.bf16.msra.mxu0 0
      %2210 = vmatprep.subr.bf16.mxu0 0
      %2211 = vmatpush1.bf16.msra.mxu0 0
      %2212 = vmatprep.mubr.bf16.mxu0 0
      %2213 = vmatmul.mubr.bf16.gmra.mrb[0].mxu0 %v2052
      %v2214 = vpop.f32.mrb[0].mxu0
      %v2215 = vadd.f32 %v1159, %v2214
      %v2216 = vpop.f32.mrb[0].mxu0
      %v2217 = vadd.f32 %v1159, %v2216
      %v2218 = vpop.f32.mrb[0].mxu0
      %v2219 = vadd.f32 %v1164, %v2218
      %v2220 = vpop.f32.mrb[0].mxu0
      %v2221 = vadd.f32 %v1164, %v2220
      %2222 = vmatprep.mubr.bf16.mxu0 0
      %2223 = vmatmul.mubr.bf16.gmra.mrb[0].mxu0 %v2053
      %v2224 = vpop.f32.mrb[0].mxu0
      %v2225 = vadd.f32 %v1169, %v2224
      %v2226 = vpop.f32.mrb[0].mxu0
      %v2227 = vadd.f32 %v1169, %v2226
      %v2228 = vpop.f32.mrb[0].mxu0
      %v2229 = vadd.f32 %v1174, %v2228
      %v2230 = vpop.f32.mrb[0].mxu0
      %v2231 = vadd.f32 %v1174, %v2230
      %2232 = vmatprep.mubr.bf16.mxu0 0
      %2233 = vmatmul.mubr.bf16.gmra.mrb[0].mxu0 %v2054
      %v2234 = vpop.f32.mrb[0].mxu0
      %v2235 = vadd.f32 %v1179, %v2234
      %v2236 = vpop.f32.mrb[0].mxu0
      %v2237 = vadd.f32 %v1179, %v2236
      %v2238 = vpop.f32.mrb[0].mxu0
      %v2239 = vadd.f32 %v1184, %v2238
      %v2240 = vpop.f32.mrb[0].mxu0
      %v2241 = vadd.f32 %v1184, %v2240
      %2242 = vmatprep.mubr.bf16.mxu0 0
      %2243 = vmatmul.mubr.bf16.gmra.mrb[0].mxu0 %v2055
      %v2244 = vpop.f32.mrb[0].mxu0
      %v2245 = vadd.f32 %v1189, %v2244
      %v2246 = vpop.f32.mrb[0].mxu0
      %v2247 = vadd.f32 %v1189, %v2246
      %v2248 = vpop.f32.mrb[0].mxu0
      %v2249 = vadd.f32 %v1194, %v2248
      %v2250 = vpop.f32.mrb[0].mxu0
      %v2251 = vadd.f32 %v1194, %v2250
      %2252 = vmatprep.mubr.bf16.mxu0 0
      %2253 = vmatmul.mubr.bf16.gmra.mrb[0].mxu0 %v2056
      %v2254 = vpop.f32.mrb[0].mxu0
      %v2255 = vadd.f32 %v1199, %v2254
      %v2256 = vpop.f32.mrb[0].mxu0
      %v2257 = vadd.f32 %v1199, %v2256
      %v2258 = vpop.f32.mrb[0].mxu0
      %v2259 = vadd.f32 %v1204, %v2258
      %v2260 = vpop.f32.mrb[0].mxu0
      %v2261 = vadd.f32 %v1204, %v2260
      %2262 = vmatprep.mubr.bf16.mxu0 0
      %2263 = vmatmul.mubr.bf16.gmra.mrb[0].mxu0 %v2057
      %v2264 = vpop.f32.mrb[0].mxu0
      %v2265 = vadd.f32 %v1209, %v2264
      %v2266 = vpop.f32.mrb[0].mxu0
      %v2267 = vadd.f32 %v1209, %v2266
      %v2268 = vpop.f32.mrb[0].mxu0
      %v2269 = vadd.f32 %v1214, %v2268
      %v2270 = vpop.f32.mrb[0].mxu0
      %v2271 = vadd.f32 %v1214, %v2270
      %2272 = vmatprep.mubr.bf16.mxu0 0
      %2273 = vmatmul.mubr.bf16.gmra.mrb[0].mxu0 %v2058
      %v2274 = vpop.f32.mrb[0].mxu0
      %v2275 = vadd.f32 %v1219, %v2274
      %v2276 = vpop.f32.mrb[0].mxu0
      %v2277 = vadd.f32 %v1219, %v2276
      %v2278 = vpop.f32.mrb[0].mxu0
      %v2279 = vadd.f32 %v1224, %v2278
      %v2280 = vpop.f32.mrb[0].mxu0
      %v2281 = vadd.f32 %v1224, %v2280
      %2282 = vmatprep.mubr.bf16.mxu0 0
      %2283 = vmatmul.mubr.bf16.gmra.mrb[0].mxu0 %v2059
      %v2284 = vpop.f32.mrb[0].mxu0
      %v2285 = vadd.f32 %v1229, %v2284
      %v2286 = vpop.f32.mrb[0].mxu0
      %v2287 = vadd.f32 %v1229, %v2286
      %v2288 = vpop.f32.mrb[0].mxu0
      %v2289 = vadd.f32 %v1234, %v2288
      %v2290 = vpop.f32.mrb[0].mxu0
      %v2291 = vadd.f32 %v1234, %v2290
      %2292 = vmatprep.mubr.bf16.mxu0 0
      %2293 = vmatmul.mubr.bf16.gmra.mrb[0].mxu0 %v2060
      %v2294 = vpop.f32.mrb[0].mxu0
      %v2295 = vadd.f32 %v1239, %v2294
      %v2296 = vpop.f32.mrb[0].mxu0
      %v2297 = vadd.f32 %v1239, %v2296
      %v2298 = vpop.f32.mrb[0].mxu0
      %v2299 = vadd.f32 %v1244, %v2298
      %v2300 = vpop.f32.mrb[0].mxu0
      %v2301 = vadd.f32 %v1244, %v2300
      %2302 = vmatprep.mubr.bf16.mxu0 0
      %2303 = vmatmul.mubr.bf16.gmra.mrb[0].mxu0 %v2061
      %v2304 = vpop.f32.mrb[0].mxu0
      %v2305 = vadd.f32 %v1249, %v2304
      %v2306 = vpop.f32.mrb[0].mxu0
      %v2307 = vadd.f32 %v1249, %v2306
      %v2308 = vpop.f32.mrb[0].mxu0
      %v2309 = vadd.f32 %v1254, %v2308
      %v2310 = vpop.f32.mrb[0].mxu0
      %v2311 = vadd.f32 %v1254, %v2310
      %2312 = vmatprep.mubr.bf16.mxu0 0
      %2313 = vmatmul.mubr.bf16.gmra.mrb[0].mxu0 %v2062
      %v2314 = vpop.f32.mrb[0].mxu0
      %v2315 = vadd.f32 %v1259, %v2314
      %v2316 = vpop.f32.mrb[0].mxu0
      %v2317 = vadd.f32 %v1259, %v2316
      %v2318 = vpop.f32.mrb[0].mxu0
      %v2319 = vadd.f32 %v1264, %v2318
      %v2320 = vpop.f32.mrb[0].mxu0
      %v2321 = vadd.f32 %v1264, %v2320
      %2322 = vmatprep.mubr.bf16.mxu0 0
      %2323 = vmatmul.mubr.bf16.gmra.mrb[0].mxu0 %v2063
      %v2324 = vpop.f32.mrb[0].mxu0
      %v2325 = vadd.f32 %v1269, %v2324
      %v2326 = vpop.f32.mrb[0].mxu0
      %v2327 = vadd.f32 %v1269, %v2326
      %v2328 = vpop.f32.mrb[0].mxu0
      %v2329 = vadd.f32 %v1274, %v2328
      %v2330 = vpop.f32.mrb[0].mxu0
      %v2331 = vadd.f32 %v1274, %v2330
      %2332 = vmatprep.mubr.bf16.mxu0 0
      %2333 = vmatmul.mubr.bf16.gmra.mrb[0].mxu0 %v2064
      %v2334 = vpop.f32.mrb[0].mxu0
      %v2335 = vadd.f32 %v1279, %v2334
      %v2336 = vpop.f32.mrb[0].mxu0
      %v2337 = vadd.f32 %v1279, %v2336
      %v2338 = vpop.f32.mrb[0].mxu0
      %v2339 = vadd.f32 %v1284, %v2338
      %v2340 = vpop.f32.mrb[0].mxu0
      %v2341 = vadd.f32 %v1284, %v2340
      %2342 = vmatprep.mubr.bf16.mxu0 0
      %2343 = vmatmul.mubr.bf16.gmra.mrb[0].mxu0 %v2065
      %v2344 = vpop.f32.mrb[0].mxu0
      %v2345 = vadd.f32 %v1289, %v2344
      %v2346 = vpop.f32.mrb[0].mxu0
      %v2347 = vadd.f32 %v1289, %v2346
      %v2348 = vpop.f32.mrb[0].mxu0
      %v2349 = vadd.f32 %v1294, %v2348
      %v2350 = vpop.f32.mrb[0].mxu0
      %v2351 = vadd.f32 %v1294, %v2350
      %2352 = vmatprep.mubr.bf16.mxu0 0
      %2353 = vmatmul.mubr.bf16.gmra.mrb[0].mxu0 %v2066
      %v2354 = vpop.f32.mrb[0].mxu0
      %v2355 = vadd.f32 %v1299, %v2354
      %v2356 = vpop.f32.mrb[0].mxu0
      %v2357 = vadd.f32 %v1299, %v2356
      %v2358 = vpop.f32.mrb[0].mxu0
      %v2359 = vadd.f32 %v1304, %v2358
      %v2360 = vpop.f32.mrb[0].mxu0
      %v2361 = vadd.f32 %v1304, %v2360
      %2362 = vmatprep.mubr.bf16.mxu0 0
      %2363 = vmatmul.mubr.bf16.gmra.mrb[0].mxu0 %v2067
      %v2364 = vpop.f32.mrb[0].mxu0
      %v2365 = vadd.f32 %v1309, %v2364
      %v2366 = vpop.f32.mrb[0].mxu0
      %v2367 = vadd.f32 %v1309, %v2366
      %v2368 = vpop.f32.mrb[0].mxu0
      %v2369 = vadd.f32 %v1314, %v2368
      %v2370 = vpop.f32.mrb[0].mxu0
      %v2371 = vadd.f32 %v1314, %v2370
      %2372 = vmatprep.mubr.bf16.mxu0 0
      %2373 = vmatmul.mubr.bf16.gmra.mrb[0].mxu0 %v2068
      %v2374 = vpop.f32.mrb[0].mxu0
      %v2375 = vadd.f32 %v1319, %v2374
      %v2376 = vpop.f32.mrb[0].mxu0
      %v2377 = vadd.f32 %v1319, %v2376
      %v2378 = vpop.f32.mrb[0].mxu0
      %v2379 = vadd.f32 %v1324, %v2378
      %v2380 = vpop.f32.mrb[0].mxu0
      %v2381 = vadd.f32 %v1324, %v2380
      %2382 = vmatprep.mubr.bf16.mxu0 0
      %2383 = vmatmul.mubr.bf16.gmra.mrb[0].mxu0 %v2069
      %v2384 = vpop.f32.mrb[0].mxu0
      %v2385 = vadd.f32 %v1329, %v2384
      %v2386 = vpop.f32.mrb[0].mxu0
      %v2387 = vadd.f32 %v1329, %v2386
      %v2388 = vpop.f32.mrb[0].mxu0
      %v2389 = vadd.f32 %v1334, %v2388
      %v2390 = vpop.f32.mrb[0].mxu0
      %v2391 = vadd.f32 %v1334, %v2390
      %2392 = vmatprep.mubr.bf16.mxu0 0
      %2393 = vmatmul.mubr.bf16.gmra.mrb[0].mxu0 %v2070
      %v2394 = vpop.f32.mrb[0].mxu0
      %v2395 = vadd.f32 %v1339, %v2394
      %v2396 = vpop.f32.mrb[0].mxu0
      %v2397 = vadd.f32 %v1339, %v2396
      %v2398 = vpop.f32.mrb[0].mxu0
      %v2399 = vadd.f32 %v1344, %v2398
      %v2400 = vpop.f32.mrb[0].mxu0
      %v2401 = vadd.f32 %v1344, %v2400
      %2402 = vmatprep.mubr.bf16.mxu0 0
      %2403 = vmatmul.mubr.bf16.gmra.mrb[0].mxu0 %v2071
      %v2404 = vpop.f32.mrb[0].mxu0
      %v2405 = vadd.f32 %v1349, %v2404
      %v2406 = vpop.f32.mrb[0].mxu0
      %v2407 = vadd.f32 %v1349, %v2406
      %v2408 = vpop.f32.mrb[0].mxu0
      %v2409 = vadd.f32 %v1354, %v2408
      %v2410 = vpop.f32.mrb[0].mxu0
      %v2411 = vadd.f32 %v1354, %v2410
      %2412 = vmatprep.mubr.bf16.mxu0 0
      %2413 = vmatmul.mubr.bf16.gmra.mrb[0].mxu0 %v2072
      %v2414 = vpop.f32.mrb[0].mxu0
      %v2415 = vadd.f32 %v1359, %v2414
      %v2416 = vpop.f32.mrb[0].mxu0
      %v2417 = vadd.f32 %v1359, %v2416
      %v2418 = vpop.f32.mrb[0].mxu0
      %v2419 = vadd.f32 %v1364, %v2418
      %v2420 = vpop.f32.mrb[0].mxu0
      %v2421 = vadd.f32 %v1364, %v2420
      %2422 = vmatprep.mubr.bf16.mxu0 0
      %2423 = vmatmul.mubr.bf16.gmra.mrb[0].mxu0 %v2073
      %v2424 = vpop.f32.mrb[0].mxu0
      %v2425 = vadd.f32 %v1369, %v2424
      %v2426 = vpop.f32.mrb[0].mxu0
      %v2427 = vadd.f32 %v1369, %v2426
      %v2428 = vpop.f32.mrb[0].mxu0
      %v2429 = vadd.f32 %v1374, %v2428
      %v2430 = vpop.f32.mrb[0].mxu0
      %v2431 = vadd.f32 %v1374, %v2430
      %2432 = vmatprep.mubr.bf16.mxu0 0
      %2433 = vmatmul.mubr.bf16.gmra.mrb[0].mxu0 %v2074
      %v2434 = vpop.f32.mrb[0].mxu0
      %v2435 = vadd.f32 %v1379, %v2434
      %v2436 = vpop.f32.mrb[0].mxu0
      %v2437 = vadd.f32 %v1379, %v2436
      %v2438 = vpop.f32.mrb[0].mxu0
      %v2439 = vadd.f32 %v1384, %v2438
      %v2440 = vpop.f32.mrb[0].mxu0
      %v2441 = vadd.f32 %v1384, %v2440
      %2442 = vmatprep.mubr.bf16.mxu0 0
      %2443 = vmatmul.mubr.bf16.gmra.mrb[0].mxu0 %v2075
      %v2444 = vpop.f32.mrb[0].mxu0
      %v2445 = vadd.f32 %v1389, %v2444
      %v2446 = vpop.f32.mrb[0].mxu0
      %v2447 = vadd.f32 %v1389, %v2446
      %v2448 = vpop.f32.mrb[0].mxu0
      %v2449 = vadd.f32 %v1394, %v2448
      %v2450 = vpop.f32.mrb[0].mxu0
      %v2451 = vadd.f32 %v1394, %v2450
      %2452 = vmatprep.mubr.bf16.mxu0 0
      %2453 = vmatmul.mubr.bf16.gmra.mrb[0].mxu0 %v2076
      %v2454 = vpop.f32.mrb[0].mxu0
      %v2455 = vadd.f32 %v1399, %v2454
      %v2456 = vpop.f32.mrb[0].mxu0
      %v2457 = vadd.f32 %v1399, %v2456
      %v2458 = vpop.f32.mrb[0].mxu0
      %v2459 = vadd.f32 %v1404, %v2458
      %v2460 = vpop.f32.mrb[0].mxu0
      %v2461 = vadd.f32 %v1404, %v2460
      %2462 = vmatprep.mubr.bf16.mxu0 0
      %2463 = vmatmul.mubr.bf16.gmra.mrb[0].mxu0 %v2077
      %v2464 = vpop.f32.mrb[0].mxu0
      %v2465 = vadd.f32 %v1409, %v2464
      %v2466 = vpop.f32.mrb[0].mxu0
      %v2467 = vadd.f32 %v1409, %v2466
      %v2468 = vpop.f32.mrb[0].mxu0
      %v2469 = vadd.f32 %v1414, %v2468
      %v2470 = vpop.f32.mrb[0].mxu0
      %v2471 = vadd.f32 %v1414, %v2470
      %2472 = vmatprep.mubr.bf16.mxu0 0
      %2473 = vmatmul.mubr.bf16.gmra.mrb[0].mxu0 %v2078
      %v2474 = vpop.f32.mrb[0].mxu0
      %v2475 = vadd.f32 %v1419, %v2474
      %v2476 = vpop.f32.mrb[0].mxu0
      %v2477 = vadd.f32 %v1419, %v2476
      %v2478 = vpop.f32.mrb[0].mxu0
      %v2479 = vadd.f32 %v1424, %v2478
      %v2480 = vpop.f32.mrb[0].mxu0
      %v2481 = vadd.f32 %v1424, %v2480
      %2482 = vmatprep.mubr.bf16.mxu0 0
      %2483 = vmatmul.mubr.bf16.gmra.mrb[0].mxu0 %v2079
      %v2484 = vpop.f32.mrb[0].mxu0
      %v2485 = vadd.f32 %v1429, %v2484
      %v2486 = vpop.f32.mrb[0].mxu0
      %v2487 = vadd.f32 %v1429, %v2486
      %v2488 = vpop.f32.mrb[0].mxu0
      %v2489 = vadd.f32 %v1434, %v2488
      %v2490 = vpop.f32.mrb[0].mxu0
      %v2491 = vadd.f32 %v1434, %v2490
      %2492 = vmatprep.mubr.bf16.mxu0 0
      %2493 = vmatmul.mubr.bf16.gmra.mrb[0].mxu0 %v2080
      %v2494 = vpop.f32.mrb[0].mxu0
      %v2495 = vadd.f32 %v1439, %v2494
      %v2496 = vpop.f32.mrb[0].mxu0
      %v2497 = vadd.f32 %v1439, %v2496
      %v2498 = vpop.f32.mrb[0].mxu0
      %v2499 = vadd.f32 %v1444, %v2498
      %v2500 = vpop.f32.mrb[0].mxu0
      %v2501 = vadd.f32 %v1444, %v2500
      %2502 = vmatprep.mubr.bf16.mxu0 0
      %2503 = vmatmul.mubr.bf16.gmra.mrb[0].mxu0 %v2081
      %v2504 = vpop.f32.mrb[0].mxu0
      %v2505 = vadd.f32 %v1449, %v2504
      %v2506 = vpop.f32.mrb[0].mxu0
      %v2507 = vadd.f32 %v1449, %v2506
      %v2508 = vpop.f32.mrb[0].mxu0
      %v2509 = vadd.f32 %v1454, %v2508
      %v2510 = vpop.f32.mrb[0].mxu0
      %v2511 = vadd.f32 %v1454, %v2510
      %2512 = vmatprep.mubr.bf16.mxu0 0
      %2513 = vmatmul.mubr.bf16.gmra.mrb[0].mxu0 %v2082
      %v2514 = vpop.f32.mrb[0].mxu0
      %v2515 = vadd.f32 %v1459, %v2514
      %v2516 = vpop.f32.mrb[0].mxu0
      %v2517 = vadd.f32 %v1459, %v2516
      %v2518 = vpop.f32.mrb[0].mxu0
      %v2519 = vadd.f32 %v1464, %v2518
      %v2520 = vpop.f32.mrb[0].mxu0
      %v2521 = vadd.f32 %v1464, %v2520
      %2522 = vmatprep.mubr.bf16.mxu0 0
      %2523 = vmatmul.mubr.bf16.gmra.mrb[0].mxu0 %v2083
      %v2524 = vpop.f32.mrb[0].mxu0
      %v2525 = vadd.f32 %v1469, %v2524
      %v2526 = vpop.f32.mrb[0].mxu0
      %v2527 = vadd.f32 %v1469, %v2526
      %v2528 = vpop.f32.mrb[0].mxu0
      %v2529 = vadd.f32 %v1474, %v2528
      %v2530 = vpop.f32.mrb[0].mxu0
      %v2531 = vadd.f32 %v1474, %v2530
      %2532 = vmatprep.mubr.bf16.mxu0 0
      %2533 = vmatmul.mubr.bf16.gmra.mrb[0].mxu0 %v2084
      %v2534 = vpop.f32.mrb[0].mxu0
      %v2535 = vadd.f32 %v1479, %v2534
      %v2536 = vpop.f32.mrb[0].mxu0
      %v2537 = vadd.f32 %v1479, %v2536
      %v2538 = vpop.f32.mrb[0].mxu0
      %v2539 = vadd.f32 %v1484, %v2538
      %v2540 = vpop.f32.mrb[0].mxu0
      %v2541 = vadd.f32 %v1484, %v2540
      %2542 = vmatprep.mubr.bf16.mxu0 0
      %2543 = vmatmul.mubr.bf16.gmra.mrb[0].mxu0 %v2085
      %v2544 = vpop.f32.mrb[0].mxu0
      %v2545 = vadd.f32 %v1489, %v2544
      %v2546 = vpop.f32.mrb[0].mxu0
      %v2547 = vadd.f32 %v1489, %v2546
      %v2548 = vpop.f32.mrb[0].mxu0
      %v2549 = vadd.f32 %v1494, %v2548
      %v2550 = vpop.f32.mrb[0].mxu0
      %v2551 = vadd.f32 %v1494, %v2550
      %2552 = vmatprep.mubr.bf16.mxu0 0
      %2553 = vmatmul.mubr.bf16.gmra.mrb[0].mxu0 %v2086
      %v2554 = vpop.f32.mrb[0].mxu0
      %v2555 = vadd.f32 %v1499, %v2554
      %v2556 = vpop.f32.mrb[0].mxu0
      %v2557 = vadd.f32 %v1499, %v2556
      %v2558 = vpop.f32.mrb[0].mxu0
      %v2559 = vadd.f32 %v1504, %v2558
      %v2560 = vpop.f32.mrb[0].mxu0
      %v2561 = vadd.f32 %v1504, %v2560
      %2562 = vmatprep.mubr.bf16.mxu0 0
      %2563 = vmatmul.mubr.bf16.gmra.mrb[0].mxu0 %v2087
      %v2564 = vpop.f32.mrb[0].mxu0
      %v2565 = vadd.f32 %v1509, %v2564
      %v2566 = vpop.f32.mrb[0].mxu0
      %v2567 = vadd.f32 %v1509, %v2566
      %v2568 = vpop.f32.mrb[0].mxu0
      %v2569 = vadd.f32 %v1514, %v2568
      %v2570 = vpop.f32.mrb[0].mxu0
      %v2571 = vadd.f32 %v1514, %v2570
      %2572 = vmatprep.mubr.bf16.mxu0 0
      %2573 = vmatmul.mubr.bf16.gmra.mrb[0].mxu0 %v2088
      %v2574 = vpop.f32.mrb[0].mxu0
      %v2575 = vadd.f32 %v1519, %v2574
      %v2576 = vpop.f32.mrb[0].mxu0
      %v2577 = vadd.f32 %v1519, %v2576
      %v2578 = vpop.f32.mrb[0].mxu0
      %v2579 = vadd.f32 %v1524, %v2578
      %v2580 = vpop.f32.mrb[0].mxu0
      %v2581 = vadd.f32 %v1524, %v2580
      %2582 = vmatprep.mubr.bf16.mxu0 0
      %2583 = vmatmul.mubr.bf16.gmra.mrb[0].mxu0 %v2089
      %v2584 = vpop.f32.mrb[0].mxu0
      %v2585 = vadd.f32 %v1529, %v2584
      %v2586 = vpop.f32.mrb[0].mxu0
      %v2587 = vadd.f32 %v1529, %v2586
      %v2588 = vpop.f32.mrb[0].mxu0
      %v2589 = vadd.f32 %v1534, %v2588
      %v2590 = vpop.f32.mrb[0].mxu0
      %v2591 = vadd.f32 %v1534, %v2590
      %2592 = vmatprep.mubr.bf16.mxu0 0
      %2593 = vmatmul.mubr.bf16.gmra.mrb[0].mxu0 %v2090
      %v2594 = vpop.f32.mrb[0].mxu0
      %v2595 = vadd.f32 %v1539, %v2594
      %v2596 = vpop.f32.mrb[0].mxu0
      %v2597 = vadd.f32 %v1539, %v2596
      %v2598 = vpop.f32.mrb[0].mxu0
      %v2599 = vadd.f32 %v1544, %v2598
      %v2600 = vpop.f32.mrb[0].mxu0
      %v2601 = vadd.f32 %v1544, %v2600
      %2602 = vmatprep.mubr.bf16.mxu0 0
      %2603 = vmatmul.mubr.bf16.gmra.mrb[0].mxu0 %v2091
      %v2604 = vpop.f32.mrb[0].mxu0
      %v2605 = vadd.f32 %v1549, %v2604
      %v2606 = vpop.f32.mrb[0].mxu0
      %v2607 = vadd.f32 %v1549, %v2606
      %v2608 = vpop.f32.mrb[0].mxu0
      %v2609 = vadd.f32 %v1554, %v2608
      %v2610 = vpop.f32.mrb[0].mxu0
      %v2611 = vadd.f32 %v1554, %v2610
      %2612 = vmatprep.mubr.bf16.mxu0 0
      %2613 = vmatmul.mubr.bf16.gmra.mrb[0].mxu0 %v2092
      %v2614 = vpop.f32.mrb[0].mxu0
      %v2615 = vadd.f32 %v1559, %v2614
      %v2616 = vpop.f32.mrb[0].mxu0
      %v2617 = vadd.f32 %v1559, %v2616
      %v2618 = vpop.f32.mrb[0].mxu0
      %v2619 = vadd.f32 %v1564, %v2618
      %v2620 = vpop.f32.mrb[0].mxu0
      %v2621 = vadd.f32 %v1564, %v2620
      %2622 = vmatprep.mubr.bf16.mxu0 0
      %2623 = vmatmul.mubr.bf16.gmra.mrb[0].mxu0 %v2093
      %v2624 = vpop.f32.mrb[0].mxu0
      %v2625 = vadd.f32 %v1569, %v2624
      %v2626 = vpop.f32.mrb[0].mxu0
      %v2627 = vadd.f32 %v1569, %v2626
      %v2628 = vpop.f32.mrb[0].mxu0
      %v2629 = vadd.f32 %v1574, %v2628
      %v2630 = vpop.f32.mrb[0].mxu0
      %v2631 = vadd.f32 %v1574, %v2630
      %2632 = vmatprep.mubr.bf16.mxu0 0
      %2633 = vmatmul.mubr.bf16.gmra.mrb[0].mxu0 %v2094
      %v2634 = vpop.f32.mrb[0].mxu0
      %v2635 = vadd.f32 %v1579, %v2634
      %v2636 = vpop.f32.mrb[0].mxu0
      %v2637 = vadd.f32 %v1579, %v2636
      %v2638 = vpop.f32.mrb[0].mxu0
      %v2639 = vadd.f32 %v1584, %v2638
      %v2640 = vpop.f32.mrb[0].mxu0
      %v2641 = vadd.f32 %v1584, %v2640
      %2642 = vmatprep.mubr.bf16.mxu0 0
      %2643 = vmatmul.mubr.bf16.gmra.mrb[0].mxu0 %v2095
      %v2644 = vpop.f32.mrb[0].mxu0
      %v2645 = vadd.f32 %v1589, %v2644
      %v2646 = vpop.f32.mrb[0].mxu0
      %v2647 = vadd.f32 %v1589, %v2646
      %v2648 = vpop.f32.mrb[0].mxu0
      %v2649 = vadd.f32 %v1594, %v2648
      %v2650 = vpop.f32.mrb[0].mxu0
      %v2651 = vadd.f32 %v1594, %v2650
      %2652 = vmatprep.mubr.bf16.mxu0 0
      %2653 = vmatmul.mubr.bf16.gmra.mrb[0].mxu0 %v2096
      %v2654 = vpop.f32.mrb[0].mxu0
      %v2655 = vadd.f32 %v1599, %v2654
      %v2656 = vpop.f32.mrb[0].mxu0
      %v2657 = vadd.f32 %v1599, %v2656
      %v2658 = vpop.f32.mrb[0].mxu0
      %v2659 = vadd.f32 %v1604, %v2658
      %v2660 = vpop.f32.mrb[0].mxu0
      %v2661 = vadd.f32 %v1604, %v2660
      %2662 = vmatprep.mubr.bf16.mxu0 0
      %2663 = vmatmul.mubr.bf16.gmra.mrb[0].mxu0 %v2097
      %v2664 = vpop.f32.mrb[0].mxu0
      %v2665 = vadd.f32 %v1609, %v2664
      %v2666 = vpop.f32.mrb[0].mxu0
      %v2667 = vadd.f32 %v1609, %v2666
      %v2668 = vpop.f32.mrb[0].mxu0
      %v2669 = vadd.f32 %v1614, %v2668
      %v2670 = vpop.f32.mrb[0].mxu0
      %v2671 = vadd.f32 %v1614, %v2670
      %2672 = vmatprep.mubr.bf16.mxu0 0
      %2673 = vmatmul.mubr.bf16.gmra.mrb[0].mxu0 %v2098
      %v2674 = vpop.f32.mrb[0].mxu0
      %v2675 = vadd.f32 %v1619, %v2674
      %v2676 = vpop.f32.mrb[0].mxu0
      %v2677 = vadd.f32 %v1619, %v2676
      %v2678 = vpop.f32.mrb[0].mxu0
      %v2679 = vadd.f32 %v1624, %v2678
      %v2680 = vpop.f32.mrb[0].mxu0
      %v2681 = vadd.f32 %v1624, %v2680
      %2682 = vmatprep.mubr.bf16.mxu0 0
      %2683 = vmatmul.mubr.bf16.gmra.mrb[0].mxu0 %v2099
      %v2684 = vpop.f32.mrb[0].mxu0
      %v2685 = vadd.f32 %v1629, %v2684
      %v2686 = vpop.f32.mrb[0].mxu0
      %v2687 = vadd.f32 %v1629, %v2686
      %v2688 = vpop.f32.mrb[0].mxu0
      %v2689 = vadd.f32 %v1634, %v2688
      %v2690 = vpop.f32.mrb[0].mxu0
      %v2691 = vadd.f32 %v1634, %v2690
      %2692 = vmatprep.mubr.bf16.mxu0 0
      %2693 = vmatmul.mubr.bf16.gmra.mrb[0].mxu0 %v2100
      %v2694 = vpop.f32.mrb[0].mxu0
      %v2695 = vadd.f32 %v1639, %v2694
      %v2696 = vpop.f32.mrb[0].mxu0
      %v2697 = vadd.f32 %v1639, %v2696
      %v2698 = vpop.f32.mrb[0].mxu0
      %v2699 = vadd.f32 %v1644, %v2698
      %v2700 = vpop.f32.mrb[0].mxu0
      %v2701 = vadd.f32 %v1644, %v2700
      %2702 = vmatprep.mubr.bf16.mxu0 0
      %2703 = vmatmul.mubr.bf16.gmra.mrb[0].mxu0 %v2101
      %v2704 = vpop.f32.mrb[0].mxu0
      %v2705 = vadd.f32 %v1649, %v2704
      %v2706 = vpop.f32.mrb[0].mxu0
      %v2707 = vadd.f32 %v1649, %v2706
      %v2708 = vpop.f32.mrb[0].mxu0
      %v2709 = vadd.f32 %v1654, %v2708
      %v2710 = vpop.f32.mrb[0].mxu0
      %v2711 = vadd.f32 %v1654, %v2710
      %2712 = vmatprep.mubr.bf16.mxu0 0
      %2713 = vmatmul.mubr.bf16.gmra.mrb[0].mxu0 %v2102
      %v2714 = vpop.f32.mrb[0].mxu0
      %v2715 = vadd.f32 %v1659, %v2714
      %v2716 = vpop.f32.mrb[0].mxu0
      %v2717 = vadd.f32 %v1659, %v2716
      %v2718 = vpop.f32.mrb[0].mxu0
      %v2719 = vadd.f32 %v1664, %v2718
      %v2720 = vpop.f32.mrb[0].mxu0
      %v2721 = vadd.f32 %v1664, %v2720
      %2722 = vmatprep.mubr.bf16.mxu0 0
      %2723 = vmatmul.mubr.bf16.gmra.mrb[0].mxu0 %v2103
      %v2724 = vpop.f32.mrb[0].mxu0
      %v2725 = vadd.f32 %v1669, %v2724
      %v2726 = vpop.f32.mrb[0].mxu0
      %v2727 = vadd.f32 %v1669, %v2726
      %v2728 = vpop.f32.mrb[0].mxu0
      %v2729 = vadd.f32 %v1674, %v2728
      %v2730 = vpop.f32.mrb[0].mxu0
      %v2731 = vadd.f32 %v1674, %v2730
      %2732 = vmatprep.mubr.bf16.mxu0 0
      %2733 = vmatmul.mubr.bf16.gmra.mrb[0].mxu0 %v2104
      %v2734 = vpop.f32.mrb[0].mxu0
      %v2735 = vadd.f32 %v1679, %v2734
      %v2736 = vpop.f32.mrb[0].mxu0
      %v2737 = vadd.f32 %v1679, %v2736
      %v2738 = vpop.f32.mrb[0].mxu0
      %v2739 = vadd.f32 %v1684, %v2738
      %v2740 = vpop.f32.mrb[0].mxu0
      %v2741 = vadd.f32 %v1684, %v2740
      %2742 = vmatprep.mubr.bf16.mxu0 0
      %2743 = vmatmul.mubr.bf16.gmra.mrb[0].mxu0 %v2105
      %v2744 = vpop.f32.mrb[0].mxu0
      %v2745 = vadd.f32 %v1689, %v2744
      %v2746 = vpop.f32.mrb[0].mxu0
      %v2747 = vadd.f32 %v1689, %v2746
      %v2748 = vpop.f32.mrb[0].mxu0
      %v2749 = vadd.f32 %v1694, %v2748
      %v2750 = vpop.f32.mrb[0].mxu0
      %v2751 = vadd.f32 %v1694, %v2750
      %2752 = vmatprep.mubr.bf16.mxu0 0
      %2753 = vmatmul.mubr.bf16.gmra.mrb[0].mxu0 %v2106
      %v2754 = vpop.f32.mrb[0].mxu0
      %v2755 = vadd.f32 %v1699, %v2754
      %v2756 = vpop.f32.mrb[0].mxu0
      %v2757 = vadd.f32 %v1699, %v2756
      %v2758 = vpop.f32.mrb[0].mxu0
      %v2759 = vadd.f32 %v1704, %v2758
      %v2760 = vpop.f32.mrb[0].mxu0
      %v2761 = vadd.f32 %v1704, %v2760
      %2762 = vmatprep.mubr.bf16.mxu0 0
      %2763 = vmatmul.mubr.bf16.gmra.mrb[0].mxu0 %v2107
      %v2764 = vpop.f32.mrb[0].mxu0
      %v2765 = vadd.f32 %v1709, %v2764
      %v2766 = vpop.f32.mrb[0].mxu0
      %v2767 = vadd.f32 %v1709, %v2766
      %v2768 = vpop.f32.mrb[0].mxu0
      %v2769 = vadd.f32 %v1714, %v2768
      %v2770 = vpop.f32.mrb[0].mxu0
      %v2771 = vadd.f32 %v1714, %v2770
      %2772 = vmatprep.mubr.bf16.mxu0 0
      %2773 = vmatmul.mubr.bf16.gmra.mrb[0].mxu0 %v2108
      %v2774 = vpop.f32.mrb[0].mxu0
      %v2775 = vadd.f32 %v1719, %v2774
      %v2776 = vpop.f32.mrb[0].mxu0
      %v2777 = vadd.f32 %v1719, %v2776
      %v2778 = vpop.f32.mrb[0].mxu0
      %v2779 = vadd.f32 %v1724, %v2778
      %v2780 = vpop.f32.mrb[0].mxu0
      %v2781 = vadd.f32 %v1724, %v2780
      %2782 = vmatprep.mubr.bf16.mxu0 0
      %2783 = vmatmul.mubr.bf16.gmra.mrb[0].mxu0 %v2109
      %v2784 = vpop.f32.mrb[0].mxu0
      %v2785 = vadd.f32 %v1729, %v2784
      %v2786 = vpop.f32.mrb[0].mxu0
      %v2787 = vadd.f32 %v1729, %v2786
      %v2788 = vpop.f32.mrb[0].mxu0
      %v2789 = vadd.f32 %v1734, %v2788
      %v2790 = vpop.f32.mrb[0].mxu0
      %v2791 = vadd.f32 %v1734, %v2790
      %2792 = vmatprep.mubr.bf16.mxu0 0
      %2793 = vmatmul.mubr.bf16.gmra.mrb[0].mxu0 %v2110
      %v2794 = vpop.f32.mrb[0].mxu0
      %v2795 = vadd.f32 %v1739, %v2794
      %v2796 = vpop.f32.mrb[0].mxu0
      %v2797 = vadd.f32 %v1739, %v2796
      %v2798 = vpop.f32.mrb[0].mxu0
      %v2799 = vadd.f32 %v1744, %v2798
      %v2800 = vpop.f32.mrb[0].mxu0
      %v2801 = vadd.f32 %v1744, %v2800
      %2802 = vmatprep.mubr.bf16.mxu0 0
      %2803 = vmatmul.mubr.bf16.gmra.mrb[0].mxu0 %v2111
      %v2804 = vpop.f32.mrb[0].mxu0
      %v2805 = vadd.f32 %v1749, %v2804
      %v2806 = vpop.f32.mrb[0].mxu0
      %v2807 = vadd.f32 %v1749, %v2806
      %v2808 = vpop.f32.mrb[0].mxu0
      %v2809 = vadd.f32 %v1754, %v2808
      %v2810 = vpop.f32.mrb[0].mxu0
      %v2811 = vadd.f32 %v1754, %v2810
      %2812 = vmatprep.mubr.bf16.mxu0 0
      %2813 = vmatmul.mubr.bf16.gmra.mrb[0].mxu0 %v2112
      %v2814 = vpop.f32.mrb[0].mxu0
      %v2815 = vadd.f32 %v1759, %v2814
      %v2816 = vpop.f32.mrb[0].mxu0
      %v2817 = vadd.f32 %v1759, %v2816
      %v2818 = vpop.f32.mrb[0].mxu0
      %v2819 = vadd.f32 %v1764, %v2818
      %v2820 = vpop.f32.mrb[0].mxu0
      %v2821 = vadd.f32 %v1764, %v2820
      %2822 = vmatprep.mubr.bf16.mxu0 0
      %2823 = vmatmul.mubr.bf16.gmra.mrb[0].mxu0 %v2113
      %v2824 = vpop.f32.mrb[0].mxu0
      %v2825 = vadd.f32 %v1769, %v2824
      %v2826 = vpop.f32.mrb[0].mxu0
      %v2827 = vadd.f32 %v1769, %v2826
      %v2828 = vpop.f32.mrb[0].mxu0
      %v2829 = vadd.f32 %v1774, %v2828
      %v2830 = vpop.f32.mrb[0].mxu0
      %v2831 = vadd.f32 %v1774, %v2830
      %2832 = vmatprep.mubr.bf16.mxu0 0
      %2833 = vmatmul.mubr.bf16.gmra.mrb[0].mxu0 %v2114
      %v2834 = vpop.f32.mrb[0].mxu0
      %v2835 = vadd.f32 %v1779, %v2834
      %v2836 = vpop.f32.mrb[0].mxu0
      %v2837 = vadd.f32 %v1779, %v2836
      %v2838 = vpop.f32.mrb[0].mxu0
      %v2839 = vadd.f32 %v1784, %v2838
      %v2840 = vpop.f32.mrb[0].mxu0
      %v2841 = vadd.f32 %v1784, %v2840
      %2842 = vmatprep.mubr.bf16.mxu0 0
      %2843 = vmatmul.mubr.bf16.gmra.mrb[0].mxu0 %v2115
      %v2844 = vpop.f32.mrb[0].mxu0
      %v2845 = vadd.f32 %v1789, %v2844
      %v2846 = vpop.f32.mrb[0].mxu0
      %v2847 = vadd.f32 %v1789, %v2846
      %v2848 = vpop.f32.mrb[0].mxu0
      %v2849 = vadd.f32 %v1794, %v2848
      %v2850 = vpop.f32.mrb[0].mxu0
      %v2851 = vadd.f32 %v1794, %v2850
      %2852 = vdwg.mxu0
      %v2853 = vmax.f32 %v2215, 0.0
      %v2854 = vmax.f32 %v2217, 0.0
      %v2855 = vmax.f32 %v2219, 0.0
      %v2856 = vmax.f32 %v2221, 0.0
      %v2857 = vmax.f32 %v2225, 0.0
      %v2858 = vmax.f32 %v2227, 0.0
      %v2859 = vmax.f32 %v2229, 0.0
      %v2860 = vmax.f32 %v2231, 0.0
      %v2861 = vmax.f32 %v2235, 0.0
      %v2862 = vmax.f32 %v2237, 0.0
      %v2863 = vmax.f32 %v2239, 0.0
      %v2864 = vmax.f32 %v2241, 0.0
      %v2865 = vmax.f32 %v2245, 0.0
      %v2866 = vmax.f32 %v2247, 0.0
      %v2867 = vmax.f32 %v2249, 0.0
      %v2868 = vmax.f32 %v2251, 0.0
      %v2869 = vmax.f32 %v2255, 0.0
      %v2870 = vmax.f32 %v2257, 0.0
      %v2871 = vmax.f32 %v2259, 0.0
      %v2872 = vmax.f32 %v2261, 0.0
      %v2873 = vmax.f32 %v2265, 0.0
      %v2874 = vmax.f32 %v2267, 0.0
      %v2875 = vmax.f32 %v2269, 0.0
      %v2876 = vmax.f32 %v2271, 0.0
      %v2877 = vmax.f32 %v2275, 0.0
      %v2878 = vmax.f32 %v2277, 0.0
      %v2879 = vmax.f32 %v2279, 0.0
      %v2880 = vmax.f32 %v2281, 0.0
      %v2881 = vmax.f32 %v2285, 0.0
      %v2882 = vmax.f32 %v2287, 0.0
      %v2883 = vmax.f32 %v2289, 0.0
      %v2884 = vmax.f32 %v2291, 0.0
      %v2885 = vmax.f32 %v2295, 0.0
      %v2886 = vmax.f32 %v2297, 0.0
      %v2887 = vmax.f32 %v2299, 0.0
      %v2888 = vmax.f32 %v2301, 0.0
      %v2889 = vmax.f32 %v2305, 0.0
      %v2890 = vmax.f32 %v2307, 0.0
      %v2891 = vmax.f32 %v2309, 0.0
      %v2892 = vmax.f32 %v2311, 0.0
      %v2893 = vmax.f32 %v2315, 0.0
      %v2894 = vmax.f32 %v2317, 0.0
      %v2895 = vmax.f32 %v2319, 0.0
      %v2896 = vmax.f32 %v2321, 0.0
      %v2897 = vmax.f32 %v2325, 0.0
      %v2898 = vmax.f32 %v2327, 0.0
      %v2899 = vmax.f32 %v2329, 0.0
      %v2900 = vmax.f32 %v2331, 0.0
      %v2901 = vmax.f32 %v2335, 0.0
      %v2902 = vmax.f32 %v2337, 0.0
      %v2903 = vmax.f32 %v2339, 0.0
      %v2904 = vmax.f32 %v2341, 0.0
      %v2905 = vmax.f32 %v2345, 0.0
      %v2906 = vmax.f32 %v2347, 0.0
      %v2907 = vmax.f32 %v2349, 0.0
      %v2908 = vmax.f32 %v2351, 0.0
      %v2909 = vmax.f32 %v2355, 0.0
      %v2910 = vmax.f32 %v2357, 0.0
      %v2911 = vmax.f32 %v2359, 0.0
      %v2912 = vmax.f32 %v2361, 0.0
      %v2913 = vmax.f32 %v2365, 0.0
      %v2914 = vmax.f32 %v2367, 0.0
      %v2915 = vmax.f32 %v2369, 0.0
      %v2916 = vmax.f32 %v2371, 0.0
      %v2917 = vmax.f32 %v2375, 0.0
      %v2918 = vmax.f32 %v2377, 0.0
      %v2919 = vmax.f32 %v2379, 0.0
      %v2920 = vmax.f32 %v2381, 0.0
      %v2921 = vmax.f32 %v2385, 0.0
      %v2922 = vmax.f32 %v2387, 0.0
      %v2923 = vmax.f32 %v2389, 0.0
      %v2924 = vmax.f32 %v2391, 0.0
      %v2925 = vmax.f32 %v2395, 0.0
      %v2926 = vmax.f32 %v2397, 0.0
      %v2927 = vmax.f32 %v2399, 0.0
      %v2928 = vmax.f32 %v2401, 0.0
      %v2929 = vmax.f32 %v2405, 0.0
      %v2930 = vmax.f32 %v2407, 0.0
      %v2931 = vmax.f32 %v2409, 0.0
      %v2932 = vmax.f32 %v2411, 0.0
      %v2933 = vmax.f32 %v2415, 0.0
      %v2934 = vmax.f32 %v2417, 0.0
      %v2935 = vmax.f32 %v2419, 0.0
      %v2936 = vmax.f32 %v2421, 0.0
      %v2937 = vmax.f32 %v2425, 0.0
      %v2938 = vmax.f32 %v2427, 0.0
      %v2939 = vmax.f32 %v2429, 0.0
      %v2940 = vmax.f32 %v2431, 0.0
      %v2941 = vmax.f32 %v2435, 0.0
      %v2942 = vmax.f32 %v2437, 0.0
      %v2943 = vmax.f32 %v2439, 0.0
      %v2944 = vmax.f32 %v2441, 0.0
      %v2945 = vmax.f32 %v2445, 0.0
      %v2946 = vmax.f32 %v2447, 0.0
      %v2947 = vmax.f32 %v2449, 0.0
      %v2948 = vmax.f32 %v2451, 0.0
      %v2949 = vmax.f32 %v2455, 0.0
      %v2950 = vmax.f32 %v2457, 0.0
      %v2951 = vmax.f32 %v2459, 0.0
      %v2952 = vmax.f32 %v2461, 0.0
      %v2953 = vmax.f32 %v2465, 0.0
      %v2954 = vmax.f32 %v2467, 0.0
      %v2955 = vmax.f32 %v2469, 0.0
      %v2956 = vmax.f32 %v2471, 0.0
      %v2957 = vmax.f32 %v2475, 0.0
      %v2958 = vmax.f32 %v2477, 0.0
      %v2959 = vmax.f32 %v2479, 0.0
      %v2960 = vmax.f32 %v2481, 0.0
      %v2961 = vmax.f32 %v2485, 0.0
      %v2962 = vmax.f32 %v2487, 0.0
      %v2963 = vmax.f32 %v2489, 0.0
      %v2964 = vmax.f32 %v2491, 0.0
      %v2965 = vmax.f32 %v2495, 0.0
      %v2966 = vmax.f32 %v2497, 0.0
      %v2967 = vmax.f32 %v2499, 0.0
      %v2968 = vmax.f32 %v2501, 0.0
      %v2969 = vmax.f32 %v2505, 0.0
      %v2970 = vmax.f32 %v2507, 0.0
      %v2971 = vmax.f32 %v2509, 0.0
      %v2972 = vmax.f32 %v2511, 0.0
      %v2973 = vmax.f32 %v2515, 0.0
      %v2974 = vmax.f32 %v2517, 0.0
      %v2975 = vmax.f32 %v2519, 0.0
      %v2976 = vmax.f32 %v2521, 0.0
      %v2977 = vmax.f32 %v2525, 0.0
      %v2978 = vmax.f32 %v2527, 0.0
      %v2979 = vmax.f32 %v2529, 0.0
      %v2980 = vmax.f32 %v2531, 0.0
      %v2981 = vmax.f32 %v2535, 0.0
      %v2982 = vmax.f32 %v2537, 0.0
      %v2983 = vmax.f32 %v2539, 0.0
      %v2984 = vmax.f32 %v2541, 0.0
      %v2985 = vmax.f32 %v2545, 0.0
      %v2986 = vmax.f32 %v2547, 0.0
      %v2987 = vmax.f32 %v2549, 0.0
      %v2988 = vmax.f32 %v2551, 0.0
      %v2989 = vmax.f32 %v2555, 0.0
      %v2990 = vmax.f32 %v2557, 0.0
      %v2991 = vmax.f32 %v2559, 0.0
      %v2992 = vmax.f32 %v2561, 0.0
      %v2993 = vmax.f32 %v2565, 0.0
      %v2994 = vmax.f32 %v2567, 0.0
      %v2995 = vmax.f32 %v2569, 0.0
      %v2996 = vmax.f32 %v2571, 0.0
      %v2997 = vmax.f32 %v2575, 0.0
      %v2998 = vmax.f32 %v2577, 0.0
      %v2999 = vmax.f32 %v2579, 0.0
      %v3000 = vmax.f32 %v2581, 0.0
      %v3001 = vmax.f32 %v2585, 0.0
      %v3002 = vmax.f32 %v2587, 0.0
      %v3003 = vmax.f32 %v2589, 0.0
      %v3004 = vmax.f32 %v2591, 0.0
      %v3005 = vmax.f32 %v2595, 0.0
      %v3006 = vmax.f32 %v2597, 0.0
      %v3007 = vmax.f32 %v2599, 0.0
      %v3008 = vmax.f32 %v2601, 0.0
      %v3009 = vmax.f32 %v2605, 0.0
      %v3010 = vmax.f32 %v2607, 0.0
      %v3011 = vmax.f32 %v2609, 0.0
      %v3012 = vmax.f32 %v2611, 0.0
      %v3013 = vmax.f32 %v2615, 0.0
      %v3014 = vmax.f32 %v2617, 0.0
      %v3015 = vmax.f32 %v2619, 0.0
      %v3016 = vmax.f32 %v2621, 0.0
      %v3017 = vmax.f32 %v2625, 0.0
      %v3018 = vmax.f32 %v2627, 0.0
      %v3019 = vmax.f32 %v2629, 0.0
      %v3020 = vmax.f32 %v2631, 0.0
      %v3021 = vmax.f32 %v2635, 0.0
      %v3022 = vmax.f32 %v2637, 0.0
      %v3023 = vmax.f32 %v2639, 0.0
      %v3024 = vmax.f32 %v2641, 0.0
      %v3025 = vmax.f32 %v2645, 0.0
      %v3026 = vmax.f32 %v2647, 0.0
      %v3027 = vmax.f32 %v2649, 0.0
      %v3028 = vmax.f32 %v2651, 0.0
      %v3029 = vmax.f32 %v2655, 0.0
      %v3030 = vmax.f32 %v2657, 0.0
      %v3031 = vmax.f32 %v2659, 0.0
      %v3032 = vmax.f32 %v2661, 0.0
      %v3033 = vmax.f32 %v2665, 0.0
      %v3034 = vmax.f32 %v2667, 0.0
      %v3035 = vmax.f32 %v2669, 0.0
      %v3036 = vmax.f32 %v2671, 0.0
      %v3037 = vmax.f32 %v2675, 0.0
      %v3038 = vmax.f32 %v2677, 0.0
      %v3039 = vmax.f32 %v2679, 0.0
      %v3040 = vmax.f32 %v2681, 0.0
      %v3041 = vmax.f32 %v2685, 0.0
      %v3042 = vmax.f32 %v2687, 0.0
      %v3043 = vmax.f32 %v2689, 0.0
      %v3044 = vmax.f32 %v2691, 0.0
      %v3045 = vmax.f32 %v2695, 0.0
      %v3046 = vmax.f32 %v2697, 0.0
      %v3047 = vmax.f32 %v2699, 0.0
      %v3048 = vmax.f32 %v2701, 0.0
      %v3049 = vmax.f32 %v2705, 0.0
      %v3050 = vmax.f32 %v2707, 0.0
      %v3051 = vmax.f32 %v2709, 0.0
      %v3052 = vmax.f32 %v2711, 0.0
      %v3053 = vmax.f32 %v2715, 0.0
      %v3054 = vmax.f32 %v2717, 0.0
      %v3055 = vmax.f32 %v2719, 0.0
      %v3056 = vmax.f32 %v2721, 0.0
      %v3057 = vmax.f32 %v2725, 0.0
      %v3058 = vmax.f32 %v2727, 0.0
      %v3059 = vmax.f32 %v2729, 0.0
      %v3060 = vmax.f32 %v2731, 0.0
      %v3061 = vmax.f32 %v2735, 0.0
      %v3062 = vmax.f32 %v2737, 0.0
      %v3063 = vmax.f32 %v2739, 0.0
      %v3064 = vmax.f32 %v2741, 0.0
      %v3065 = vmax.f32 %v2745, 0.0
      %v3066 = vmax.f32 %v2747, 0.0
      %v3067 = vmax.f32 %v2749, 0.0
      %v3068 = vmax.f32 %v2751, 0.0
      %v3069 = vmax.f32 %v2755, 0.0
      %v3070 = vmax.f32 %v2757, 0.0
      %v3071 = vmax.f32 %v2759, 0.0
      %v3072 = vmax.f32 %v2761, 0.0
      %v3073 = vmax.f32 %v2765, 0.0
      %v3074 = vmax.f32 %v2767, 0.0
      %v3075 = vmax.f32 %v2769, 0.0
      %v3076 = vmax.f32 %v2771, 0.0
      %v3077 = vmax.f32 %v2775, 0.0
      %v3078 = vmax.f32 %v2777, 0.0
      %v3079 = vmax.f32 %v2779, 0.0
      %v3080 = vmax.f32 %v2781, 0.0
      %v3081 = vmax.f32 %v2785, 0.0
      %v3082 = vmax.f32 %v2787, 0.0
      %v3083 = vmax.f32 %v2789, 0.0
      %v3084 = vmax.f32 %v2791, 0.0
      %v3085 = vmax.f32 %v2795, 0.0
      %v3086 = vmax.f32 %v2797, 0.0
      %v3087 = vmax.f32 %v2799, 0.0
      %v3088 = vmax.f32 %v2801, 0.0
      %v3089 = vmax.f32 %v2805, 0.0
      %v3090 = vmax.f32 %v2807, 0.0
      %v3091 = vmax.f32 %v2809, 0.0
      %v3092 = vmax.f32 %v2811, 0.0
      %v3093 = vmax.f32 %v2815, 0.0
      %v3094 = vmax.f32 %v2817, 0.0
      %v3095 = vmax.f32 %v2819, 0.0
      %v3096 = vmax.f32 %v2821, 0.0
      %v3097 = vmax.f32 %v2825, 0.0
      %v3098 = vmax.f32 %v2827, 0.0
      %v3099 = vmax.f32 %v2829, 0.0
      %v3100 = vmax.f32 %v2831, 0.0
      %v3101 = vmax.f32 %v2835, 0.0
      %v3102 = vmax.f32 %v2837, 0.0
      %v3103 = vmax.f32 %v2839, 0.0
      %v3104 = vmax.f32 %v2841, 0.0
      %v3105 = vmax.f32 %v2845, 0.0
      %v3106 = vmax.f32 %v2847, 0.0
      %v3107 = vmax.f32 %v2849, 0.0
      %v3108 = vmax.f32 %v2851, 0.0
      %v3109 = vmax.f32 %v2853, %v2854
      %3110 = vmax.xlane.f32.xlu0 %v3109
      %v3111 = vpop.xlane.xlu0 %3110
      %v3112 = vmax.f32 %v2855, %v2856
      %3113 = vmax.xlane.f32.xlu0 %v3112
      %v3114 = vpop.xlane.xlu0 %3113
      %v3115 = vmax.f32 %v2857, %v2858
      %3116 = vmax.xlane.f32.xlu0 %v3115
      %v3117 = vpop.xlane.xlu0 %3116
      %v3118 = vmax.f32 %v2859, %v2860
      %3119 = vmax.xlane.f32.xlu0 %v3118
      %v3120 = vpop.xlane.xlu0 %3119
      %v3121 = vmax.f32 %v2861, %v2862
      %3122 = vmax.xlane.f32.xlu0 %v3121
      %v3123 = vpop.xlane.xlu0 %3122
      %v3124 = vmax.f32 %v2863, %v2864
      %3125 = vmax.xlane.f32.xlu0 %v3124
      %v3126 = vpop.xlane.xlu0 %3125
      %v3127 = vmax.f32 %v2865, %v2866
      %3128 = vmax.xlane.f32.xlu0 %v3127
      %v3129 = vpop.xlane.xlu0 %3128
      %v3130 = vmax.f32 %v2867, %v2868
      %3131 = vmax.xlane.f32.xlu0 %v3130
      %v3132 = vpop.xlane.xlu0 %3131
      %v3133 = vmax.f32 %v2869, %v2870
      %3134 = vmax.xlane.f32.xlu0 %v3133
      %v3135 = vpop.xlane.xlu0 %3134
      %v3136 = vmax.f32 %v2871, %v2872
      %3137 = vmax.xlane.f32.xlu0 %v3136
      %v3138 = vpop.xlane.xlu0 %3137
      %v3139 = vmax.f32 %v2873, %v2874
      %3140 = vmax.xlane.f32.xlu0 %v3139
      %v3141 = vpop.xlane.xlu0 %3140
      %v3142 = vmax.f32 %v2875, %v2876
      %3143 = vmax.xlane.f32.xlu0 %v3142
      %v3144 = vpop.xlane.xlu0 %3143
      %v3145 = vmax.f32 %v2877, %v2878
      %3146 = vmax.xlane.f32.xlu0 %v3145
      %v3147 = vpop.xlane.xlu0 %3146
      %v3148 = vmax.f32 %v2879, %v2880
      %3149 = vmax.xlane.f32.xlu0 %v3148
      %v3150 = vpop.xlane.xlu0 %3149
      %v3151 = vmax.f32 %v2881, %v2882
      %3152 = vmax.xlane.f32.xlu0 %v3151
      %v3153 = vpop.xlane.xlu0 %3152
      %v3154 = vmax.f32 %v2883, %v2884
      %3155 = vmax.xlane.f32.xlu0 %v3154
      %v3156 = vpop.xlane.xlu0 %3155
      %v3157 = vmax.f32 %v2885, %v2886
      %3158 = vmax.xlane.f32.xlu0 %v3157
      %v3159 = vpop.xlane.xlu0 %3158
      %v3160 = vmax.f32 %v2887, %v2888
      %3161 = vmax.xlane.f32.xlu0 %v3160
      %v3162 = vpop.xlane.xlu0 %3161
      %v3163 = vmax.f32 %v2889, %v2890
      %3164 = vmax.xlane.f32.xlu0 %v3163
      %v3165 = vpop.xlane.xlu0 %3164
      %v3166 = vmax.f32 %v2891, %v2892
      %3167 = vmax.xlane.f32.xlu0 %v3166
      %v3168 = vpop.xlane.xlu0 %3167
      %v3169 = vmax.f32 %v2893, %v2894
      %3170 = vmax.xlane.f32.xlu0 %v3169
      %v3171 = vpop.xlane.xlu0 %3170
      %v3172 = vmax.f32 %v2895, %v2896
      %3173 = vmax.xlane.f32.xlu0 %v3172
      %v3174 = vpop.xlane.xlu0 %3173
      %v3175 = vmax.f32 %v2897, %v2898
      %3176 = vmax.xlane.f32.xlu0 %v3175
      %v3177 = vpop.xlane.xlu0 %3176
      %v3178 = vmax.f32 %v2899, %v2900
      %3179 = vmax.xlane.f32.xlu0 %v3178
      %v3180 = vpop.xlane.xlu0 %3179
      %v3181 = vmax.f32 %v2901, %v2902
      %3182 = vmax.xlane.f32.xlu0 %v3181
      %v3183 = vpop.xlane.xlu0 %3182
      %v3184 = vmax.f32 %v2903, %v2904
      %3185 = vmax.xlane.f32.xlu0 %v3184
      %v3186 = vpop.xlane.xlu0 %3185
      %v3187 = vmax.f32 %v2905, %v2906
      %3188 = vmax.xlane.f32.xlu0 %v3187
      %v3189 = vpop.xlane.xlu0 %3188
      %v3190 = vmax.f32 %v2907, %v2908
      %3191 = vmax.xlane.f32.xlu0 %v3190
      %v3192 = vpop.xlane.xlu0 %3191
      %v3193 = vmax.f32 %v2909, %v2910
      %3194 = vmax.xlane.f32.xlu0 %v3193
      %v3195 = vpop.xlane.xlu0 %3194
      %v3196 = vmax.f32 %v2911, %v2912
      %3197 = vmax.xlane.f32.xlu0 %v3196
      %v3198 = vpop.xlane.xlu0 %3197
      %v3199 = vmax.f32 %v2913, %v2914
      %3200 = vmax.xlane.f32.xlu0 %v3199
      %v3201 = vpop.xlane.xlu0 %3200
      %v3202 = vmax.f32 %v2915, %v2916
      %3203 = vmax.xlane.f32.xlu0 %v3202
      %v3204 = vpop.xlane.xlu0 %3203
      %v3205 = vmax.f32 %v2917, %v2918
      %3206 = vmax.xlane.f32.xlu0 %v3205
      %v3207 = vpop.xlane.xlu0 %3206
      %v3208 = vmax.f32 %v2919, %v2920
      %3209 = vmax.xlane.f32.xlu0 %v3208
      %v3210 = vpop.xlane.xlu0 %3209
      %v3211 = vmax.f32 %v2921, %v2922
      %3212 = vmax.xlane.f32.xlu0 %v3211
      %v3213 = vpop.xlane.xlu0 %3212
      %v3214 = vmax.f32 %v2923, %v2924
      %3215 = vmax.xlane.f32.xlu0 %v3214
      %v3216 = vpop.xlane.xlu0 %3215
      %v3217 = vmax.f32 %v2925, %v2926
      %3218 = vmax.xlane.f32.xlu0 %v3217
      %v3219 = vpop.xlane.xlu0 %3218
      %v3220 = vmax.f32 %v2927, %v2928
      %3221 = vmax.xlane.f32.xlu0 %v3220
      %v3222 = vpop.xlane.xlu0 %3221
      %v3223 = vmax.f32 %v2929, %v2930
      %3224 = vmax.xlane.f32.xlu0 %v3223
      %v3225 = vpop.xlane.xlu0 %3224
      %v3226 = vmax.f32 %v2931, %v2932
      %3227 = vmax.xlane.f32.xlu0 %v3226
      %v3228 = vpop.xlane.xlu0 %3227
      %v3229 = vmax.f32 %v2933, %v2934
      %3230 = vmax.xlane.f32.xlu0 %v3229
      %v3231 = vpop.xlane.xlu0 %3230
      %v3232 = vmax.f32 %v2935, %v2936
      %3233 = vmax.xlane.f32.xlu0 %v3232
      %v3234 = vpop.xlane.xlu0 %3233
      %v3235 = vmax.f32 %v2937, %v2938
      %3236 = vmax.xlane.f32.xlu0 %v3235
      %v3237 = vpop.xlane.xlu0 %3236
      %v3238 = vmax.f32 %v2939, %v2940
      %3239 = vmax.xlane.f32.xlu0 %v3238
      %v3240 = vpop.xlane.xlu0 %3239
      %v3241 = vmax.f32 %v2941, %v2942
      %3242 = vmax.xlane.f32.xlu0 %v3241
      %v3243 = vpop.xlane.xlu0 %3242
      %v3244 = vmax.f32 %v2943, %v2944
      %3245 = vmax.xlane.f32.xlu0 %v3244
      %v3246 = vpop.xlane.xlu0 %3245
      %v3247 = vmax.f32 %v2945, %v2946
      %3248 = vmax.xlane.f32.xlu0 %v3247
      %v3249 = vpop.xlane.xlu0 %3248
      %v3250 = vmax.f32 %v2947, %v2948
      %3251 = vmax.xlane.f32.xlu0 %v3250
      %v3252 = vpop.xlane.xlu0 %3251
      %v3253 = vmax.f32 %v2949, %v2950
      %3254 = vmax.xlane.f32.xlu0 %v3253
      %v3255 = vpop.xlane.xlu0 %3254
      %v3256 = vmax.f32 %v2951, %v2952
      %3257 = vmax.xlane.f32.xlu0 %v3256
      %v3258 = vpop.xlane.xlu0 %3257
      %v3259 = vmax.f32 %v2953, %v2954
      %3260 = vmax.xlane.f32.xlu0 %v3259
      %v3261 = vpop.xlane.xlu0 %3260
      %v3262 = vmax.f32 %v2955, %v2956
      %3263 = vmax.xlane.f32.xlu0 %v3262
      %v3264 = vpop.xlane.xlu0 %3263
      %v3265 = vmax.f32 %v2957, %v2958
      %3266 = vmax.xlane.f32.xlu0 %v3265
      %v3267 = vpop.xlane.xlu0 %3266
      %v3268 = vmax.f32 %v2959, %v2960
      %3269 = vmax.xlane.f32.xlu0 %v3268
      %v3270 = vpop.xlane.xlu0 %3269
      %v3271 = vmax.f32 %v2961, %v2962
      %3272 = vmax.xlane.f32.xlu0 %v3271
      %v3273 = vpop.xlane.xlu0 %3272
      %v3274 = vmax.f32 %v2963, %v2964
      %3275 = vmax.xlane.f32.xlu0 %v3274
      %v3276 = vpop.xlane.xlu0 %3275
      %v3277 = vmax.f32 %v2965, %v2966
      %3278 = vmax.xlane.f32.xlu0 %v3277
      %v3279 = vpop.xlane.xlu0 %3278
      %v3280 = vmax.f32 %v2967, %v2968
      %3281 = vmax.xlane.f32.xlu0 %v3280
      %v3282 = vpop.xlane.xlu0 %3281
      %v3283 = vmax.f32 %v2969, %v2970
      %3284 = vmax.xlane.f32.xlu0 %v3283
      %v3285 = vpop.xlane.xlu0 %3284
      %v3286 = vmax.f32 %v2971, %v2972
      %3287 = vmax.xlane.f32.xlu0 %v3286
      %v3288 = vpop.xlane.xlu0 %3287
      %v3289 = vmax.f32 %v2973, %v2974
      %3290 = vmax.xlane.f32.xlu0 %v3289
      %v3291 = vpop.xlane.xlu0 %3290
      %v3292 = vmax.f32 %v2975, %v2976
      %3293 = vmax.xlane.f32.xlu0 %v3292
      %v3294 = vpop.xlane.xlu0 %3293
      %v3295 = vmax.f32 %v2977, %v2978
      %3296 = vmax.xlane.f32.xlu0 %v3295
      %v3297 = vpop.xlane.xlu0 %3296
      %v3298 = vmax.f32 %v2979, %v2980
      %3299 = vmax.xlane.f32.xlu0 %v3298
      %v3300 = vpop.xlane.xlu0 %3299
      %v3301 = vmax.f32 %v2981, %v2982
      %3302 = vmax.xlane.f32.xlu0 %v3301
      %v3303 = vpop.xlane.xlu0 %3302
      %v3304 = vmax.f32 %v2983, %v2984
      %3305 = vmax.xlane.f32.xlu0 %v3304
      %v3306 = vpop.xlane.xlu0 %3305
      %v3307 = vmax.f32 %v2985, %v2986
      %3308 = vmax.xlane.f32.xlu0 %v3307
      %v3309 = vpop.xlane.xlu0 %3308
      %v3310 = vmax.f32 %v2987, %v2988
      %3311 = vmax.xlane.f32.xlu0 %v3310
      %v3312 = vpop.xlane.xlu0 %3311
      %v3313 = vmax.f32 %v2989, %v2990
      %3314 = vmax.xlane.f32.xlu0 %v3313
      %v3315 = vpop.xlane.xlu0 %3314
      %v3316 = vmax.f32 %v2991, %v2992
      %3317 = vmax.xlane.f32.xlu0 %v3316
      %v3318 = vpop.xlane.xlu0 %3317
      %v3319 = vmax.f32 %v2993, %v2994
      %3320 = vmax.xlane.f32.xlu0 %v3319
      %v3321 = vpop.xlane.xlu0 %3320
      %v3322 = vmax.f32 %v2995, %v2996
      %3323 = vmax.xlane.f32.xlu0 %v3322
      %v3324 = vpop.xlane.xlu0 %3323
      %v3325 = vmax.f32 %v2997, %v2998
      %3326 = vmax.xlane.f32.xlu0 %v3325
      %v3327 = vpop.xlane.xlu0 %3326
      %v3328 = vmax.f32 %v2999, %v3000
      %3329 = vmax.xlane.f32.xlu0 %v3328
      %v3330 = vpop.xlane.xlu0 %3329
      %v3331 = vmax.f32 %v3001, %v3002
      %3332 = vmax.xlane.f32.xlu0 %v3331
      %v3333 = vpop.xlane.xlu0 %3332
      %v3334 = vmax.f32 %v3003, %v3004
      %3335 = vmax.xlane.f32.xlu0 %v3334
      %v3336 = vpop.xlane.xlu0 %3335
      %v3337 = vmax.f32 %v3005, %v3006
      %3338 = vmax.xlane.f32.xlu0 %v3337
      %v3339 = vpop.xlane.xlu0 %3338
      %v3340 = vmax.f32 %v3007, %v3008
      %3341 = vmax.xlane.f32.xlu0 %v3340
      %v3342 = vpop.xlane.xlu0 %3341
      %v3343 = vmax.f32 %v3009, %v3010
      %3344 = vmax.xlane.f32.xlu0 %v3343
      %v3345 = vpop.xlane.xlu0 %3344
      %v3346 = vmax.f32 %v3011, %v3012
      %3347 = vmax.xlane.f32.xlu0 %v3346
      %v3348 = vpop.xlane.xlu0 %3347
      %v3349 = vmax.f32 %v3013, %v3014
      %3350 = vmax.xlane.f32.xlu0 %v3349
      %v3351 = vpop.xlane.xlu0 %3350
      %v3352 = vmax.f32 %v3015, %v3016
      %3353 = vmax.xlane.f32.xlu0 %v3352
      %v3354 = vpop.xlane.xlu0 %3353
      %v3355 = vmax.f32 %v3017, %v3018
      %3356 = vmax.xlane.f32.xlu0 %v3355
      %v3357 = vpop.xlane.xlu0 %3356
      %v3358 = vmax.f32 %v3019, %v3020
      %3359 = vmax.xlane.f32.xlu0 %v3358
      %v3360 = vpop.xlane.xlu0 %3359
      %v3361 = vmax.f32 %v3021, %v3022
      %3362 = vmax.xlane.f32.xlu0 %v3361
      %v3363 = vpop.xlane.xlu0 %3362
      %v3364 = vmax.f32 %v3023, %v3024
      %3365 = vmax.xlane.f32.xlu0 %v3364
      %v3366 = vpop.xlane.xlu0 %3365
      %v3367 = vmax.f32 %v3025, %v3026
      %3368 = vmax.xlane.f32.xlu0 %v3367
      %v3369 = vpop.xlane.xlu0 %3368
      %v3370 = vmax.f32 %v3027, %v3028
      %3371 = vmax.xlane.f32.xlu0 %v3370
      %v3372 = vpop.xlane.xlu0 %3371
      %v3373 = vmax.f32 %v3029, %v3030
      %3374 = vmax.xlane.f32.xlu0 %v3373
      %v3375 = vpop.xlane.xlu0 %3374
      %v3376 = vmax.f32 %v3031, %v3032
      %3377 = vmax.xlane.f32.xlu0 %v3376
      %v3378 = vpop.xlane.xlu0 %3377
      %v3379 = vmax.f32 %v3033, %v3034
      %3380 = vmax.xlane.f32.xlu0 %v3379
      %v3381 = vpop.xlane.xlu0 %3380
      %v3382 = vmax.f32 %v3035, %v3036
      %3383 = vmax.xlane.f32.xlu0 %v3382
      %v3384 = vpop.xlane.xlu0 %3383
      %v3385 = vmax.f32 %v3037, %v3038
      %3386 = vmax.xlane.f32.xlu0 %v3385
      %v3387 = vpop.xlane.xlu0 %3386
      %v3388 = vmax.f32 %v3039, %v3040
      %3389 = vmax.xlane.f32.xlu0 %v3388
      %v3390 = vpop.xlane.xlu0 %3389
      %v3391 = vmax.f32 %v3041, %v3042
      %3392 = vmax.xlane.f32.xlu0 %v3391
      %v3393 = vpop.xlane.xlu0 %3392
      %v3394 = vmax.f32 %v3043, %v3044
      %3395 = vmax.xlane.f32.xlu0 %v3394
      %v3396 = vpop.xlane.xlu0 %3395
      %v3397 = vmax.f32 %v3045, %v3046
      %3398 = vmax.xlane.f32.xlu0 %v3397
      %v3399 = vpop.xlane.xlu0 %3398
      %v3400 = vmax.f32 %v3047, %v3048
      %3401 = vmax.xlane.f32.xlu0 %v3400
      %v3402 = vpop.xlane.xlu0 %3401
      %v3403 = vmax.f32 %v3049, %v3050
      %3404 = vmax.xlane.f32.xlu0 %v3403
      %v3405 = vpop.xlane.xlu0 %3404
      %v3406 = vmax.f32 %v3051, %v3052
      %3407 = vmax.xlane.f32.xlu0 %v3406
      %v3408 = vpop.xlane.xlu0 %3407
      %v3409 = vmax.f32 %v3053, %v3054
      %3410 = vmax.xlane.f32.xlu0 %v3409
      %v3411 = vpop.xlane.xlu0 %3410
      %v3412 = vmax.f32 %v3055, %v3056
      %3413 = vmax.xlane.f32.xlu0 %v3412
      %v3414 = vpop.xlane.xlu0 %3413
      %v3415 = vmax.f32 %v3057, %v3058
      %3416 = vmax.xlane.f32.xlu0 %v3415
      %v3417 = vpop.xlane.xlu0 %3416
      %v3418 = vmax.f32 %v3059, %v3060
      %3419 = vmax.xlane.f32.xlu0 %v3418
      %v3420 = vpop.xlane.xlu0 %3419
      %v3421 = vmax.f32 %v3061, %v3062
      %3422 = vmax.xlane.f32.xlu0 %v3421
      %v3423 = vpop.xlane.xlu0 %3422
      %v3424 = vmax.f32 %v3063, %v3064
      %3425 = vmax.xlane.f32.xlu0 %v3424
      %v3426 = vpop.xlane.xlu0 %3425
      %v3427 = vmax.f32 %v3065, %v3066
      %3428 = vmax.xlane.f32.xlu0 %v3427
      %v3429 = vpop.xlane.xlu0 %3428
      %v3430 = vmax.f32 %v3067, %v3068
      %3431 = vmax.xlane.f32.xlu0 %v3430
      %v3432 = vpop.xlane.xlu0 %3431
      %v3433 = vmax.f32 %v3069, %v3070
      %3434 = vmax.xlane.f32.xlu0 %v3433
      %v3435 = vpop.xlane.xlu0 %3434
      %v3436 = vmax.f32 %v3071, %v3072
      %3437 = vmax.xlane.f32.xlu0 %v3436
      %v3438 = vpop.xlane.xlu0 %3437
      %v3439 = vmax.f32 %v3073, %v3074
      %3440 = vmax.xlane.f32.xlu0 %v3439
      %v3441 = vpop.xlane.xlu0 %3440
      %v3442 = vmax.f32 %v3075, %v3076
      %3443 = vmax.xlane.f32.xlu0 %v3442
      %v3444 = vpop.xlane.xlu0 %3443
      %v3445 = vmax.f32 %v3077, %v3078
      %3446 = vmax.xlane.f32.xlu0 %v3445
      %v3447 = vpop.xlane.xlu0 %3446
      %v3448 = vmax.f32 %v3079, %v3080
      %3449 = vmax.xlane.f32.xlu0 %v3448
      %v3450 = vpop.xlane.xlu0 %3449
      %v3451 = vmax.f32 %v3081, %v3082
      %3452 = vmax.xlane.f32.xlu0 %v3451
      %v3453 = vpop.xlane.xlu0 %3452
      %v3454 = vmax.f32 %v3083, %v3084
      %3455 = vmax.xlane.f32.xlu0 %v3454
      %v3456 = vpop.xlane.xlu0 %3455
      %v3457 = vmax.f32 %v3085, %v3086
      %3458 = vmax.xlane.f32.xlu0 %v3457
      %v3459 = vpop.xlane.xlu0 %3458
      %v3460 = vmax.f32 %v3087, %v3088
      %3461 = vmax.xlane.f32.xlu0 %v3460
      %v3462 = vpop.xlane.xlu0 %3461
      %v3463 = vmax.f32 %v3089, %v3090
      %3464 = vmax.xlane.f32.xlu0 %v3463
      %v3465 = vpop.xlane.xlu0 %3464
      %v3466 = vmax.f32 %v3091, %v3092
      %3467 = vmax.xlane.f32.xlu0 %v3466
      %v3468 = vpop.xlane.xlu0 %3467
      %v3469 = vmax.f32 %v3093, %v3094
      %3470 = vmax.xlane.f32.xlu0 %v3469
      %v3471 = vpop.xlane.xlu0 %3470
      %v3472 = vmax.f32 %v3095, %v3096
      %3473 = vmax.xlane.f32.xlu0 %v3472
      %v3474 = vpop.xlane.xlu0 %3473
      %v3475 = vmax.f32 %v3097, %v3098
      %3476 = vmax.xlane.f32.xlu0 %v3475
      %v3477 = vpop.xlane.xlu0 %3476
      %v3478 = vmax.f32 %v3099, %v3100
      %3479 = vmax.xlane.f32.xlu0 %v3478
      %v3480 = vpop.xlane.xlu0 %3479
      %v3481 = vmax.f32 %v3101, %v3102
      %3482 = vmax.xlane.f32.xlu0 %v3481
      %v3483 = vpop.xlane.xlu0 %3482
      %v3484 = vmax.f32 %v3103, %v3104
      %3485 = vmax.xlane.f32.xlu0 %v3484
      %v3486 = vpop.xlane.xlu0 %3485
      %v3487 = vmax.f32 %v3105, %v3106
      %3488 = vmax.xlane.f32.xlu0 %v3487
      %v3489 = vpop.xlane.xlu0 %3488
      %v3490 = vmax.f32 %v3107, %v3108
      %3491 = vmax.xlane.f32.xlu0 %v3490
      %v3492 = vpop.xlane.xlu0 %3491
      %p3493 = scmp.eq.s32.totalorder %s23, 0
      // Predicated region
      $region49: #{tpu_custom_call.1} parent=47 // pred_check
        %p3494 = pneg %p3493
      $region50: #{tpu_custom_call.1} parent=47 // pred_check_branch
        %3496 = sbr.rel (%p3494) target = $region52
      $region51: #{tpu_custom_call.1} parent=47 // pred_region
        %vm3497 = vcmask 7168
        %3498 = vst.msk [vmem:[%s306] sm:$0xff] %vm3497, 0.0
        %3499 = vst.msk [vmem:[%s306 + $0x8] sm:$0xff] %vm3497, 0.0
        %3500 = vst.msk [vmem:[%s306 + $0x10] sm:$0xff] %vm3497, 0.0
        %3501 = vst.msk [vmem:[%s306 + $0x18] sm:$0xff] %vm3497, 0.0
        %3502 = vst.msk [vmem:[%s306 + $0x20] sm:$0xff] %vm3497, 0.0
        %3503 = vst.msk [vmem:[%s306 + $0x28] sm:$0xff] %vm3497, 0.0
        %3504 = vst.msk [vmem:[%s306 + $0x30] sm:$0xff] %vm3497, 0.0
        %3505 = vst.msk [vmem:[%s306 + $0x38] sm:$0xff] %vm3497, 0.0
        %3506 = vst.msk [vmem:[%s306 + $0x40] sm:$0xff] %vm3497, 0.0
        %3507 = vst.msk [vmem:[%s306 + $0x48] sm:$0xff] %vm3497, 0.0
        %3508 = vst.msk [vmem:[%s306 + $0x50] sm:$0xff] %vm3497, 0.0
        %3509 = vst.msk [vmem:[%s306 + $0x58] sm:$0xff] %vm3497, 0.0
        %3510 = vst.msk [vmem:[%s306 + $0x60] sm:$0xff] %vm3497, 0.0
        %3511 = vst.msk [vmem:[%s306 + $0x68] sm:$0xff] %vm3497, 0.0
        %3512 = vst.msk [vmem:[%s306 + $0x70] sm:$0xff] %vm3497, 0.0
        %3513 = vst.msk [vmem:[%s306 + $0x78] sm:$0xff] %vm3497, 0.0
        %3514 = vst.msk [vmem:[%s306 + $0x80] sm:$0xff] %vm3497, 0.0
        %3515 = vst.msk [vmem:[%s306 + $0x88] sm:$0xff] %vm3497, 0.0
        %3516 = vst.msk [vmem:[%s306 + $0x90] sm:$0xff] %vm3497, 0.0
        %3517 = vst.msk [vmem:[%s306 + $0x98] sm:$0xff] %vm3497, 0.0
        %3518 = vst.msk [vmem:[%s306 + $0xa0] sm:$0xff] %vm3497, 0.0
        %3519 = vst.msk [vmem:[%s306 + $0xa8] sm:$0xff] %vm3497, 0.0
        %3520 = vst.msk [vmem:[%s306 + $0xb0] sm:$0xff] %vm3497, 0.0
        %3521 = vst.msk [vmem:[%s306 + $0xb8] sm:$0xff] %vm3497, 0.0
        %3522 = vst.msk [vmem:[%s306 + $0xc0] sm:$0xff] %vm3497, 0.0
        %3523 = vst.msk [vmem:[%s306 + $0xc8] sm:$0xff] %vm3497, 0.0
        %3524 = vst.msk [vmem:[%s306 + $0xd0] sm:$0xff] %vm3497, 0.0
        %3525 = vst.msk [vmem:[%s306 + $0xd8] sm:$0xff] %vm3497, 0.0
        %3526 = vst.msk [vmem:[%s306 + $0xe0] sm:$0xff] %vm3497, 0.0
        %3527 = vst.msk [vmem:[%s306 + $0xe8] sm:$0xff] %vm3497, 0.0
        %3528 = vst.msk [vmem:[%s306 + $0xf0] sm:$0xff] %vm3497, 0.0
        %3529 = vst.msk [vmem:[%s306 + $0xf8] sm:$0xff] %vm3497, 0.0
        %3530 = vst.msk [vmem:[%s306 + $0x100] sm:$0xff] %vm3497, 0.0
        %3531 = vst.msk [vmem:[%s306 + $0x108] sm:$0xff] %vm3497, 0.0
        %3532 = vst.msk [vmem:[%s306 + $0x110] sm:$0xff] %vm3497, 0.0
        %3533 = vst.msk [vmem:[%s306 + $0x118] sm:$0xff] %vm3497, 0.0
        %3534 = vst.msk [vmem:[%s306 + $0x120] sm:$0xff] %vm3497, 0.0
        %3535 = vst.msk [vmem:[%s306 + $0x128] sm:$0xff] %vm3497, 0.0
        %3536 = vst.msk [vmem:[%s306 + $0x130] sm:$0xff] %vm3497, 0.0
        %3537 = vst.msk [vmem:[%s306 + $0x138] sm:$0xff] %vm3497, 0.0
        %3538 = vst.msk [vmem:[%s306 + $0x140] sm:$0xff] %vm3497, 0.0
        %3539 = vst.msk [vmem:[%s306 + $0x148] sm:$0xff] %vm3497, 0.0
        %3540 = vst.msk [vmem:[%s306 + $0x150] sm:$0xff] %vm3497, 0.0
        %3541 = vst.msk [vmem:[%s306 + $0x158] sm:$0xff] %vm3497, 0.0
        %3542 = vst.msk [vmem:[%s306 + $0x160] sm:$0xff] %vm3497, 0.0
        %3543 = vst.msk [vmem:[%s306 + $0x168] sm:$0xff] %vm3497, 0.0
        %3544 = vst.msk [vmem:[%s306 + $0x170] sm:$0xff] %vm3497, 0.0
        %3545 = vst.msk [vmem:[%s306 + $0x178] sm:$0xff] %vm3497, 0.0
        %3546 = vst.msk [vmem:[%s306 + $0x180] sm:$0xff] %vm3497, 0.0
        %3547 = vst.msk [vmem:[%s306 + $0x188] sm:$0xff] %vm3497, 0.0
        %3548 = vst.msk [vmem:[%s306 + $0x190] sm:$0xff] %vm3497, 0.0
        %3549 = vst.msk [vmem:[%s306 + $0x198] sm:$0xff] %vm3497, 0.0
        %3550 = vst.msk [vmem:[%s306 + $0x1a0] sm:$0xff] %vm3497, 0.0
        %3551 = vst.msk [vmem:[%s306 + $0x1a8] sm:$0xff] %vm3497, 0.0
        %3552 = vst.msk [vmem:[%s306 + $0x1b0] sm:$0xff] %vm3497, 0.0
        %3553 = vst.msk [vmem:[%s306 + $0x1b8] sm:$0xff] %vm3497, 0.0
        %3554 = vst.msk [vmem:[%s306 + $0x1c0] sm:$0xff] %vm3497, 0.0
        %3555 = vst.msk [vmem:[%s306 + $0x1c8] sm:$0xff] %vm3497, 0.0
        %3556 = vst.msk [vmem:[%s306 + $0x1d0] sm:$0xff] %vm3497, 0.0
        %3557 = vst.msk [vmem:[%s306 + $0x1d8] sm:$0xff] %vm3497, 0.0
        %3558 = vst.msk [vmem:[%s306 + $0x1e0] sm:$0xff] %vm3497, 0.0
        %3559 = vst.msk [vmem:[%s306 + $0x1e8] sm:$0xff] %vm3497, 0.0
        %3560 = vst.msk [vmem:[%s306 + $0x1f0] sm:$0xff] %vm3497, 0.0
        %3561 = vst.msk [vmem:[%s306 + $0x1f8] sm:$0xff] %vm3497, 0.0
        %3562 = vst.msk [vmem:[%s306 + $0x200] sm:$0xff] %vm3497, 0.0
        %3563 = vst.msk [vmem:[%s306 + $0x208] sm:$0xff] %vm3497, 0.0
        %3564 = vst.msk [vmem:[%s306 + $0x210] sm:$0xff] %vm3497, 0.0
        %3565 = vst.msk [vmem:[%s306 + $0x218] sm:$0xff] %vm3497, 0.0
        %3566 = vst.msk [vmem:[%s306 + $0x220] sm:$0xff] %vm3497, 0.0
        %3567 = vst.msk [vmem:[%s306 + $0x228] sm:$0xff] %vm3497, 0.0
        %3568 = vst.msk [vmem:[%s306 + $0x230] sm:$0xff] %vm3497, 0.0
        %3569 = vst.msk [vmem:[%s306 + $0x238] sm:$0xff] %vm3497, 0.0
        %3570 = vst.msk [vmem:[%s306 + $0x240] sm:$0xff] %vm3497, 0.0
        %3571 = vst.msk [vmem:[%s306 + $0x248] sm:$0xff] %vm3497, 0.0
        %3572 = vst.msk [vmem:[%s306 + $0x250] sm:$0xff] %vm3497, 0.0
        %3573 = vst.msk [vmem:[%s306 + $0x258] sm:$0xff] %vm3497, 0.0
        %3574 = vst.msk [vmem:[%s306 + $0x260] sm:$0xff] %vm3497, 0.0
        %3575 = vst.msk [vmem:[%s306 + $0x268] sm:$0xff] %vm3497, 0.0
        %3576 = vst.msk [vmem:[%s306 + $0x270] sm:$0xff] %vm3497, 0.0
        %3577 = vst.msk [vmem:[%s306 + $0x278] sm:$0xff] %vm3497, 0.0
        %3578 = vst.msk [vmem:[%s306 + $0x280] sm:$0xff] %vm3497, 0.0
        %3579 = vst.msk [vmem:[%s306 + $0x288] sm:$0xff] %vm3497, 0.0
        %3580 = vst.msk [vmem:[%s306 + $0x290] sm:$0xff] %vm3497, 0.0
        %3581 = vst.msk [vmem:[%s306 + $0x298] sm:$0xff] %vm3497, 0.0
        %3582 = vst.msk [vmem:[%s306 + $0x2a0] sm:$0xff] %vm3497, 0.0
        %3583 = vst.msk [vmem:[%s306 + $0x2a8] sm:$0xff] %vm3497, 0.0
        %3584 = vst.msk [vmem:[%s306 + $0x2b0] sm:$0xff] %vm3497, 0.0
        %3585 = vst.msk [vmem:[%s306 + $0x2b8] sm:$0xff] %vm3497, 0.0
        %3586 = vst.msk [vmem:[%s306 + $0x2c0] sm:$0xff] %vm3497, 0.0
        %3587 = vst.msk [vmem:[%s306 + $0x2c8] sm:$0xff] %vm3497, 0.0
        %3588 = vst.msk [vmem:[%s306 + $0x2d0] sm:$0xff] %vm3497, 0.0
        %3589 = vst.msk [vmem:[%s306 + $0x2d8] sm:$0xff] %vm3497, 0.0
        %3590 = vst.msk [vmem:[%s306 + $0x2e0] sm:$0xff] %vm3497, 0.0
        %3591 = vst.msk [vmem:[%s306 + $0x2e8] sm:$0xff] %vm3497, 0.0
        %3592 = vst.msk [vmem:[%s306 + $0x2f0] sm:$0xff] %vm3497, 0.0
        %3593 = vst.msk [vmem:[%s306 + $0x2f8] sm:$0xff] %vm3497, 0.0
        %3594 = vst.msk [vmem:[%s306 + $0x300] sm:$0xff] %vm3497, 0.0
        %3595 = vst.msk [vmem:[%s306 + $0x308] sm:$0xff] %vm3497, 0.0
        %3596 = vst.msk [vmem:[%s306 + $0x310] sm:$0xff] %vm3497, 0.0
        %3597 = vst.msk [vmem:[%s306 + $0x318] sm:$0xff] %vm3497, 0.0
        %3598 = vst.msk [vmem:[%s306 + $0x320] sm:$0xff] %vm3497, 0.0
        %3599 = vst.msk [vmem:[%s306 + $0x328] sm:$0xff] %vm3497, 0.0
        %3600 = vst.msk [vmem:[%s306 + $0x330] sm:$0xff] %vm3497, 0.0
        %3601 = vst.msk [vmem:[%s306 + $0x338] sm:$0xff] %vm3497, 0.0
        %3602 = vst.msk [vmem:[%s306 + $0x340] sm:$0xff] %vm3497, 0.0
        %3603 = vst.msk [vmem:[%s306 + $0x348] sm:$0xff] %vm3497, 0.0
        %3604 = vst.msk [vmem:[%s306 + $0x350] sm:$0xff] %vm3497, 0.0
        %3605 = vst.msk [vmem:[%s306 + $0x358] sm:$0xff] %vm3497, 0.0
        %3606 = vst.msk [vmem:[%s306 + $0x360] sm:$0xff] %vm3497, 0.0
        %3607 = vst.msk [vmem:[%s306 + $0x368] sm:$0xff] %vm3497, 0.0
        %3608 = vst.msk [vmem:[%s306 + $0x370] sm:$0xff] %vm3497, 0.0
        %3609 = vst.msk [vmem:[%s306 + $0x378] sm:$0xff] %vm3497, 0.0
        %3610 = vst.msk [vmem:[%s306 + $0x380] sm:$0xff] %vm3497, 0.0
        %3611 = vst.msk [vmem:[%s306 + $0x388] sm:$0xff] %vm3497, 0.0
        %3612 = vst.msk [vmem:[%s306 + $0x390] sm:$0xff] %vm3497, 0.0
        %3613 = vst.msk [vmem:[%s306 + $0x398] sm:$0xff] %vm3497, 0.0
        %3614 = vst.msk [vmem:[%s306 + $0x3a0] sm:$0xff] %vm3497, 0.0
        %3615 = vst.msk [vmem:[%s306 + $0x3a8] sm:$0xff] %vm3497, 0.0
        %3616 = vst.msk [vmem:[%s306 + $0x3b0] sm:$0xff] %vm3497, 0.0
        %3617 = vst.msk [vmem:[%s306 + $0x3b8] sm:$0xff] %vm3497, 0.0
        %3618 = vst.msk [vmem:[%s306 + $0x3c0] sm:$0xff] %vm3497, 0.0
        %3619 = vst.msk [vmem:[%s306 + $0x3c8] sm:$0xff] %vm3497, 0.0
        %3620 = vst.msk [vmem:[%s306 + $0x3d0] sm:$0xff] %vm3497, 0.0
        %3621 = vst.msk [vmem:[%s306 + $0x3d8] sm:$0xff] %vm3497, 0.0
        %3622 = vst.msk [vmem:[%s306 + $0x3e0] sm:$0xff] %vm3497, 0.0
        %3623 = vst.msk [vmem:[%s306 + $0x3e8] sm:$0xff] %vm3497, 0.0
        %3624 = vst.msk [vmem:[%s306 + $0x3f0] sm:$0xff] %vm3497, 0.0
        %3625 = vst.msk [vmem:[%s306 + $0x3f8] sm:$0xff] %vm3497, 0.0
      $region52: #{tpu_custom_call.1} parent=47 // pred_fallthru
        _
      %v3626 = vld [vmem:[%s306] sm:$0xff]
      %v3627 = vld [vmem:[%s306 + $0x8] sm:$0xff]
      %v3628 = vld [vmem:[%s306 + $0x10] sm:$0xff]
      %v3629 = vld [vmem:[%s306 + $0x18] sm:$0xff]
      %v3630 = vld [vmem:[%s306 + $0x20] sm:$0xff]
      %v3631 = vld [vmem:[%s306 + $0x28] sm:$0xff]
      %v3632 = vld [vmem:[%s306 + $0x30] sm:$0xff]
      %v3633 = vld [vmem:[%s306 + $0x38] sm:$0xff]
      %v3634 = vld [vmem:[%s306 + $0x40] sm:$0xff]
      %v3635 = vld [vmem:[%s306 + $0x48] sm:$0xff]
      %v3636 = vld [vmem:[%s306 + $0x50] sm:$0xff]
      %v3637 = vld [vmem:[%s306 + $0x58] sm:$0xff]
      %v3638 = vld [vmem:[%s306 + $0x60] sm:$0xff]
      %v3639 = vld [vmem:[%s306 + $0x68] sm:$0xff]
      %v3640 = vld [vmem:[%s306 + $0x70] sm:$0xff]
      %v3641 = vld [vmem:[%s306 + $0x78] sm:$0xff]
      %v3642 = vld [vmem:[%s306 + $0x80] sm:$0xff]
      %v3643 = vld [vmem:[%s306 + $0x88] sm:$0xff]
      %v3644 = vld [vmem:[%s306 + $0x90] sm:$0xff]
      %v3645 = vld [vmem:[%s306 + $0x98] sm:$0xff]
      %v3646 = vld [vmem:[%s306 + $0xa0] sm:$0xff]
      %v3647 = vld [vmem:[%s306 + $0xa8] sm:$0xff]
      %v3648 = vld [vmem:[%s306 + $0xb0] sm:$0xff]
      %v3649 = vld [vmem:[%s306 + $0xb8] sm:$0xff]
      %v3650 = vld [vmem:[%s306 + $0xc0] sm:$0xff]
      %v3651 = vld [vmem:[%s306 + $0xc8] sm:$0xff]
      %v3652 = vld [vmem:[%s306 + $0xd0] sm:$0xff]
      %v3653 = vld [vmem:[%s306 + $0xd8] sm:$0xff]
      %v3654 = vld [vmem:[%s306 + $0xe0] sm:$0xff]
      %v3655 = vld [vmem:[%s306 + $0xe8] sm:$0xff]
      %v3656 = vld [vmem:[%s306 + $0xf0] sm:$0xff]
      %v3657 = vld [vmem:[%s306 + $0xf8] sm:$0xff]
      %v3658 = vld [vmem:[%s306 + $0x100] sm:$0xff]
      %v3659 = vld [vmem:[%s306 + $0x108] sm:$0xff]
      %v3660 = vld [vmem:[%s306 + $0x110] sm:$0xff]
      %v3661 = vld [vmem:[%s306 + $0x118] sm:$0xff]
      %v3662 = vld [vmem:[%s306 + $0x120] sm:$0xff]
      %v3663 = vld [vmem:[%s306 + $0x128] sm:$0xff]
      %v3664 = vld [vmem:[%s306 + $0x130] sm:$0xff]
      %v3665 = vld [vmem:[%s306 + $0x138] sm:$0xff]
      %v3666 = vld [vmem:[%s306 + $0x140] sm:$0xff]
      %v3667 = vld [vmem:[%s306 + $0x148] sm:$0xff]
      %v3668 = vld [vmem:[%s306 + $0x150] sm:$0xff]
      %v3669 = vld [vmem:[%s306 + $0x158] sm:$0xff]
      %v3670 = vld [vmem:[%s306 + $0x160] sm:$0xff]
      %v3671 = vld [vmem:[%s306 + $0x168] sm:$0xff]
      %v3672 = vld [vmem:[%s306 + $0x170] sm:$0xff]
      %v3673 = vld [vmem:[%s306 + $0x178] sm:$0xff]
      %v3674 = vld [vmem:[%s306 + $0x180] sm:$0xff]
      %v3675 = vld [vmem:[%s306 + $0x188] sm:$0xff]
      %v3676 = vld [vmem:[%s306 + $0x190] sm:$0xff]
      %v3677 = vld [vmem:[%s306 + $0x198] sm:$0xff]
      %v3678 = vld [vmem:[%s306 + $0x1a0] sm:$0xff]
      %v3679 = vld [vmem:[%s306 + $0x1a8] sm:$0xff]
      %v3680 = vld [vmem:[%s306 + $0x1b0] sm:$0xff]
      %v3681 = vld [vmem:[%s306 + $0x1b8] sm:$0xff]
      %v3682 = vld [vmem:[%s306 + $0x1c0] sm:$0xff]
      %v3683 = vld [vmem:[%s306 + $0x1c8] sm:$0xff]
      %v3684 = vld [vmem:[%s306 + $0x1d0] sm:$0xff]
      %v3685 = vld [vmem:[%s306 + $0x1d8] sm:$0xff]
      %v3686 = vld [vmem:[%s306 + $0x1e0] sm:$0xff]
      %v3687 = vld [vmem:[%s306 + $0x1e8] sm:$0xff]
      %v3688 = vld [vmem:[%s306 + $0x1f0] sm:$0xff]
      %v3689 = vld [vmem:[%s306 + $0x1f8] sm:$0xff]
      %v3690 = vld [vmem:[%s306 + $0x200] sm:$0xff]
      %v3691 = vld [vmem:[%s306 + $0x208] sm:$0xff]
      %v3692 = vld [vmem:[%s306 + $0x210] sm:$0xff]
      %v3693 = vld [vmem:[%s306 + $0x218] sm:$0xff]
      %v3694 = vld [vmem:[%s306 + $0x220] sm:$0xff]
      %v3695 = vld [vmem:[%s306 + $0x228] sm:$0xff]
      %v3696 = vld [vmem:[%s306 + $0x230] sm:$0xff]
      %v3697 = vld [vmem:[%s306 + $0x238] sm:$0xff]
      %v3698 = vld [vmem:[%s306 + $0x240] sm:$0xff]
      %v3699 = vld [vmem:[%s306 + $0x248] sm:$0xff]
      %v3700 = vld [vmem:[%s306 + $0x250] sm:$0xff]
      %v3701 = vld [vmem:[%s306 + $0x258] sm:$0xff]
      %v3702 = vld [vmem:[%s306 + $0x260] sm:$0xff]
      %v3703 = vld [vmem:[%s306 + $0x268] sm:$0xff]
      %v3704 = vld [vmem:[%s306 + $0x270] sm:$0xff]
      %v3705 = vld [vmem:[%s306 + $0x278] sm:$0xff]
      %v3706 = vld [vmem:[%s306 + $0x280] sm:$0xff]
      %v3707 = vld [vmem:[%s306 + $0x288] sm:$0xff]
      %v3708 = vld [vmem:[%s306 + $0x290] sm:$0xff]
      %v3709 = vld [vmem:[%s306 + $0x298] sm:$0xff]
      %v3710 = vld [vmem:[%s306 + $0x2a0] sm:$0xff]
      %v3711 = vld [vmem:[%s306 + $0x2a8] sm:$0xff]
      %v3712 = vld [vmem:[%s306 + $0x2b0] sm:$0xff]
      %v3713 = vld [vmem:[%s306 + $0x2b8] sm:$0xff]
      %v3714 = vld [vmem:[%s306 + $0x2c0] sm:$0xff]
      %v3715 = vld [vmem:[%s306 + $0x2c8] sm:$0xff]
      %v3716 = vld [vmem:[%s306 + $0x2d0] sm:$0xff]
      %v3717 = vld [vmem:[%s306 + $0x2d8] sm:$0xff]
      %v3718 = vld [vmem:[%s306 + $0x2e0] sm:$0xff]
      %v3719 = vld [vmem:[%s306 + $0x2e8] sm:$0xff]
      %v3720 = vld [vmem:[%s306 + $0x2f0] sm:$0xff]
      %v3721 = vld [vmem:[%s306 + $0x2f8] sm:$0xff]
      %v3722 = vld [vmem:[%s306 + $0x300] sm:$0xff]
      %v3723 = vld [vmem:[%s306 + $0x308] sm:$0xff]
      %v3724 = vld [vmem:[%s306 + $0x310] sm:$0xff]
      %v3725 = vld [vmem:[%s306 + $0x318] sm:$0xff]
      %v3726 = vld [vmem:[%s306 + $0x320] sm:$0xff]
      %v3727 = vld [vmem:[%s306 + $0x328] sm:$0xff]
      %v3728 = vld [vmem:[%s306 + $0x330] sm:$0xff]
      %v3729 = vld [vmem:[%s306 + $0x338] sm:$0xff]
      %v3730 = vld [vmem:[%s306 + $0x340] sm:$0xff]
      %v3731 = vld [vmem:[%s306 + $0x348] sm:$0xff]
      %v3732 = vld [vmem:[%s306 + $0x350] sm:$0xff]
      %v3733 = vld [vmem:[%s306 + $0x358] sm:$0xff]
      %v3734 = vld [vmem:[%s306 + $0x360] sm:$0xff]
      %v3735 = vld [vmem:[%s306 + $0x368] sm:$0xff]
      %v3736 = vld [vmem:[%s306 + $0x370] sm:$0xff]
      %v3737 = vld [vmem:[%s306 + $0x378] sm:$0xff]
      %v3738 = vld [vmem:[%s306 + $0x380] sm:$0xff]
      %v3739 = vld [vmem:[%s306 + $0x388] sm:$0xff]
      %v3740 = vld [vmem:[%s306 + $0x390] sm:$0xff]
      %v3741 = vld [vmem:[%s306 + $0x398] sm:$0xff]
      %v3742 = vld [vmem:[%s306 + $0x3a0] sm:$0xff]
      %v3743 = vld [vmem:[%s306 + $0x3a8] sm:$0xff]
      %v3744 = vld [vmem:[%s306 + $0x3b0] sm:$0xff]
      %v3745 = vld [vmem:[%s306 + $0x3b8] sm:$0xff]
      %v3746 = vld [vmem:[%s306 + $0x3c0] sm:$0xff]
      %v3747 = vld [vmem:[%s306 + $0x3c8] sm:$0xff]
      %v3748 = vld [vmem:[%s306 + $0x3d0] sm:$0xff]
      %v3749 = vld [vmem:[%s306 + $0x3d8] sm:$0xff]
      %v3750 = vld [vmem:[%s306 + $0x3e0] sm:$0xff]
      %v3751 = vld [vmem:[%s306 + $0x3e8] sm:$0xff]
      %v3752 = vld [vmem:[%s306 + $0x3f0] sm:$0xff]
      %v3753 = vld [vmem:[%s306 + $0x3f8] sm:$0xff]
      %v3754 = vmax.f32 %v3626, %v3111
      %v3755 = vmax.f32 %v3627, %v3114
      %v3756 = vmax.f32 %v3628, %v3117
      %v3757 = vmax.f32 %v3629, %v3120
      %v3758 = vmax.f32 %v3630, %v3123
      %v3759 = vmax.f32 %v3631, %v3126
      %v3760 = vmax.f32 %v3632, %v3129
      %v3761 = vmax.f32 %v3633, %v3132
      %v3762 = vmax.f32 %v3634, %v3135
      %v3763 = vmax.f32 %v3635, %v3138
      %v3764 = vmax.f32 %v3636, %v3141
      %v3765 = vmax.f32 %v3637, %v3144
      %v3766 = vmax.f32 %v3638, %v3147
      %v3767 = vmax.f32 %v3639, %v3150
      %v3768 = vmax.f32 %v3640, %v3153
      %v3769 = vmax.f32 %v3641, %v3156
      %v3770 = vmax.f32 %v3642, %v3159
      %v3771 = vmax.f32 %v3643, %v3162
      %v3772 = vmax.f32 %v3644, %v3165
      %v3773 = vmax.f32 %v3645, %v3168
      %v3774 = vmax.f32 %v3646, %v3171
      %v3775 = vmax.f32 %v3647, %v3174
      %v3776 = vmax.f32 %v3648, %v3177
      %v3777 = vmax.f32 %v3649, %v3180
      %v3778 = vmax.f32 %v3650, %v3183
      %v3779 = vmax.f32 %v3651, %v3186
      %v3780 = vmax.f32 %v3652, %v3189
      %v3781 = vmax.f32 %v3653, %v3192
      %v3782 = vmax.f32 %v3654, %v3195
      %v3783 = vmax.f32 %v3655, %v3198
      %v3784 = vmax.f32 %v3656, %v3201
      %v3785 = vmax.f32 %v3657, %v3204
      %v3786 = vmax.f32 %v3658, %v3207
      %v3787 = vmax.f32 %v3659, %v3210
      %v3788 = vmax.f32 %v3660, %v3213
      %v3789 = vmax.f32 %v3661, %v3216
      %v3790 = vmax.f32 %v3662, %v3219
      %v3791 = vmax.f32 %v3663, %v3222
      %v3792 = vmax.f32 %v3664, %v3225
      %v3793 = vmax.f32 %v3665, %v3228
      %v3794 = vmax.f32 %v3666, %v3231
      %v3795 = vmax.f32 %v3667, %v3234
      %v3796 = vmax.f32 %v3668, %v3237
      %v3797 = vmax.f32 %v3669, %v3240
      %v3798 = vmax.f32 %v3670, %v3243
      %v3799 = vmax.f32 %v3671, %v3246
      %v3800 = vmax.f32 %v3672, %v3249
      %v3801 = vmax.f32 %v3673, %v3252
      %v3802 = vmax.f32 %v3674, %v3255
      %v3803 = vmax.f32 %v3675, %v3258
      %v3804 = vmax.f32 %v3676, %v3261
      %v3805 = vmax.f32 %v3677, %v3264
      %v3806 = vmax.f32 %v3678, %v3267
      %v3807 = vmax.f32 %v3679, %v3270
      %v3808 = vmax.f32 %v3680, %v3273
      %v3809 = vmax.f32 %v3681, %v3276
      %v3810 = vmax.f32 %v3682, %v3279
      %v3811 = vmax.f32 %v3683, %v3282
      %v3812 = vmax.f32 %v3684, %v3285
      %v3813 = vmax.f32 %v3685, %v3288
      %v3814 = vmax.f32 %v3686, %v3291
      %v3815 = vmax.f32 %v3687, %v3294
      %v3816 = vmax.f32 %v3688, %v3297
      %v3817 = vmax.f32 %v3689, %v3300
      %v3818 = vmax.f32 %v3690, %v3303
      %v3819 = vmax.f32 %v3691, %v3306
      %v3820 = vmax.f32 %v3692, %v3309
      %v3821 = vmax.f32 %v3693, %v3312
      %v3822 = vmax.f32 %v3694, %v3315
      %v3823 = vmax.f32 %v3695, %v3318
      %v3824 = vmax.f32 %v3696, %v3321
      %v3825 = vmax.f32 %v3697, %v3324
      %v3826 = vmax.f32 %v3698, %v3327
      %v3827 = vmax.f32 %v3699, %v3330
      %v3828 = vmax.f32 %v3700, %v3333
      %v3829 = vmax.f32 %v3701, %v3336
      %v3830 = vmax.f32 %v3702, %v3339
      %v3831 = vmax.f32 %v3703, %v3342
      %v3832 = vmax.f32 %v3704, %v3345
      %v3833 = vmax.f32 %v3705, %v3348
      %v3834 = vmax.f32 %v3706, %v3351
      %v3835 = vmax.f32 %v3707, %v3354
      %v3836 = vmax.f32 %v3708, %v3357
      %v3837 = vmax.f32 %v3709, %v3360
      %v3838 = vmax.f32 %v3710, %v3363
      %v3839 = vmax.f32 %v3711, %v3366
      %v3840 = vmax.f32 %v3712, %v3369
      %v3841 = vmax.f32 %v3713, %v3372
      %v3842 = vmax.f32 %v3714, %v3375
      %v3843 = vmax.f32 %v3715, %v3378
      %v3844 = vmax.f32 %v3716, %v3381
      %v3845 = vmax.f32 %v3717, %v3384
      %v3846 = vmax.f32 %v3718, %v3387
      %v3847 = vmax.f32 %v3719, %v3390
      %v3848 = vmax.f32 %v3720, %v3393
      %v3849 = vmax.f32 %v3721, %v3396
      %v3850 = vmax.f32 %v3722, %v3399
      %v3851 = vmax.f32 %v3723, %v3402
      %v3852 = vmax.f32 %v3724, %v3405
      %v3853 = vmax.f32 %v3725, %v3408
      %v3854 = vmax.f32 %v3726, %v3411
      %v3855 = vmax.f32 %v3727, %v3414
      %v3856 = vmax.f32 %v3728, %v3417
      %v3857 = vmax.f32 %v3729, %v3420
      %v3858 = vmax.f32 %v3730, %v3423
      %v3859 = vmax.f32 %v3731, %v3426
      %v3860 = vmax.f32 %v3732, %v3429
      %v3861 = vmax.f32 %v3733, %v3432
      %v3862 = vmax.f32 %v3734, %v3435
      %v3863 = vmax.f32 %v3735, %v3438
      %v3864 = vmax.f32 %v3736, %v3441
      %v3865 = vmax.f32 %v3737, %v3444
      %v3866 = vmax.f32 %v3738, %v3447
      %v3867 = vmax.f32 %v3739, %v3450
      %v3868 = vmax.f32 %v3740, %v3453
      %v3869 = vmax.f32 %v3741, %v3456
      %v3870 = vmax.f32 %v3742, %v3459
      %v3871 = vmax.f32 %v3743, %v3462
      %v3872 = vmax.f32 %v3744, %v3465
      %v3873 = vmax.f32 %v3745, %v3468
      %v3874 = vmax.f32 %v3746, %v3471
      %v3875 = vmax.f32 %v3747, %v3474
      %v3876 = vmax.f32 %v3748, %v3477
      %v3877 = vmax.f32 %v3749, %v3480
      %v3878 = vmax.f32 %v3750, %v3483
      %v3879 = vmax.f32 %v3751, %v3486
      %v3880 = vmax.f32 %v3752, %v3489
      %v3881 = vmax.f32 %v3753, %v3492
      %vm3882 = vcmask 7168
      %3883 = vst.msk [vmem:[%s306] sm:$0xff] %vm3882, %v3754
      %3884 = vst.msk [vmem:[%s306 + $0x8] sm:$0xff] %vm3882, %v3755
      %3885 = vst.msk [vmem:[%s306 + $0x10] sm:$0xff] %vm3882, %v3756
      %3886 = vst.msk [vmem:[%s306 + $0x18] sm:$0xff] %vm3882, %v3757
      %3887 = vst.msk [vmem:[%s306 + $0x20] sm:$0xff] %vm3882, %v3758
      %3888 = vst.msk [vmem:[%s306 + $0x28] sm:$0xff] %vm3882, %v3759
      %3889 = vst.msk [vmem:[%s306 + $0x30] sm:$0xff] %vm3882, %v3760
      %3890 = vst.msk [vmem:[%s306 + $0x38] sm:$0xff] %vm3882, %v3761
      %3891 = vst.msk [vmem:[%s306 + $0x40] sm:$0xff] %vm3882, %v3762
      %3892 = vst.msk [vmem:[%s306 + $0x48] sm:$0xff] %vm3882, %v3763
      %3893 = vst.msk [vmem:[%s306 + $0x50] sm:$0xff] %vm3882, %v3764
      %3894 = vst.msk [vmem:[%s306 + $0x58] sm:$0xff] %vm3882, %v3765
      %3895 = vst.msk [vmem:[%s306 + $0x60] sm:$0xff] %vm3882, %v3766
      %3896 = vst.msk [vmem:[%s306 + $0x68] sm:$0xff] %vm3882, %v3767
      %3897 = vst.msk [vmem:[%s306 + $0x70] sm:$0xff] %vm3882, %v3768
      %3898 = vst.msk [vmem:[%s306 + $0x78] sm:$0xff] %vm3882, %v3769
      %3899 = vst.msk [vmem:[%s306 + $0x80] sm:$0xff] %vm3882, %v3770
      %3900 = vst.msk [vmem:[%s306 + $0x88] sm:$0xff] %vm3882, %v3771
      %3901 = vst.msk [vmem:[%s306 + $0x90] sm:$0xff] %vm3882, %v3772
      %3902 = vst.msk [vmem:[%s306 + $0x98] sm:$0xff] %vm3882, %v3773
      %3903 = vst.msk [vmem:[%s306 + $0xa0] sm:$0xff] %vm3882, %v3774
      %3904 = vst.msk [vmem:[%s306 + $0xa8] sm:$0xff] %vm3882, %v3775
      %3905 = vst.msk [vmem:[%s306 + $0xb0] sm:$0xff] %vm3882, %v3776
      %3906 = vst.msk [vmem:[%s306 + $0xb8] sm:$0xff] %vm3882, %v3777
      %3907 = vst.msk [vmem:[%s306 + $0xc0] sm:$0xff] %vm3882, %v3778
      %3908 = vst.msk [vmem:[%s306 + $0xc8] sm:$0xff] %vm3882, %v3779
      %3909 = vst.msk [vmem:[%s306 + $0xd0] sm:$0xff] %vm3882, %v3780
      %3910 = vst.msk [vmem:[%s306 + $0xd8] sm:$0xff] %vm3882, %v3781
      %3911 = vst.msk [vmem:[%s306 + $0xe0] sm:$0xff] %vm3882, %v3782
      %3912 = vst.msk [vmem:[%s306 + $0xe8] sm:$0xff] %vm3882, %v3783
      %3913 = vst.msk [vmem:[%s306 + $0xf0] sm:$0xff] %vm3882, %v3784
      %3914 = vst.msk [vmem:[%s306 + $0xf8] sm:$0xff] %vm3882, %v3785
      %3915 = vst.msk [vmem:[%s306 + $0x100] sm:$0xff] %vm3882, %v3786
      %3916 = vst.msk [vmem:[%s306 + $0x108] sm:$0xff] %vm3882, %v3787
      %3917 = vst.msk [vmem:[%s306 + $0x110] sm:$0xff] %vm3882, %v3788
      %3918 = vst.msk [vmem:[%s306 + $0x118] sm:$0xff] %vm3882, %v3789
      %3919 = vst.msk [vmem:[%s306 + $0x120] sm:$0xff] %vm3882, %v3790
      %3920 = vst.msk [vmem:[%s306 + $0x128] sm:$0xff] %vm3882, %v3791
      %3921 = vst.msk [vmem:[%s306 + $0x130] sm:$0xff] %vm3882, %v3792
      %3922 = vst.msk [vmem:[%s306 + $0x138] sm:$0xff] %vm3882, %v3793
      %3923 = vst.msk [vmem:[%s306 + $0x140] sm:$0xff] %vm3882, %v3794
      %3924 = vst.msk [vmem:[%s306 + $0x148] sm:$0xff] %vm3882, %v3795
      %3925 = vst.msk [vmem:[%s306 + $0x150] sm:$0xff] %vm3882, %v3796
      %3926 = vst.msk [vmem:[%s306 + $0x158] sm:$0xff] %vm3882, %v3797
      %3927 = vst.msk [vmem:[%s306 + $0x160] sm:$0xff] %vm3882, %v3798
      %3928 = vst.msk [vmem:[%s306 + $0x168] sm:$0xff] %vm3882, %v3799
      %3929 = vst.msk [vmem:[%s306 + $0x170] sm:$0xff] %vm3882, %v3800
      %3930 = vst.msk [vmem:[%s306 + $0x178] sm:$0xff] %vm3882, %v3801
      %3931 = vst.msk [vmem:[%s306 + $0x180] sm:$0xff] %vm3882, %v3802
      %3932 = vst.msk [vmem:[%s306 + $0x188] sm:$0xff] %vm3882, %v3803
      %3933 = vst.msk [vmem:[%s306 + $0x190] sm:$0xff] %vm3882, %v3804
      %3934 = vst.msk [vmem:[%s306 + $0x198] sm:$0xff] %vm3882, %v3805
      %3935 = vst.msk [vmem:[%s306 + $0x1a0] sm:$0xff] %vm3882, %v3806
      %3936 = vst.msk [vmem:[%s306 + $0x1a8] sm:$0xff] %vm3882, %v3807
      %3937 = vst.msk [vmem:[%s306 + $0x1b0] sm:$0xff] %vm3882, %v3808
      %3938 = vst.msk [vmem:[%s306 + $0x1b8] sm:$0xff] %vm3882, %v3809
      %3939 = vst.msk [vmem:[%s306 + $0x1c0] sm:$0xff] %vm3882, %v3810
      %3940 = vst.msk [vmem:[%s306 + $0x1c8] sm:$0xff] %vm3882, %v3811
      %3941 = vst.msk [vmem:[%s306 + $0x1d0] sm:$0xff] %vm3882, %v3812
      %3942 = vst.msk [vmem:[%s306 + $0x1d8] sm:$0xff] %vm3882, %v3813
      %3943 = vst.msk [vmem:[%s306 + $0x1e0] sm:$0xff] %vm3882, %v3814
      %3944 = vst.msk [vmem:[%s306 + $0x1e8] sm:$0xff] %vm3882, %v3815
      %3945 = vst.msk [vmem:[%s306 + $0x1f0] sm:$0xff] %vm3882, %v3816
      %3946 = vst.msk [vmem:[%s306 + $0x1f8] sm:$0xff] %vm3882, %v3817
      %3947 = vst.msk [vmem:[%s306 + $0x200] sm:$0xff] %vm3882, %v3818
      %3948 = vst.msk [vmem:[%s306 + $0x208] sm:$0xff] %vm3882, %v3819
      %3949 = vst.msk [vmem:[%s306 + $0x210] sm:$0xff] %vm3882, %v3820
      %3950 = vst.msk [vmem:[%s306 + $0x218] sm:$0xff] %vm3882, %v3821
      %3951 = vst.msk [vmem:[%s306 + $0x220] sm:$0xff] %vm3882, %v3822
      %3952 = vst.msk [vmem:[%s306 + $0x228] sm:$0xff] %vm3882, %v3823
      %3953 = vst.msk [vmem:[%s306 + $0x230] sm:$0xff] %vm3882, %v3824
      %3954 = vst.msk [vmem:[%s306 + $0x238] sm:$0xff] %vm3882, %v3825
      %3955 = vst.msk [vmem:[%s306 + $0x240] sm:$0xff] %vm3882, %v3826
      %3956 = vst.msk [vmem:[%s306 + $0x248] sm:$0xff] %vm3882, %v3827
      %3957 = vst.msk [vmem:[%s306 + $0x250] sm:$0xff] %vm3882, %v3828
      %3958 = vst.msk [vmem:[%s306 + $0x258] sm:$0xff] %vm3882, %v3829
      %3959 = vst.msk [vmem:[%s306 + $0x260] sm:$0xff] %vm3882, %v3830
      %3960 = vst.msk [vmem:[%s306 + $0x268] sm:$0xff] %vm3882, %v3831
      %3961 = vst.msk [vmem:[%s306 + $0x270] sm:$0xff] %vm3882, %v3832
      %3962 = vst.msk [vmem:[%s306 + $0x278] sm:$0xff] %vm3882, %v3833
      %3963 = vst.msk [vmem:[%s306 + $0x280] sm:$0xff] %vm3882, %v3834
      %3964 = vst.msk [vmem:[%s306 + $0x288] sm:$0xff] %vm3882, %v3835
      %3965 = vst.msk [vmem:[%s306 + $0x290] sm:$0xff] %vm3882, %v3836
      %3966 = vst.msk [vmem:[%s306 + $0x298] sm:$0xff] %vm3882, %v3837
      %3967 = vst.msk [vmem:[%s306 + $0x2a0] sm:$0xff] %vm3882, %v3838
      %3968 = vst.msk [vmem:[%s306 + $0x2a8] sm:$0xff] %vm3882, %v3839
      %3969 = vst.msk [vmem:[%s306 + $0x2b0] sm:$0xff] %vm3882, %v3840
      %3970 = vst.msk [vmem:[%s306 + $0x2b8] sm:$0xff] %vm3882, %v3841
      %3971 = vst.msk [vmem:[%s306 + $0x2c0] sm:$0xff] %vm3882, %v3842
      %3972 = vst.msk [vmem:[%s306 + $0x2c8] sm:$0xff] %vm3882, %v3843
      %3973 = vst.msk [vmem:[%s306 + $0x2d0] sm:$0xff] %vm3882, %v3844
      %3974 = vst.msk [vmem:[%s306 + $0x2d8] sm:$0xff] %vm3882, %v3845
      %3975 = vst.msk [vmem:[%s306 + $0x2e0] sm:$0xff] %vm3882, %v3846
      %3976 = vst.msk [vmem:[%s306 + $0x2e8] sm:$0xff] %vm3882, %v3847
      %3977 = vst.msk [vmem:[%s306 + $0x2f0] sm:$0xff] %vm3882, %v3848
      %3978 = vst.msk [vmem:[%s306 + $0x2f8] sm:$0xff] %vm3882, %v3849
      %3979 = vst.msk [vmem:[%s306 + $0x300] sm:$0xff] %vm3882, %v3850
      %3980 = vst.msk [vmem:[%s306 + $0x308] sm:$0xff] %vm3882, %v3851
      %3981 = vst.msk [vmem:[%s306 + $0x310] sm:$0xff] %vm3882, %v3852
      %3982 = vst.msk [vmem:[%s306 + $0x318] sm:$0xff] %vm3882, %v3853
      %3983 = vst.msk [vmem:[%s306 + $0x320] sm:$0xff] %vm3882, %v3854
      %3984 = vst.msk [vmem:[%s306 + $0x328] sm:$0xff] %vm3882, %v3855
      %3985 = vst.msk [vmem:[%s306 + $0x330] sm:$0xff] %vm3882, %v3856
      %3986 = vst.msk [vmem:[%s306 + $0x338] sm:$0xff] %vm3882, %v3857
      %3987 = vst.msk [vmem:[%s306 + $0x340] sm:$0xff] %vm3882, %v3858
      %3988 = vst.msk [vmem:[%s306 + $0x348] sm:$0xff] %vm3882, %v3859
      %3989 = vst.msk [vmem:[%s306 + $0x350] sm:$0xff] %vm3882, %v3860
      %3990 = vst.msk [vmem:[%s306 + $0x358] sm:$0xff] %vm3882, %v3861
      %3991 = vst.msk [vmem:[%s306 + $0x360] sm:$0xff] %vm3882, %v3862
      %3992 = vst.msk [vmem:[%s306 + $0x368] sm:$0xff] %vm3882, %v3863
      %3993 = vst.msk [vmem:[%s306 + $0x370] sm:$0xff] %vm3882, %v3864
      %3994 = vst.msk [vmem:[%s306 + $0x378] sm:$0xff] %vm3882, %v3865
      %3995 = vst.msk [vmem:[%s306 + $0x380] sm:$0xff] %vm3882, %v3866
      %3996 = vst.msk [vmem:[%s306 + $0x388] sm:$0xff] %vm3882, %v3867
      %3997 = vst.msk [vmem:[%s306 + $0x390] sm:$0xff] %vm3882, %v3868
      %3998 = vst.msk [vmem:[%s306 + $0x398] sm:$0xff] %vm3882, %v3869
      %3999 = vst.msk [vmem:[%s306 + $0x3a0] sm:$0xff] %vm3882, %v3870
      %4000 = vst.msk [vmem:[%s306 + $0x3a8] sm:$0xff] %vm3882, %v3871
      %4001 = vst.msk [vmem:[%s306 + $0x3b0] sm:$0xff] %vm3882, %v3872
      %4002 = vst.msk [vmem:[%s306 + $0x3b8] sm:$0xff] %vm3882, %v3873
      %4003 = vst.msk [vmem:[%s306 + $0x3c0] sm:$0xff] %vm3882, %v3874
      %4004 = vst.msk [vmem:[%s306 + $0x3c8] sm:$0xff] %vm3882, %v3875
      %4005 = vst.msk [vmem:[%s306 + $0x3d0] sm:$0xff] %vm3882, %v3876
      %4006 = vst.msk [vmem:[%s306 + $0x3d8] sm:$0xff] %vm3882, %v3877
      %4007 = vst.msk [vmem:[%s306 + $0x3e0] sm:$0xff] %vm3882, %v3878
      %4008 = vst.msk [vmem:[%s306 + $0x3e8] sm:$0xff] %vm3882, %v3879
      %4009 = vst.msk [vmem:[%s306 + $0x3f0] sm:$0xff] %vm3882, %v3880
      %4010 = vst.msk [vmem:[%s306 + $0x3f8] sm:$0xff] %vm3882, %v3881
      %p4011 = scmp.lt.s32.totalorder %s22, 1
      %s4012 = scalar_select %p4011, %s22, 1
      %s4013 = smul.addr %s4012, 128
      %s4014 = smul.addr %s4013, 8
      %s4015 = scalar_lea.vmem %s7, %s4014
      // Predicated region
      $region53: #{tpu_custom_call.1} parent=47 // pred_check
        %p4016 = pneg %p202
      $region54: #{tpu_custom_call.1} parent=47 // pred_check_branch
        %4018 = sbr.rel (%p4016) target = $region56
      $region55: #{tpu_custom_call.1} parent=47 // pred_region
        _
      $region56: #{tpu_custom_call.1} parent=47 // pred_fallthru
        _
    $region48: #{tpu_custom_call.1} parent=5 // pred_fallthru
      _
    %p4019 = scmp.le.s32.totalorder 2, %s13
    // Predicated region
    $region57: #{tpu_custom_call.1} parent=5 // pred_check
      %p4020 = pneg %p4019
    $region58: #{tpu_custom_call.1} parent=5 // pred_check_branch
      %4022 = sbr.rel (%p4020) target = $region60
    $region59: #{tpu_custom_call.1} parent=5 // pred_region
      %s4023 = ssub.s32 %s13, 2
      // Predicated region
      $region61: #{tpu_custom_call.1} parent=59 // pred_check
        %p4024 = pneg %p208
      $region62: #{tpu_custom_call.1} parent=59 // pred_check_branch
        %4026 = sbr.rel (%p4024) target = $region64
      $region63: #{tpu_custom_call.1} parent=59 // pred_region
        %p4027 = scmp.lt.s32.totalorder %s24, 1
        %s4028 = scalar_select %p4027, %s24, 1
        %s4029 = smul.addr %s4028, 128
        %s4030 = smul.addr %s4029, 8
        %s4031 = scalar_lea.vmem %s7, %s4030
      $region64: #{tpu_custom_call.1} parent=59 // pred_fallthru
        _
    $region60: #{tpu_custom_call.1} parent=5 // pred_fallthru
      _
  $region6: #{tpu_custom_call.1} parent=0 // loop_footer
    %s17 = sadd.s32 1, %s13
  $region7: #{tpu_custom_call.1} parent=0 // loop_footer_branch
    %12 = sbr.rel target = $region3
  $region8: #{tpu_custom_call.1} parent=0 // loop_exit
    _

</llo_original>
